<compile_context>
chip_gen: v7x
topology: tpu7x:2x2x1
jax: 0.10.0
libtpu: 0.0.40
codegen_flags: <defaults>
</compile_context>

<pallas_src>
import jax
import jax.numpy as jnp
from jax.experimental import pallas as pl
from jax.experimental.pallas import tpu as pltpu

D_IN, D1, D2, D3, D_OUT = 600, 1024, 512, 256, 100
D_IN_PAD = 640     # 600 padded up to a multiple of 128
D_OUT_PAD = 128    # 100 padded up to a lane-dense 128


def _round_up(n, m):
    return ((n + m - 1) // m) * m


def _mlp_kernel(x_ref,
                w1_ref, b1_ref,
                w2_ref, b2_ref,
                w3_ref, b3_ref,
                w4_ref, b4_ref,
                out_ref, h_ref):
    bf16 = jnp.bfloat16

    x = x_ref[...]                                                  # (TB, 640) bf16

    h1 = jnp.tanh(
        jnp.dot(x, w1_ref[...], preferred_element_type=jnp.float32)
        + b1_ref[...])                                              # (TB, 1024) f32

    h2 = jnp.tanh(
        jnp.dot(h1.astype(bf16), w2_ref[...],
                preferred_element_type=jnp.float32)
        + b2_ref[...])                                              # (TB, 512) f32

    h3 = jnp.tanh(
        jnp.dot(h2.astype(bf16), w3_ref[...],
                preferred_element_type=jnp.float32)
        + b3_ref[...])                                              # (TB, 256) f32

    h_ref[...] = h3.astype(h_ref.dtype)                             # hidden out (f32)

    logits = (jnp.dot(h3.astype(bf16), w4_ref[...],
                      preferred_element_type=jnp.float32)
              + b4_ref[...])                                        # (TB, 128) f32
    out_ref[...] = logits.astype(out_ref.dtype)


def _prep_params(params):
    """Cast weights to bf16 and pad to lane/contraction-friendly shapes."""
    (w1, b1, w2, b2, w3, b3, w4, b4) = params
    bf16 = jnp.bfloat16
    w1p = jnp.pad(w1, ((0, D_IN_PAD - D_IN), (0, 0))).astype(bf16)   # (640, 1024)
    w2p = w2.astype(bf16)                                            # (1024, 512)
    w3p = w3.astype(bf16)                                            # (512, 256)
    w4p = jnp.pad(w4, ((0, 0), (0, D_OUT_PAD - D_OUT))).astype(bf16)  # (256, 128)
    b1p = b1.astype(jnp.float32)
    b2p = b2.astype(jnp.float32)
    b3p = b3.astype(jnp.float32)
    b4p = jnp.pad(b4, ((0, 0), (0, D_OUT_PAD - D_OUT))).astype(jnp.float32)
    return (w1p, b1p, w2p, b2p, w3p, b3p, w4p, b4p)


def net_purchase100_forward(x, params, *, batch_tile=None):
    """x: (B, 600) float32.  Returns (logits (B, 100), hidden (B, 256))."""
    B = x.shape[0]

    if batch_tile is None:
        batch_tile = min(256, _round_up(B, 8))
    assert batch_tile % 8 == 0, "batch_tile must be a multiple of 8 (sublane)"
    tb = batch_tile

    # Pad batch up to a tile multiple and features 600 -> 640; cast to bf16
    # outside the kernel so the input DMA is half-width.
    B_pad = _round_up(B, tb)
    x_p = jnp.pad(x, ((0, B_pad - B), (0, D_IN_PAD - D_IN))).astype(jnp.bfloat16)

    w1p, b1p, w2p, b2p, w3p, b3p, w4p, b4p = _prep_params(params)

    # Weights/biases: full-array blocks, resident across all grid steps.
    full = lambda shape: pl.BlockSpec(shape, lambda i: (0, 0))

    grid_spec = pltpu.PrefetchScalarGridSpec(
        num_scalar_prefetch=0,
        grid=(B_pad // tb,),
        in_specs=[
            pl.BlockSpec((tb, D_IN_PAD), lambda i: (i, 0)),   # x batch tile
            full((D_IN_PAD, D1)), full((1, D1)),
            full((D1, D2)),       full((1, D2)),
            full((D2, D3)),       full((1, D3)),
            full((D3, D_OUT_PAD)), full((1, D_OUT_PAD)),
        ],
        out_specs=[
            pl.BlockSpec((tb, D_OUT_PAD), lambda i: (i, 0)),  # padded logits
            pl.BlockSpec((tb, D3),        lambda i: (i, 0)),  # hidden h
        ],
    )

    logits_pad, hidden_pad = pl.pallas_call(
        _mlp_kernel,
        out_shape=(
            jax.ShapeDtypeStruct((B_pad, D_OUT_PAD), jnp.float32),
            jax.ShapeDtypeStruct((B_pad, D3), jnp.float32),
        ),
        grid_spec=grid_spec,
        compiler_params=pltpu.CompilerParams(
            dimension_semantics=("parallel",),
            vmem_limit_bytes=32 * 1024 * 1024),
    )(x_p, w1p, b1p, w2p, b2p, w3p, b3p, w4p, b4p)

    return logits_pad[:B, :D_OUT], hidden_pad[:B, :]


def init_params(key):
    """Deterministic synthetic parameters (shapes match the nn.Linear layers)."""
    ks = jax.random.split(key, 8)

    def lin(kw, kb, d_in, d_out):
        scale = 1.0 / jnp.sqrt(jnp.float32(d_in))
        w = jax.random.uniform(kw, (d_in, d_out), jnp.float32, -scale, scale)
        b = jax.random.uniform(kb, (1, d_out), jnp.float32, -scale, scale)
        return w, b

    w1, b1 = lin(ks[0], ks[1], D_IN, D1)
    w2, b2 = lin(ks[2], ks[3], D1, D2)
    w3, b3 = lin(ks[4], ks[5], D2, D3)
    w4, b4 = lin(ks[6], ks[7], D3, D_OUT)
    return (w1, b1, w2, b2, w3, b3, w4, b4)


def _reference_f32(x, params):
    (w1, b1, w2, b2, w3, b3, w4, b4) = params
    h = jnp.tanh(x @ w1 + b1)
    h = jnp.tanh(h @ w2 + b2)
    h = jnp.tanh(h @ w3 + b3)
    return h @ w4 + b4, h


def _reference_bf16(x, params):
    """Matches the kernel's numerics: bf16 matmul inputs, f32 accumulation."""
    (w1, b1, w2, b2, w3, b3, w4, b4) = params
    bf16 = jnp.bfloat16

    def lin(h, w, b):
        return jnp.dot(h.astype(bf16), w.astype(bf16),
                       preferred_element_type=jnp.float32) + b

    h = jnp.tanh(lin(x, w1, b1))
    h = jnp.tanh(lin(h, w2, b2))
    h = jnp.tanh(lin(h, w3, b3))
    return lin(h, w4, b4), h


if __name__ == "__main__":
    key = jax.random.PRNGKey(0)
    k_x, k_p = jax.random.split(key)

    B = 8
    x = jax.random.normal(k_x, (B, D_IN), jnp.float32)
    params = init_params(k_p)

    logits, hidden = jax.block_until_ready(net_purchase100_forward(x, params))

    assert logits.shape == (B, D_OUT) and hidden.shape == (B, D3)

    # Exact-semantics reference (bf16 MXU inputs, f32 accumulation).
    ref_logits_bf16, ref_hidden_bf16 = _reference_bf16(x, params)
    assert jnp.allclose(logits, ref_logits_bf16, atol=2e-3, rtol=2e-3)
    assert jnp.allclose(hidden, ref_hidden_bf16, atol=2e-3, rtol=2e-3)

    # Sanity check against the full-f32 reference (looser tolerance for bf16).
    ref_logits_f32, ref_hidden_f32 = _reference_f32(x, params)
    assert jnp.allclose(logits, ref_logits_f32, atol=5e-2, rtol=5e-2)
    assert jnp.allclose(hidden, ref_hidden_f32, atol=5e-2, rtol=5e-2)

    print("KERNEL_OK")
</pallas_src>

<mosaic_0001>
module attributes {stable_mosaic.version = 11 : i64} {
  func.func @_mlp_kernel(%arg0: i32, %arg1: memref<8x640xbf16, #tpu.memory_space<vmem>>, %arg2: memref<640x1024xbf16, #tpu.memory_space<vmem>>, %arg3: memref<1x1024xf32, #tpu.memory_space<vmem>>, %arg4: memref<1024x512xbf16, #tpu.memory_space<vmem>>, %arg5: memref<1x512xf32, #tpu.memory_space<vmem>>, %arg6: memref<512x256xbf16, #tpu.memory_space<vmem>>, %arg7: memref<1x256xf32, #tpu.memory_space<vmem>>, %arg8: memref<256x128xbf16, #tpu.memory_space<vmem>>, %arg9: memref<1x128xf32, #tpu.memory_space<vmem>>, %arg10: memref<8x128xf32, #tpu.memory_space<vmem>>, %arg11: memref<8x256xf32, #tpu.memory_space<vmem>>) attributes {dimension_semantics = [#tpu.dimension_semantics<parallel>], iteration_bounds = array<i64: 1>, scalar_prefetch = 0 : i64, scratch_operands = 0 : i64, tpu.core_type = #tpu.core_type<tc>, window_params = [{transform_indices = @transform_0, window_bounds = array<i64: 8, 640>}, {pipeline_mode = #tpu.pipeline_mode<synchronous>, transform_indices = @transform_1, window_bounds = array<i64: 640, 1024>}, {pipeline_mode = #tpu.pipeline_mode<synchronous>, transform_indices = @transform_2, window_bounds = array<i64: 1, 1024>}, {pipeline_mode = #tpu.pipeline_mode<synchronous>, transform_indices = @transform_3, window_bounds = array<i64: 1024, 512>}, {pipeline_mode = #tpu.pipeline_mode<synchronous>, transform_indices = @transform_4, window_bounds = array<i64: 1, 512>}, {pipeline_mode = #tpu.pipeline_mode<synchronous>, transform_indices = @transform_5, window_bounds = array<i64: 512, 256>}, {pipeline_mode = #tpu.pipeline_mode<synchronous>, transform_indices = @transform_6, window_bounds = array<i64: 1, 256>}, {pipeline_mode = #tpu.pipeline_mode<synchronous>, transform_indices = @transform_7, window_bounds = array<i64: 256, 128>}, {pipeline_mode = #tpu.pipeline_mode<synchronous>, transform_indices = @transform_8, window_bounds = array<i64: 1, 128>}, {transform_indices = @transform_9, window_bounds = array<i64: 8, 128>}, {transform_indices = @transform_10, window_bounds = array<i64: 8, 256>}]} {
    %c0 = arith.constant 0 : index
    %c0_0 = arith.constant 0 : index
    %0 = vector.load %arg1[%c0, %c0_0] : memref<8x640xbf16, #tpu.memory_space<vmem>>, vector<8x640xbf16>
    %c0_1 = arith.constant 0 : index
    %c0_2 = arith.constant 0 : index
    %1 = vector.load %arg2[%c0_1, %c0_2] : memref<640x1024xbf16, #tpu.memory_space<vmem>>, vector<640x1024xbf16>
    %cst = arith.constant dense<0.000000e+00> : vector<8x1024xf32>
    %2 = tpu.matmul %0, %1, %cst {dimension_numbers = #tpu.dot_dimension_numbers<[1], [0], [0], [1], [0, 0, 1, 1], [], []>} : vector<8x640xbf16>, vector<640x1024xbf16>, vector<8x1024xf32> -> vector<8x1024xf32>
    %c0_3 = arith.constant 0 : index
    %c0_4 = arith.constant 0 : index
    %3 = vector.load %arg3[%c0_3, %c0_4] : memref<1x1024xf32, #tpu.memory_space<vmem>>, vector<1x1024xf32>
    %4 = vector.broadcast %3 : vector<1x1024xf32> to vector<8x1024xf32>
    %5 = arith.addf %2, %4 : vector<8x1024xf32>
    %6 = math.tanh %5 : vector<8x1024xf32>
    %7 = arith.truncf %6 : vector<8x1024xf32> to vector<8x1024xbf16>
    %c0_5 = arith.constant 0 : index
    %c0_6 = arith.constant 0 : index
    %8 = vector.load %arg4[%c0_5, %c0_6] : memref<1024x512xbf16, #tpu.memory_space<vmem>>, vector<1024x512xbf16>
    %cst_7 = arith.constant dense<0.000000e+00> : vector<8x512xf32>
    %9 = tpu.matmul %7, %8, %cst_7 {dimension_numbers = #tpu.dot_dimension_numbers<[1], [0], [0], [1], [0, 0, 1, 1], [], []>} : vector<8x1024xbf16>, vector<1024x512xbf16>, vector<8x512xf32> -> vector<8x512xf32>
    %c0_8 = arith.constant 0 : index
    %c0_9 = arith.constant 0 : index
    %10 = vector.load %arg5[%c0_8, %c0_9] : memref<1x512xf32, #tpu.memory_space<vmem>>, vector<1x512xf32>
    %11 = vector.broadcast %10 : vector<1x512xf32> to vector<8x512xf32>
    %12 = arith.addf %9, %11 : vector<8x512xf32>
    %13 = math.tanh %12 : vector<8x512xf32>
    %14 = arith.truncf %13 : vector<8x512xf32> to vector<8x512xbf16>
    %c0_10 = arith.constant 0 : index
    %c0_11 = arith.constant 0 : index
    %15 = vector.load %arg6[%c0_10, %c0_11] : memref<512x256xbf16, #tpu.memory_space<vmem>>, vector<512x256xbf16>
    %cst_12 = arith.constant dense<0.000000e+00> : vector<8x256xf32>
    %16 = tpu.matmul %14, %15, %cst_12 {dimension_numbers = #tpu.dot_dimension_numbers<[1], [0], [0], [1], [0, 0, 1, 1], [], []>} : vector<8x512xbf16>, vector<512x256xbf16>, vector<8x256xf32> -> vector<8x256xf32>
    %c0_13 = arith.constant 0 : index
    %c0_14 = arith.constant 0 : index
    %17 = vector.load %arg7[%c0_13, %c0_14] : memref<1x256xf32, #tpu.memory_space<vmem>>, vector<1x256xf32>
    %18 = vector.broadcast %17 : vector<1x256xf32> to vector<8x256xf32>
    %19 = arith.addf %16, %18 : vector<8x256xf32>
    %20 = math.tanh %19 : vector<8x256xf32>
    %c0_15 = arith.constant 0 : index
    %c0_16 = arith.constant 0 : index
    %21 = vector.load %arg11[%c0_15, %c0_16] : memref<8x256xf32, #tpu.memory_space<vmem>>, vector<8x256xf32>
    tpu.vector_store %arg11[%c0_15, %c0_16], %20 {strides = array<i32>} : memref<8x256xf32, #tpu.memory_space<vmem>>, vector<8x256xf32>,
    %22 = arith.truncf %20 : vector<8x256xf32> to vector<8x256xbf16>
    %c0_17 = arith.constant 0 : index
    %c0_18 = arith.constant 0 : index
    %23 = vector.load %arg8[%c0_17, %c0_18] : memref<256x128xbf16, #tpu.memory_space<vmem>>, vector<256x128xbf16>
    %cst_19 = arith.constant dense<0.000000e+00> : vector<8x128xf32>
    %24 = tpu.matmul %22, %23, %cst_19 {dimension_numbers = #tpu.dot_dimension_numbers<[1], [0], [0], [1], [0, 0, 1, 1], [], []>} : vector<8x256xbf16>, vector<256x128xbf16>, vector<8x128xf32> -> vector<8x128xf32>
    %c0_20 = arith.constant 0 : index
    %c0_21 = arith.constant 0 : index
    %25 = vector.load %arg9[%c0_20, %c0_21] : memref<1x128xf32, #tpu.memory_space<vmem>>, vector<1x128xf32>
    %26 = vector.broadcast %25 : vector<1x128xf32> to vector<8x128xf32>
    %27 = arith.addf %24, %26 : vector<8x128xf32>
    %c0_22 = arith.constant 0 : index
    %c0_23 = arith.constant 0 : index
    %28 = vector.load %arg10[%c0_22, %c0_23] : memref<8x128xf32, #tpu.memory_space<vmem>>, vector<8x128xf32>
    tpu.vector_store %arg10[%c0_22, %c0_23], %27 {strides = array<i32>} : memref<8x128xf32, #tpu.memory_space<vmem>>, vector<8x128xf32>,
    return
  }
  func.func @transform_0(%arg0: i32) -> (i32, i32) {
    %c0_i32 = arith.constant 0 : i32
    %c0_i32_0 = arith.constant 0 : i32
    return %arg0, %c0_i32 : i32, i32
  }
  func.func @transform_1(%arg0: i32) -> (i32, i32) {
    %c0_i32 = arith.constant 0 : i32
    %c0_i32_0 = arith.constant 0 : i32
    %c0_i32_1 = arith.constant 0 : i32
    return %c0_i32, %c0_i32_0 : i32, i32
  }
  func.func @transform_2(%arg0: i32) -> (i32, i32) {
    %c0_i32 = arith.constant 0 : i32
    %c0_i32_0 = arith.constant 0 : i32
    %c0_i32_1 = arith.constant 0 : i32
    return %c0_i32, %c0_i32_0 : i32, i32
  }
  func.func @transform_3(%arg0: i32) -> (i32, i32) {
    %c0_i32 = arith.constant 0 : i32
    %c0_i32_0 = arith.constant 0 : i32
    %c0_i32_1 = arith.constant 0 : i32
    return %c0_i32, %c0_i32_0 : i32, i32
  }
  func.func @transform_4(%arg0: i32) -> (i32, i32) {
    %c0_i32 = arith.constant 0 : i32
    %c0_i32_0 = arith.constant 0 : i32
    %c0_i32_1 = arith.constant 0 : i32
    return %c0_i32, %c0_i32_0 : i32, i32
  }
  func.func @transform_5(%arg0: i32) -> (i32, i32) {
    %c0_i32 = arith.constant 0 : i32
    %c0_i32_0 = arith.constant 0 : i32
    %c0_i32_1 = arith.constant 0 : i32
    return %c0_i32, %c0_i32_0 : i32, i32
  }
  func.func @transform_6(%arg0: i32) -> (i32, i32) {
    %c0_i32 = arith.constant 0 : i32
    %c0_i32_0 = arith.constant 0 : i32
    %c0_i32_1 = arith.constant 0 : i32
    return %c0_i32, %c0_i32_0 : i32, i32
  }
  func.func @transform_7(%arg0: i32) -> (i32, i32) {
    %c0_i32 = arith.constant 0 : i32
    %c0_i32_0 = arith.constant 0 : i32
    %c0_i32_1 = arith.constant 0 : i32
    return %c0_i32, %c0_i32_0 : i32, i32
  }
  func.func @transform_8(%arg0: i32) -> (i32, i32) {
    %c0_i32 = arith.constant 0 : i32
    %c0_i32_0 = arith.constant 0 : i32
    %c0_i32_1 = arith.constant 0 : i32
    return %c0_i32, %c0_i32_0 : i32, i32
  }
  func.func @transform_9(%arg0: i32) -> (i32, i32) {
    %c0_i32 = arith.constant 0 : i32
    %c0_i32_0 = arith.constant 0 : i32
    return %arg0, %c0_i32 : i32, i32
  }
  func.func @transform_10(%arg0: i32) -> (i32, i32) {
    %c0_i32 = arith.constant 0 : i32
    %c0_i32_0 = arith.constant 0 : i32
    return %arg0, %c0_i32 : i32, i32
  }
}

</mosaic_0001>

<llo_original>
// kernel: tpu_custom_call.1
$region0: #{tpu_custom_call.1}
  #allocation0 [shape = 'u32[]', space=smem, size = 0x4, offset = 0x4, fixed_abs, tag = 'smem constant byte address 0x4 - core index']
  #allocation1 [shape = 'u32[144,128]{1,0:T(1,128)}', space=vmem, size = 0x12000, scoped, tag = 'internal scratch']
  %s0 = inlined_call_operand.hbm [shape: bf16[8,640], index: 0, kind: input, shape index: {}]
  %s1 = inlined_call_operand.hbm [shape: bf16[640,1024], index: 1, kind: input, shape index: {}]
  %s2 = inlined_call_operand.hbm [shape: f32[1,1024], index: 2, kind: input, shape index: {}]
  %s3 = inlined_call_operand.hbm [shape: bf16[1024,512], index: 3, kind: input, shape index: {}]
  %s4 = inlined_call_operand.hbm [shape: f32[1,512], index: 4, kind: input, shape index: {}]
  %s5 = inlined_call_operand.hbm [shape: bf16[512,256], index: 5, kind: input, shape index: {}]
  %s6 = inlined_call_operand.hbm [shape: f32[1,256], index: 6, kind: input, shape index: {}]
  %s7 = inlined_call_operand.hbm [shape: bf16[256,128], index: 7, kind: input, shape index: {}]
  %s8 = inlined_call_operand.hbm [shape: f32[1,128], index: 8, kind: input, shape index: {}]
  %s9 = inlined_call_operand.hbm [shape: f32[8,128], index: 9, kind: output, shape index: {0}]
  %s10 = inlined_call_operand.hbm [shape: f32[8,256], index: 10, kind: output, shape index: {1}]
  %11 = xla_tuple %s9, %s10
  %s12 = sld [smem:[#allocation0]]
  $region90: #{tpu_custom_call.1} parent=0
    _
  %s14 = ssub.s32 1, %s12
  %s15 = scalar_select 0, %s14, %s12
  $region1: #{tpu_custom_call.1} parent=0
    #allocation2 [shape = 'u8[10240]{0}', space=vmem, size = 0x2800, scoped, tag = 'input window, operand 0, single buffered']
    #allocation3 [shape = 's32[1]{0}', space=sflag, size = 0x4, scoped, tag = 'scoped memory for tpu_custom_call.1']
    #allocation4 [shape = 's32[1]{0}', space=sflag, size = 0x4, scoped, tag = 'scoped memory for tpu_custom_call.1']
    #allocation5 [shape = 'u8[1310720]{0}', space=vmem, size = 0x140000, scoped, tag = 'input window, operand 1, single buffered']
    #allocation6 [shape = 's32[1]{0}', space=sflag, size = 0x4, scoped, tag = 'scoped memory for tpu_custom_call.1']
    #allocation7 [shape = 'u8[4096]{0}', space=vmem, size = 0x1000, scoped, tag = 'input window, operand 2, single buffered']
    #allocation8 [shape = 'u8[1048576]{0}', space=vmem, size = 0x100000, scoped, tag = 'input window, operand 3, single buffered']
    #allocation9 [shape = 's32[1]{0}', space=sflag, size = 0x4, scoped, tag = 'scoped memory for tpu_custom_call.1']
    #allocation10 [shape = 'u8[2048]{0}', space=vmem, size = 0x800, scoped, tag = 'input window, operand 4, single buffered']
    #allocation11 [shape = 'u8[262144]{0}', space=vmem, size = 0x40000, scoped, tag = 'input window, operand 5, single buffered']
    #allocation12 [shape = 's32[1]{0}', space=sflag, size = 0x4, scoped, tag = 'scoped memory for tpu_custom_call.1']
    #allocation13 [shape = 'u8[1024]{0}', space=vmem, size = 0x400, scoped, tag = 'input window, operand 6, single buffered']
    #allocation14 [shape = 'u8[65536]{0}', space=vmem, size = 0x10000, scoped, tag = 'input window, operand 7, single buffered']
    #allocation15 [shape = 's32[1]{0}', space=sflag, size = 0x4, scoped, tag = 'scoped memory for tpu_custom_call.1']
    #allocation16 [shape = 'u8[512]{0}', space=vmem, size = 0x400, scoped, tag = 'input window, operand 8, single buffered']
    #allocation17 [shape = 'u8[4096]{0}', space=vmem, size = 0x1000, scoped, tag = 'output window, operand 0, single buffered']
    #allocation18 [shape = 'u8[8192]{0}', space=vmem, size = 0x2000, scoped, tag = 'output window, operand 1, single buffered']
    #allocation19 [shape = 's32[1]{0}', space=sflag, size = 0x4, scoped, tag = 'scoped memory for tpu_custom_call.1']
    %16 = vsyncpa [#allocation3], 0
    %17 = vsyncpa [#allocation6], 0
    %18 = vsyncpa [#allocation9], 0
    %19 = vsyncpa [#allocation12], 0
    %20 = vsyncpa [#allocation15], 0
    %21 = vsyncpa [#allocation4], 0
    %22 = vsyncpa [#allocation19], 0
    // Predicated region
    $region2: #{tpu_custom_call.1} parent=1 // pred_check
      _
    $region3: #{tpu_custom_call.1} parent=1 // pred_check_branch
      %24 = sbr.rel (0) target = $region5
    $region4: #{tpu_custom_call.1} parent=1 // pred_region
      %s26 = ssub.s32 320, 320
      %27 = vsyncadd [#allocation3], %s26
      %s29 = sshll.u32 [#allocation2], 4
      %s30 = int_to_ptr.vmem [resolvable:$true] %s29
      %32 = dma.hbm_to_vmem [thread:$0]  %s0, 320, %s30, [#allocation3]
    $region5: #{tpu_custom_call.1} parent=1 // pred_fallthru
      _
    // Predicated region
    $region6: #{tpu_custom_call.1} parent=1 // pred_check
      _
    $region7: #{tpu_custom_call.1} parent=1 // pred_check_branch
      %34 = sbr.rel (0) target = $region9
    $region8: #{tpu_custom_call.1} parent=1 // pred_region
      %s36 = ssub.s32 40960, 40960
      %37 = vsyncadd [#allocation6], %s36
      %s38 = sshll.u32 [#allocation5], 4
      %s39 = int_to_ptr.vmem [resolvable:$true] %s38
      %44 = dma.hbm_to_vmem [thread:$0]  %s1, 40960, %s39, [#allocation6], 512, 512, 32
    $region9: #{tpu_custom_call.1} parent=1 // pred_fallthru
      _
    // Predicated region
    $region10: #{tpu_custom_call.1} parent=1 // pred_check
      _
    $region11: #{tpu_custom_call.1} parent=1 // pred_check_branch
      %46 = sbr.rel (0) target = $region13
    $region12: #{tpu_custom_call.1} parent=1 // pred_region
      %s48 = ssub.s32 128, 128
      %49 = vsyncadd [#allocation6], %s48
      %s51 = sshll.u32 [#allocation7], 4
      %s52 = int_to_ptr.vmem [resolvable:$true] %s51
      %54 = dma.hbm_to_vmem [thread:$0]  %s2, 128, %s52, [#allocation6]
    $region13: #{tpu_custom_call.1} parent=1 // pred_fallthru
      _
    // Predicated region
    $region14: #{tpu_custom_call.1} parent=1 // pred_check
      _
    $region15: #{tpu_custom_call.1} parent=1 // pred_check_branch
      %56 = sbr.rel (0) target = $region17
    $region16: #{tpu_custom_call.1} parent=1 // pred_region
      %s58 = ssub.s32 32768, 32768
      %59 = vsyncadd [#allocation9], %s58
      %s60 = sshll.u32 [#allocation8], 4
      %s61 = int_to_ptr.vmem [resolvable:$true] %s60
      %66 = dma.hbm_to_vmem [thread:$0]  %s3, 32768, %s61, [#allocation9], 256, 256, 16
    $region17: #{tpu_custom_call.1} parent=1 // pred_fallthru
      _
    // Predicated region
    $region18: #{tpu_custom_call.1} parent=1 // pred_check
      _
    $region19: #{tpu_custom_call.1} parent=1 // pred_check_branch
      %68 = sbr.rel (0) target = $region21
    $region20: #{tpu_custom_call.1} parent=1 // pred_region
      %s70 = ssub.s32 64, 64
      %71 = vsyncadd [#allocation9], %s70
      %s73 = sshll.u32 [#allocation10], 4
      %s74 = int_to_ptr.vmem [resolvable:$true] %s73
      %76 = dma.hbm_to_vmem [thread:$0]  %s4, 64, %s74, [#allocation9]
    $region21: #{tpu_custom_call.1} parent=1 // pred_fallthru
      _
    // Predicated region
    $region22: #{tpu_custom_call.1} parent=1 // pred_check
      _
    $region23: #{tpu_custom_call.1} parent=1 // pred_check_branch
      %78 = sbr.rel (0) target = $region25
    $region24: #{tpu_custom_call.1} parent=1 // pred_region
      %s80 = ssub.s32 8192, 8192
      %81 = vsyncadd [#allocation12], %s80
      %s82 = sshll.u32 [#allocation11], 4
      %s83 = int_to_ptr.vmem [resolvable:$true] %s82
      %88 = dma.hbm_to_vmem [thread:$0]  %s5, 8192, %s83, [#allocation12], 128, 128, 8
    $region25: #{tpu_custom_call.1} parent=1 // pred_fallthru
      _
    // Predicated region
    $region26: #{tpu_custom_call.1} parent=1 // pred_check
      _
    $region27: #{tpu_custom_call.1} parent=1 // pred_check_branch
      %90 = sbr.rel (0) target = $region29
    $region28: #{tpu_custom_call.1} parent=1 // pred_region
      %s92 = ssub.s32 32, 32
      %93 = vsyncadd [#allocation12], %s92
      %s95 = sshll.u32 [#allocation13], 4
      %s96 = int_to_ptr.vmem [resolvable:$true] %s95
      %98 = dma.hbm_to_vmem [thread:$0]  %s6, 32, %s96, [#allocation12]
    $region29: #{tpu_custom_call.1} parent=1 // pred_fallthru
      _
    // Predicated region
    $region30: #{tpu_custom_call.1} parent=1 // pred_check
      _
    $region31: #{tpu_custom_call.1} parent=1 // pred_check_branch
      %100 = sbr.rel (0) target = $region33
    $region32: #{tpu_custom_call.1} parent=1 // pred_region
      %s102 = ssub.s32 2048, 2048
      %103 = vsyncadd [#allocation15], %s102
      %s104 = sshll.u32 [#allocation14], 4
      %s105 = int_to_ptr.vmem [resolvable:$true] %s104
      %110 = dma.hbm_to_vmem [thread:$0]  %s7, 2048, %s105, [#allocation15], 64, 64, 4
    $region33: #{tpu_custom_call.1} parent=1 // pred_fallthru
      _
    // Predicated region
    $region34: #{tpu_custom_call.1} parent=1 // pred_check
      _
    $region35: #{tpu_custom_call.1} parent=1 // pred_check_branch
      %112 = sbr.rel (0) target = $region37
    $region36: #{tpu_custom_call.1} parent=1 // pred_region
      %s114 = ssub.s32 16, 16
      %115 = vsyncadd [#allocation15], %s114
      %s117 = sshll.u32 [#allocation16], 4
      %s118 = int_to_ptr.vmem [resolvable:$true] %s117
      %120 = dma.hbm_to_vmem [thread:$0]  %s8, 16, %s118, [#allocation15]
    $region37: #{tpu_custom_call.1} parent=1 // pred_fallthru
      _
    // Predicated region
    $region38: #{tpu_custom_call.1} parent=1 // pred_check
      _
    $region39: #{tpu_custom_call.1} parent=1 // pred_check_branch
      %122 = sbr.rel (0) target = $region41
    $region40: #{tpu_custom_call.1} parent=1 // pred_region
      %123 = dma.done [#allocation3], 320
    $region41: #{tpu_custom_call.1} parent=1 // pred_fallthru
      _
    // Predicated region
    $region42: #{tpu_custom_call.1} parent=1 // pred_check
      _
    $region43: #{tpu_custom_call.1} parent=1 // pred_check_branch
      %125 = sbr.rel (0) target = $region45
    $region44: #{tpu_custom_call.1} parent=1 // pred_region
      %126 = dma.done [#allocation6], 40960
    $region45: #{tpu_custom_call.1} parent=1 // pred_fallthru
      _
    // Predicated region
    $region46: #{tpu_custom_call.1} parent=1 // pred_check
      _
    $region47: #{tpu_custom_call.1} parent=1 // pred_check_branch
      %128 = sbr.rel (0) target = $region49
    $region48: #{tpu_custom_call.1} parent=1 // pred_region
      %129 = dma.done [#allocation6], 128
    $region49: #{tpu_custom_call.1} parent=1 // pred_fallthru
      _
    // Predicated region
    $region50: #{tpu_custom_call.1} parent=1 // pred_check
      _
    $region51: #{tpu_custom_call.1} parent=1 // pred_check_branch
      %131 = sbr.rel (0) target = $region53
    $region52: #{tpu_custom_call.1} parent=1 // pred_region
      %132 = dma.done [#allocation9], 32768
    $region53: #{tpu_custom_call.1} parent=1 // pred_fallthru
      _
    // Predicated region
    $region54: #{tpu_custom_call.1} parent=1 // pred_check
      _
    $region55: #{tpu_custom_call.1} parent=1 // pred_check_branch
      %134 = sbr.rel (0) target = $region57
    $region56: #{tpu_custom_call.1} parent=1 // pred_region
      %135 = dma.done [#allocation9], 64
    $region57: #{tpu_custom_call.1} parent=1 // pred_fallthru
      _
    // Predicated region
    $region58: #{tpu_custom_call.1} parent=1 // pred_check
      _
    $region59: #{tpu_custom_call.1} parent=1 // pred_check_branch
      %137 = sbr.rel (0) target = $region61
    $region60: #{tpu_custom_call.1} parent=1 // pred_region
      %138 = dma.done [#allocation12], 8192
    $region61: #{tpu_custom_call.1} parent=1 // pred_fallthru
      _
    // Predicated region
    $region62: #{tpu_custom_call.1} parent=1 // pred_check
      _
    $region63: #{tpu_custom_call.1} parent=1 // pred_check_branch
      %140 = sbr.rel (0) target = $region65
    $region64: #{tpu_custom_call.1} parent=1 // pred_region
      %141 = dma.done [#allocation12], 32
    $region65: #{tpu_custom_call.1} parent=1 // pred_fallthru
      _
    // Predicated region
    $region66: #{tpu_custom_call.1} parent=1 // pred_check
      _
    $region67: #{tpu_custom_call.1} parent=1 // pred_check_branch
      %143 = sbr.rel (0) target = $region69
    $region68: #{tpu_custom_call.1} parent=1 // pred_region
      %144 = dma.done [#allocation15], 2048
    $region69: #{tpu_custom_call.1} parent=1 // pred_fallthru
      _
    // Predicated region
    $region70: #{tpu_custom_call.1} parent=1 // pred_check
      _
    $region71: #{tpu_custom_call.1} parent=1 // pred_check_branch
      %146 = sbr.rel (0) target = $region73
    $region72: #{tpu_custom_call.1} parent=1 // pred_region
      %147 = dma.done [#allocation15], 16
    $region73: #{tpu_custom_call.1} parent=1 // pred_fallthru
      _
    %v149 = vld [vmem:[#allocation2] sm:$0xff]
    %v150 = vld [vmem:[#allocation2 + $0x8] sm:$0xff]
    %v151 = vld [vmem:[#allocation2 + $0x10] sm:$0xf]
    %v152 = vld [vmem:[#allocation5] sm:$0xff]
    %v153 = vld [vmem:[#allocation5 + $0x8] sm:$0xff]
    %v154 = vld [vmem:[#allocation5 + $0x10] sm:$0xff]
    %v155 = vld [vmem:[#allocation5 + $0x18] sm:$0xff]
    %v156 = vld [vmem:[#allocation5 + $0x20] sm:$0xff]
    %v157 = vld [vmem:[#allocation5 + $0x28] sm:$0xff]
    %v158 = vld [vmem:[#allocation5 + $0x30] sm:$0xff]
    %v159 = vld [vmem:[#allocation5 + $0x38] sm:$0xff]
    %v160 = vld [vmem:[#allocation5 + $0x40] sm:$0xff]
    %v161 = vld [vmem:[#allocation5 + $0x48] sm:$0xff]
    %v162 = vld [vmem:[#allocation5 + $0x50] sm:$0xff]
    %v163 = vld [vmem:[#allocation5 + $0x58] sm:$0xff]
    %v164 = vld [vmem:[#allocation5 + $0x60] sm:$0xff]
    %v165 = vld [vmem:[#allocation5 + $0x68] sm:$0xff]
    %v166 = vld [vmem:[#allocation5 + $0x70] sm:$0xff]
    %v167 = vld [vmem:[#allocation5 + $0x78] sm:$0xff]
    %v168 = vld [vmem:[#allocation5 + $0x80] sm:$0xff]
    %v169 = vld [vmem:[#allocation5 + $0x88] sm:$0xff]
    %v170 = vld [vmem:[#allocation5 + $0x90] sm:$0xff]
    %v171 = vld [vmem:[#allocation5 + $0x98] sm:$0xff]
    %v172 = vld [vmem:[#allocation5 + $0xa0] sm:$0xff]
    %v173 = vld [vmem:[#allocation5 + $0xa8] sm:$0xff]
    %v174 = vld [vmem:[#allocation5 + $0xb0] sm:$0xff]
    %v175 = vld [vmem:[#allocation5 + $0xb8] sm:$0xff]
    %v176 = vld [vmem:[#allocation5 + $0xc0] sm:$0xff]
    %v177 = vld [vmem:[#allocation5 + $0xc8] sm:$0xff]
    %v178 = vld [vmem:[#allocation5 + $0xd0] sm:$0xff]
    %v179 = vld [vmem:[#allocation5 + $0xd8] sm:$0xff]
    %v180 = vld [vmem:[#allocation5 + $0xe0] sm:$0xff]
    %v181 = vld [vmem:[#allocation5 + $0xe8] sm:$0xff]
    %v182 = vld [vmem:[#allocation5 + $0xf0] sm:$0xff]
    %v183 = vld [vmem:[#allocation5 + $0xf8] sm:$0xff]
    %v184 = vld [vmem:[#allocation5 + $0x100] sm:$0xff]
    %v185 = vld [vmem:[#allocation5 + $0x108] sm:$0xff]
    %v186 = vld [vmem:[#allocation5 + $0x110] sm:$0xff]
    %v187 = vld [vmem:[#allocation5 + $0x118] sm:$0xff]
    %v188 = vld [vmem:[#allocation5 + $0x120] sm:$0xff]
    %v189 = vld [vmem:[#allocation5 + $0x128] sm:$0xff]
    %v190 = vld [vmem:[#allocation5 + $0x130] sm:$0xff]
    %v191 = vld [vmem:[#allocation5 + $0x138] sm:$0xff]
    %v192 = vld [vmem:[#allocation5 + $0x140] sm:$0xff]
    %v193 = vld [vmem:[#allocation5 + $0x148] sm:$0xff]
    %v194 = vld [vmem:[#allocation5 + $0x150] sm:$0xff]
    %v195 = vld [vmem:[#allocation5 + $0x158] sm:$0xff]
    %v196 = vld [vmem:[#allocation5 + $0x160] sm:$0xff]
    %v197 = vld [vmem:[#allocation5 + $0x168] sm:$0xff]
    %v198 = vld [vmem:[#allocation5 + $0x170] sm:$0xff]
    %v199 = vld [vmem:[#allocation5 + $0x178] sm:$0xff]
    %v200 = vld [vmem:[#allocation5 + $0x180] sm:$0xff]
    %v201 = vld [vmem:[#allocation5 + $0x188] sm:$0xff]
    %v202 = vld [vmem:[#allocation5 + $0x190] sm:$0xff]
    %v203 = vld [vmem:[#allocation5 + $0x198] sm:$0xff]
    %v204 = vld [vmem:[#allocation5 + $0x1a0] sm:$0xff]
    %v205 = vld [vmem:[#allocation5 + $0x1a8] sm:$0xff]
    %v206 = vld [vmem:[#allocation5 + $0x1b0] sm:$0xff]
    %v207 = vld [vmem:[#allocation5 + $0x1b8] sm:$0xff]
    %v208 = vld [vmem:[#allocation5 + $0x1c0] sm:$0xff]
    %v209 = vld [vmem:[#allocation5 + $0x1c8] sm:$0xff]
    %v210 = vld [vmem:[#allocation5 + $0x1d0] sm:$0xff]
    %v211 = vld [vmem:[#allocation5 + $0x1d8] sm:$0xff]
    %v212 = vld [vmem:[#allocation5 + $0x1e0] sm:$0xff]
    %v213 = vld [vmem:[#allocation5 + $0x1e8] sm:$0xff]
    %v214 = vld [vmem:[#allocation5 + $0x1f0] sm:$0xff]
    %v215 = vld [vmem:[#allocation5 + $0x1f8] sm:$0xff]
    %v216 = vld [vmem:[#allocation5 + $0x200] sm:$0xff]
    %v217 = vld [vmem:[#allocation5 + $0x208] sm:$0xff]
    %v218 = vld [vmem:[#allocation5 + $0x210] sm:$0xff]
    %v219 = vld [vmem:[#allocation5 + $0x218] sm:$0xff]
    %v220 = vld [vmem:[#allocation5 + $0x220] sm:$0xff]
    %v221 = vld [vmem:[#allocation5 + $0x228] sm:$0xff]
    %v222 = vld [vmem:[#allocation5 + $0x230] sm:$0xff]
    %v223 = vld [vmem:[#allocation5 + $0x238] sm:$0xff]
    %v224 = vld [vmem:[#allocation5 + $0x240] sm:$0xff]
    %v225 = vld [vmem:[#allocation5 + $0x248] sm:$0xff]
    %v226 = vld [vmem:[#allocation5 + $0x250] sm:$0xff]
    %v227 = vld [vmem:[#allocation5 + $0x258] sm:$0xff]
    %v228 = vld [vmem:[#allocation5 + $0x260] sm:$0xff]
    %v229 = vld [vmem:[#allocation5 + $0x268] sm:$0xff]
    %v230 = vld [vmem:[#allocation5 + $0x270] sm:$0xff]
    %v231 = vld [vmem:[#allocation5 + $0x278] sm:$0xff]
    %v232 = vld [vmem:[#allocation5 + $0x280] sm:$0xff]
    %v233 = vld [vmem:[#allocation5 + $0x288] sm:$0xff]
    %v234 = vld [vmem:[#allocation5 + $0x290] sm:$0xff]
    %v235 = vld [vmem:[#allocation5 + $0x298] sm:$0xff]
    %v236 = vld [vmem:[#allocation5 + $0x2a0] sm:$0xff]
    %v237 = vld [vmem:[#allocation5 + $0x2a8] sm:$0xff]
    %v238 = vld [vmem:[#allocation5 + $0x2b0] sm:$0xff]
    %v239 = vld [vmem:[#allocation5 + $0x2b8] sm:$0xff]
    %v240 = vld [vmem:[#allocation5 + $0x2c0] sm:$0xff]
    %v241 = vld [vmem:[#allocation5 + $0x2c8] sm:$0xff]
    %v242 = vld [vmem:[#allocation5 + $0x2d0] sm:$0xff]
    %v243 = vld [vmem:[#allocation5 + $0x2d8] sm:$0xff]
    %v244 = vld [vmem:[#allocation5 + $0x2e0] sm:$0xff]
    %v245 = vld [vmem:[#allocation5 + $0x2e8] sm:$0xff]
    %v246 = vld [vmem:[#allocation5 + $0x2f0] sm:$0xff]
    %v247 = vld [vmem:[#allocation5 + $0x2f8] sm:$0xff]
    %v248 = vld [vmem:[#allocation5 + $0x300] sm:$0xff]
    %v249 = vld [vmem:[#allocation5 + $0x308] sm:$0xff]
    %v250 = vld [vmem:[#allocation5 + $0x310] sm:$0xff]
    %v251 = vld [vmem:[#allocation5 + $0x318] sm:$0xff]
    %v252 = vld [vmem:[#allocation5 + $0x320] sm:$0xff]
    %v253 = vld [vmem:[#allocation5 + $0x328] sm:$0xff]
    %v254 = vld [vmem:[#allocation5 + $0x330] sm:$0xff]
    %v255 = vld [vmem:[#allocation5 + $0x338] sm:$0xff]
    %v256 = vld [vmem:[#allocation5 + $0x340] sm:$0xff]
    %v257 = vld [vmem:[#allocation5 + $0x348] sm:$0xff]
    %v258 = vld [vmem:[#allocation5 + $0x350] sm:$0xff]
    %v259 = vld [vmem:[#allocation5 + $0x358] sm:$0xff]
    %v260 = vld [vmem:[#allocation5 + $0x360] sm:$0xff]
    %v261 = vld [vmem:[#allocation5 + $0x368] sm:$0xff]
    %v262 = vld [vmem:[#allocation5 + $0x370] sm:$0xff]
    %v263 = vld [vmem:[#allocation5 + $0x378] sm:$0xff]
    %v264 = vld [vmem:[#allocation5 + $0x380] sm:$0xff]
    %v265 = vld [vmem:[#allocation5 + $0x388] sm:$0xff]
    %v266 = vld [vmem:[#allocation5 + $0x390] sm:$0xff]
    %v267 = vld [vmem:[#allocation5 + $0x398] sm:$0xff]
    %v268 = vld [vmem:[#allocation5 + $0x3a0] sm:$0xff]
    %v269 = vld [vmem:[#allocation5 + $0x3a8] sm:$0xff]
    %v270 = vld [vmem:[#allocation5 + $0x3b0] sm:$0xff]
    %v271 = vld [vmem:[#allocation5 + $0x3b8] sm:$0xff]
    %v272 = vld [vmem:[#allocation5 + $0x3c0] sm:$0xff]
    %v273 = vld [vmem:[#allocation5 + $0x3c8] sm:$0xff]
    %v274 = vld [vmem:[#allocation5 + $0x3d0] sm:$0xff]
    %v275 = vld [vmem:[#allocation5 + $0x3d8] sm:$0xff]
    %v276 = vld [vmem:[#allocation5 + $0x3e0] sm:$0xff]
    %v277 = vld [vmem:[#allocation5 + $0x3e8] sm:$0xff]
    %v278 = vld [vmem:[#allocation5 + $0x3f0] sm:$0xff]
    %v279 = vld [vmem:[#allocation5 + $0x3f8] sm:$0xff]
    %v280 = vld [vmem:[#allocation5 + $0x400] sm:$0xff]
    %v281 = vld [vmem:[#allocation5 + $0x408] sm:$0xff]
    %v282 = vld [vmem:[#allocation5 + $0x410] sm:$0xff]
    %v283 = vld [vmem:[#allocation5 + $0x418] sm:$0xff]
    %v284 = vld [vmem:[#allocation5 + $0x420] sm:$0xff]
    %v285 = vld [vmem:[#allocation5 + $0x428] sm:$0xff]
    %v286 = vld [vmem:[#allocation5 + $0x430] sm:$0xff]
    %v287 = vld [vmem:[#allocation5 + $0x438] sm:$0xff]
    %v288 = vld [vmem:[#allocation5 + $0x440] sm:$0xff]
    %v289 = vld [vmem:[#allocation5 + $0x448] sm:$0xff]
    %v290 = vld [vmem:[#allocation5 + $0x450] sm:$0xff]
    %v291 = vld [vmem:[#allocation5 + $0x458] sm:$0xff]
    %v292 = vld [vmem:[#allocation5 + $0x460] sm:$0xff]
    %v293 = vld [vmem:[#allocation5 + $0x468] sm:$0xff]
    %v294 = vld [vmem:[#allocation5 + $0x470] sm:$0xff]
    %v295 = vld [vmem:[#allocation5 + $0x478] sm:$0xff]
    %v296 = vld [vmem:[#allocation5 + $0x480] sm:$0xff]
    %v297 = vld [vmem:[#allocation5 + $0x488] sm:$0xff]
    %v298 = vld [vmem:[#allocation5 + $0x490] sm:$0xff]
    %v299 = vld [vmem:[#allocation5 + $0x498] sm:$0xff]
    %v300 = vld [vmem:[#allocation5 + $0x4a0] sm:$0xff]
    %v301 = vld [vmem:[#allocation5 + $0x4a8] sm:$0xff]
    %v302 = vld [vmem:[#allocation5 + $0x4b0] sm:$0xff]
    %v303 = vld [vmem:[#allocation5 + $0x4b8] sm:$0xff]
    %v304 = vld [vmem:[#allocation5 + $0x4c0] sm:$0xff]
    %v305 = vld [vmem:[#allocation5 + $0x4c8] sm:$0xff]
    %v306 = vld [vmem:[#allocation5 + $0x4d0] sm:$0xff]
    %v307 = vld [vmem:[#allocation5 + $0x4d8] sm:$0xff]
    %v308 = vld [vmem:[#allocation5 + $0x4e0] sm:$0xff]
    %v309 = vld [vmem:[#allocation5 + $0x4e8] sm:$0xff]
    %v310 = vld [vmem:[#allocation5 + $0x4f0] sm:$0xff]
    %v311 = vld [vmem:[#allocation5 + $0x4f8] sm:$0xff]
    %v312 = vld [vmem:[#allocation5 + $0x500] sm:$0xff]
    %v313 = vld [vmem:[#allocation5 + $0x508] sm:$0xff]
    %v314 = vld [vmem:[#allocation5 + $0x510] sm:$0xff]
    %v315 = vld [vmem:[#allocation5 + $0x518] sm:$0xff]
    %v316 = vld [vmem:[#allocation5 + $0x520] sm:$0xff]
    %v317 = vld [vmem:[#allocation5 + $0x528] sm:$0xff]
    %v318 = vld [vmem:[#allocation5 + $0x530] sm:$0xff]
    %v319 = vld [vmem:[#allocation5 + $0x538] sm:$0xff]
    %v320 = vld [vmem:[#allocation5 + $0x540] sm:$0xff]
    %v321 = vld [vmem:[#allocation5 + $0x548] sm:$0xff]
    %v322 = vld [vmem:[#allocation5 + $0x550] sm:$0xff]
    %v323 = vld [vmem:[#allocation5 + $0x558] sm:$0xff]
    %v324 = vld [vmem:[#allocation5 + $0x560] sm:$0xff]
    %v325 = vld [vmem:[#allocation5 + $0x568] sm:$0xff]
    %v326 = vld [vmem:[#allocation5 + $0x570] sm:$0xff]
    %v327 = vld [vmem:[#allocation5 + $0x578] sm:$0xff]
    %v328 = vld [vmem:[#allocation5 + $0x580] sm:$0xff]
    %v329 = vld [vmem:[#allocation5 + $0x588] sm:$0xff]
    %v330 = vld [vmem:[#allocation5 + $0x590] sm:$0xff]
    %v331 = vld [vmem:[#allocation5 + $0x598] sm:$0xff]
    %v332 = vld [vmem:[#allocation5 + $0x5a0] sm:$0xff]
    %v333 = vld [vmem:[#allocation5 + $0x5a8] sm:$0xff]
    %v334 = vld [vmem:[#allocation5 + $0x5b0] sm:$0xff]
    %v335 = vld [vmem:[#allocation5 + $0x5b8] sm:$0xff]
    %v336 = vld [vmem:[#allocation5 + $0x5c0] sm:$0xff]
    %v337 = vld [vmem:[#allocation5 + $0x5c8] sm:$0xff]
    %v338 = vld [vmem:[#allocation5 + $0x5d0] sm:$0xff]
    %v339 = vld [vmem:[#allocation5 + $0x5d8] sm:$0xff]
    %v340 = vld [vmem:[#allocation5 + $0x5e0] sm:$0xff]
    %v341 = vld [vmem:[#allocation5 + $0x5e8] sm:$0xff]
    %v342 = vld [vmem:[#allocation5 + $0x5f0] sm:$0xff]
    %v343 = vld [vmem:[#allocation5 + $0x5f8] sm:$0xff]
    %v344 = vld [vmem:[#allocation5 + $0x600] sm:$0xff]
    %v345 = vld [vmem:[#allocation5 + $0x608] sm:$0xff]
    %v346 = vld [vmem:[#allocation5 + $0x610] sm:$0xff]
    %v347 = vld [vmem:[#allocation5 + $0x618] sm:$0xff]
    %v348 = vld [vmem:[#allocation5 + $0x620] sm:$0xff]
    %v349 = vld [vmem:[#allocation5 + $0x628] sm:$0xff]
    %v350 = vld [vmem:[#allocation5 + $0x630] sm:$0xff]
    %v351 = vld [vmem:[#allocation5 + $0x638] sm:$0xff]
    %v352 = vld [vmem:[#allocation5 + $0x640] sm:$0xff]
    %v353 = vld [vmem:[#allocation5 + $0x648] sm:$0xff]
    %v354 = vld [vmem:[#allocation5 + $0x650] sm:$0xff]
    %v355 = vld [vmem:[#allocation5 + $0x658] sm:$0xff]
    %v356 = vld [vmem:[#allocation5 + $0x660] sm:$0xff]
    %v357 = vld [vmem:[#allocation5 + $0x668] sm:$0xff]
    %v358 = vld [vmem:[#allocation5 + $0x670] sm:$0xff]
    %v359 = vld [vmem:[#allocation5 + $0x678] sm:$0xff]
    %v360 = vld [vmem:[#allocation5 + $0x680] sm:$0xff]
    %v361 = vld [vmem:[#allocation5 + $0x688] sm:$0xff]
    %v362 = vld [vmem:[#allocation5 + $0x690] sm:$0xff]
    %v363 = vld [vmem:[#allocation5 + $0x698] sm:$0xff]
    %v364 = vld [vmem:[#allocation5 + $0x6a0] sm:$0xff]
    %v365 = vld [vmem:[#allocation5 + $0x6a8] sm:$0xff]
    %v366 = vld [vmem:[#allocation5 + $0x6b0] sm:$0xff]
    %v367 = vld [vmem:[#allocation5 + $0x6b8] sm:$0xff]
    %v368 = vld [vmem:[#allocation5 + $0x6c0] sm:$0xff]
    %v369 = vld [vmem:[#allocation5 + $0x6c8] sm:$0xff]
    %v370 = vld [vmem:[#allocation5 + $0x6d0] sm:$0xff]
    %v371 = vld [vmem:[#allocation5 + $0x6d8] sm:$0xff]
    %v372 = vld [vmem:[#allocation5 + $0x6e0] sm:$0xff]
    %v373 = vld [vmem:[#allocation5 + $0x6e8] sm:$0xff]
    %v374 = vld [vmem:[#allocation5 + $0x6f0] sm:$0xff]
    %v375 = vld [vmem:[#allocation5 + $0x6f8] sm:$0xff]
    %v376 = vld [vmem:[#allocation5 + $0x700] sm:$0xff]
    %v377 = vld [vmem:[#allocation5 + $0x708] sm:$0xff]
    %v378 = vld [vmem:[#allocation5 + $0x710] sm:$0xff]
    %v379 = vld [vmem:[#allocation5 + $0x718] sm:$0xff]
    %v380 = vld [vmem:[#allocation5 + $0x720] sm:$0xff]
    %v381 = vld [vmem:[#allocation5 + $0x728] sm:$0xff]
    %v382 = vld [vmem:[#allocation5 + $0x730] sm:$0xff]
    %v383 = vld [vmem:[#allocation5 + $0x738] sm:$0xff]
    %v384 = vld [vmem:[#allocation5 + $0x740] sm:$0xff]
    %v385 = vld [vmem:[#allocation5 + $0x748] sm:$0xff]
    %v386 = vld [vmem:[#allocation5 + $0x750] sm:$0xff]
    %v387 = vld [vmem:[#allocation5 + $0x758] sm:$0xff]
    %v388 = vld [vmem:[#allocation5 + $0x760] sm:$0xff]
    %v389 = vld [vmem:[#allocation5 + $0x768] sm:$0xff]
    %v390 = vld [vmem:[#allocation5 + $0x770] sm:$0xff]
    %v391 = vld [vmem:[#allocation5 + $0x778] sm:$0xff]
    %v392 = vld [vmem:[#allocation5 + $0x780] sm:$0xff]
    %v393 = vld [vmem:[#allocation5 + $0x788] sm:$0xff]
    %v394 = vld [vmem:[#allocation5 + $0x790] sm:$0xff]
    %v395 = vld [vmem:[#allocation5 + $0x798] sm:$0xff]
    %v396 = vld [vmem:[#allocation5 + $0x7a0] sm:$0xff]
    %v397 = vld [vmem:[#allocation5 + $0x7a8] sm:$0xff]
    %v398 = vld [vmem:[#allocation5 + $0x7b0] sm:$0xff]
    %v399 = vld [vmem:[#allocation5 + $0x7b8] sm:$0xff]
    %v400 = vld [vmem:[#allocation5 + $0x7c0] sm:$0xff]
    %v401 = vld [vmem:[#allocation5 + $0x7c8] sm:$0xff]
    %v402 = vld [vmem:[#allocation5 + $0x7d0] sm:$0xff]
    %v403 = vld [vmem:[#allocation5 + $0x7d8] sm:$0xff]
    %v404 = vld [vmem:[#allocation5 + $0x7e0] sm:$0xff]
    %v405 = vld [vmem:[#allocation5 + $0x7e8] sm:$0xff]
    %v406 = vld [vmem:[#allocation5 + $0x7f0] sm:$0xff]
    %v407 = vld [vmem:[#allocation5 + $0x7f8] sm:$0xff]
    %v408 = vld [vmem:[#allocation5 + $0x800] sm:$0xff]
    %v409 = vld [vmem:[#allocation5 + $0x808] sm:$0xff]
    %v410 = vld [vmem:[#allocation5 + $0x810] sm:$0xff]
    %v411 = vld [vmem:[#allocation5 + $0x818] sm:$0xff]
    %v412 = vld [vmem:[#allocation5 + $0x820] sm:$0xff]
    %v413 = vld [vmem:[#allocation5 + $0x828] sm:$0xff]
    %v414 = vld [vmem:[#allocation5 + $0x830] sm:$0xff]
    %v415 = vld [vmem:[#allocation5 + $0x838] sm:$0xff]
    %v416 = vld [vmem:[#allocation5 + $0x840] sm:$0xff]
    %v417 = vld [vmem:[#allocation5 + $0x848] sm:$0xff]
    %v418 = vld [vmem:[#allocation5 + $0x850] sm:$0xff]
    %v419 = vld [vmem:[#allocation5 + $0x858] sm:$0xff]
    %v420 = vld [vmem:[#allocation5 + $0x860] sm:$0xff]
    %v421 = vld [vmem:[#allocation5 + $0x868] sm:$0xff]
    %v422 = vld [vmem:[#allocation5 + $0x870] sm:$0xff]
    %v423 = vld [vmem:[#allocation5 + $0x878] sm:$0xff]
    %v424 = vld [vmem:[#allocation5 + $0x880] sm:$0xff]
    %v425 = vld [vmem:[#allocation5 + $0x888] sm:$0xff]
    %v426 = vld [vmem:[#allocation5 + $0x890] sm:$0xff]
    %v427 = vld [vmem:[#allocation5 + $0x898] sm:$0xff]
    %v428 = vld [vmem:[#allocation5 + $0x8a0] sm:$0xff]
    %v429 = vld [vmem:[#allocation5 + $0x8a8] sm:$0xff]
    %v430 = vld [vmem:[#allocation5 + $0x8b0] sm:$0xff]
    %v431 = vld [vmem:[#allocation5 + $0x8b8] sm:$0xff]
    %v432 = vld [vmem:[#allocation5 + $0x8c0] sm:$0xff]
    %v433 = vld [vmem:[#allocation5 + $0x8c8] sm:$0xff]
    %v434 = vld [vmem:[#allocation5 + $0x8d0] sm:$0xff]
    %v435 = vld [vmem:[#allocation5 + $0x8d8] sm:$0xff]
    %v436 = vld [vmem:[#allocation5 + $0x8e0] sm:$0xff]
    %v437 = vld [vmem:[#allocation5 + $0x8e8] sm:$0xff]
    %v438 = vld [vmem:[#allocation5 + $0x8f0] sm:$0xff]
    %v439 = vld [vmem:[#allocation5 + $0x8f8] sm:$0xff]
    %v440 = vld [vmem:[#allocation5 + $0x900] sm:$0xff]
    %v441 = vld [vmem:[#allocation5 + $0x908] sm:$0xff]
    %v442 = vld [vmem:[#allocation5 + $0x910] sm:$0xff]
    %v443 = vld [vmem:[#allocation5 + $0x918] sm:$0xff]
    %v444 = vld [vmem:[#allocation5 + $0x920] sm:$0xff]
    %v445 = vld [vmem:[#allocation5 + $0x928] sm:$0xff]
    %v446 = vld [vmem:[#allocation5 + $0x930] sm:$0xff]
    %v447 = vld [vmem:[#allocation5 + $0x938] sm:$0xff]
    %v448 = vld [vmem:[#allocation5 + $0x940] sm:$0xff]
    %v449 = vld [vmem:[#allocation5 + $0x948] sm:$0xff]
    %v450 = vld [vmem:[#allocation5 + $0x950] sm:$0xff]
    %v451 = vld [vmem:[#allocation5 + $0x958] sm:$0xff]
    %v452 = vld [vmem:[#allocation5 + $0x960] sm:$0xff]
    %v453 = vld [vmem:[#allocation5 + $0x968] sm:$0xff]
    %v454 = vld [vmem:[#allocation5 + $0x970] sm:$0xff]
    %v455 = vld [vmem:[#allocation5 + $0x978] sm:$0xff]
    %v456 = vld [vmem:[#allocation5 + $0x980] sm:$0xff]
    %v457 = vld [vmem:[#allocation5 + $0x988] sm:$0xff]
    %v458 = vld [vmem:[#allocation5 + $0x990] sm:$0xff]
    %v459 = vld [vmem:[#allocation5 + $0x998] sm:$0xff]
    %v460 = vld [vmem:[#allocation5 + $0x9a0] sm:$0xff]
    %v461 = vld [vmem:[#allocation5 + $0x9a8] sm:$0xff]
    %v462 = vld [vmem:[#allocation5 + $0x9b0] sm:$0xff]
    %v463 = vld [vmem:[#allocation5 + $0x9b8] sm:$0xff]
    %v464 = vld [vmem:[#allocation5 + $0x9c0] sm:$0xff]
    %v465 = vld [vmem:[#allocation5 + $0x9c8] sm:$0xff]
    %v466 = vld [vmem:[#allocation5 + $0x9d0] sm:$0xff]
    %v467 = vld [vmem:[#allocation5 + $0x9d8] sm:$0xff]
    %v468 = vld [vmem:[#allocation5 + $0x9e0] sm:$0xff]
    %v469 = vld [vmem:[#allocation5 + $0x9e8] sm:$0xff]
    %v470 = vld [vmem:[#allocation5 + $0x9f0] sm:$0xff]
    %v471 = vld [vmem:[#allocation5 + $0x9f8] sm:$0xff]
    %v472 = vld [vmem:[#allocation7] sm:$0xff]
    %v474 = vlaneseq
    %v475 = vshrl.u32 %v474, 7
    %v476 = vsub.s32 0, %v475
    %v477 = vrot.slane %v472, %v476
    %v478 = vlaneseq
    %v479 = vshrl.u32 %v478, 7
    %v480 = vsub.s32 1, %v479
    %v481 = vrot.slane %v472, %v480
    %v482 = vlaneseq
    %v483 = vshrl.u32 %v482, 7
    %v484 = vsub.s32 2, %v483
    %v485 = vrot.slane %v472, %v484
    %v486 = vlaneseq
    %v487 = vshrl.u32 %v486, 7
    %v488 = vsub.s32 3, %v487
    %v489 = vrot.slane %v472, %v488
    %v490 = vlaneseq
    %v491 = vshrl.u32 %v490, 7
    %v492 = vsub.s32 4, %v491
    %v493 = vrot.slane %v472, %v492
    %v494 = vlaneseq
    %v495 = vshrl.u32 %v494, 7
    %v496 = vsub.s32 5, %v495
    %v497 = vrot.slane %v472, %v496
    %v498 = vlaneseq
    %v499 = vshrl.u32 %v498, 7
    %v500 = vsub.s32 6, %v499
    %v501 = vrot.slane %v472, %v500
    %v502 = vlaneseq
    %v503 = vshrl.u32 %v502, 7
    %v504 = vsub.s32 7, %v503
    %v505 = vrot.slane %v472, %v504
    %v517 = vunpack.c.l.b16 %v149
    %v518 = vunpack.c.h.b16 %v149
    %v519 = vunpack.c.l.b16 %v150
    %v520 = vunpack.c.h.b16 %v150
    %v521 = vunpack.c.l.b16 %v151
    %v522 = vpack.c.b16 %v517, %v517
    %v523 = vpack.c.b16 %v518, %v518
    %v524 = vpack.c.b16 %v519, %v519
    %v525 = vpack.c.b16 %v520, %v520
    %v526 = vpack.c.b16 %v521, %v521
    %v852 = vunpack.c.l.b16 %v152
    %v853 = vunpack.c.h.b16 %v152
    %v854 = vunpack.c.l.b16 %v153
    %v855 = vunpack.c.h.b16 %v153
    %v856 = vunpack.c.l.b16 %v154
    %v857 = vunpack.c.h.b16 %v154
    %v858 = vunpack.c.l.b16 %v155
    %v859 = vunpack.c.h.b16 %v155
    %v860 = vunpack.c.l.b16 %v156
    %v861 = vunpack.c.h.b16 %v156
    %v862 = vunpack.c.l.b16 %v157
    %v863 = vunpack.c.h.b16 %v157
    %v864 = vunpack.c.l.b16 %v158
    %v865 = vunpack.c.h.b16 %v158
    %v866 = vunpack.c.l.b16 %v159
    %v867 = vunpack.c.h.b16 %v159
    %v868 = vunpack.c.l.b16 %v160
    %v869 = vunpack.c.h.b16 %v160
    %v870 = vunpack.c.l.b16 %v161
    %v871 = vunpack.c.h.b16 %v161
    %v872 = vunpack.c.l.b16 %v162
    %v873 = vunpack.c.h.b16 %v162
    %v874 = vunpack.c.l.b16 %v163
    %v875 = vunpack.c.h.b16 %v163
    %v876 = vunpack.c.l.b16 %v164
    %v877 = vunpack.c.h.b16 %v164
    %v878 = vunpack.c.l.b16 %v165
    %v879 = vunpack.c.h.b16 %v165
    %v880 = vunpack.c.l.b16 %v166
    %v881 = vunpack.c.h.b16 %v166
    %v882 = vunpack.c.l.b16 %v167
    %v883 = vunpack.c.h.b16 %v167
    %v884 = vunpack.c.l.b16 %v168
    %v885 = vunpack.c.h.b16 %v168
    %v886 = vunpack.c.l.b16 %v169
    %v887 = vunpack.c.h.b16 %v169
    %v888 = vunpack.c.l.b16 %v170
    %v889 = vunpack.c.h.b16 %v170
    %v890 = vunpack.c.l.b16 %v171
    %v891 = vunpack.c.h.b16 %v171
    %v892 = vunpack.c.l.b16 %v172
    %v893 = vunpack.c.h.b16 %v172
    %v894 = vunpack.c.l.b16 %v173
    %v895 = vunpack.c.h.b16 %v173
    %v896 = vunpack.c.l.b16 %v174
    %v897 = vunpack.c.h.b16 %v174
    %v898 = vunpack.c.l.b16 %v175
    %v899 = vunpack.c.h.b16 %v175
    %v900 = vunpack.c.l.b16 %v176
    %v901 = vunpack.c.h.b16 %v176
    %v902 = vunpack.c.l.b16 %v177
    %v903 = vunpack.c.h.b16 %v177
    %v904 = vunpack.c.l.b16 %v178
    %v905 = vunpack.c.h.b16 %v178
    %v906 = vunpack.c.l.b16 %v179
    %v907 = vunpack.c.h.b16 %v179
    %v908 = vunpack.c.l.b16 %v180
    %v909 = vunpack.c.h.b16 %v180
    %v910 = vunpack.c.l.b16 %v181
    %v911 = vunpack.c.h.b16 %v181
    %v912 = vunpack.c.l.b16 %v182
    %v913 = vunpack.c.h.b16 %v182
    %v914 = vunpack.c.l.b16 %v183
    %v915 = vunpack.c.h.b16 %v183
    %v916 = vunpack.c.l.b16 %v184
    %v917 = vunpack.c.h.b16 %v184
    %v918 = vunpack.c.l.b16 %v185
    %v919 = vunpack.c.h.b16 %v185
    %v920 = vunpack.c.l.b16 %v186
    %v921 = vunpack.c.h.b16 %v186
    %v922 = vunpack.c.l.b16 %v187
    %v923 = vunpack.c.h.b16 %v187
    %v924 = vunpack.c.l.b16 %v188
    %v925 = vunpack.c.h.b16 %v188
    %v926 = vunpack.c.l.b16 %v189
    %v927 = vunpack.c.h.b16 %v189
    %v928 = vunpack.c.l.b16 %v190
    %v929 = vunpack.c.h.b16 %v190
    %v930 = vunpack.c.l.b16 %v191
    %v931 = vunpack.c.h.b16 %v191
    %v932 = vunpack.c.l.b16 %v192
    %v933 = vunpack.c.h.b16 %v192
    %v934 = vunpack.c.l.b16 %v193
    %v935 = vunpack.c.h.b16 %v193
    %v936 = vunpack.c.l.b16 %v194
    %v937 = vunpack.c.h.b16 %v194
    %v938 = vunpack.c.l.b16 %v195
    %v939 = vunpack.c.h.b16 %v195
    %v940 = vunpack.c.l.b16 %v196
    %v941 = vunpack.c.h.b16 %v196
    %v942 = vunpack.c.l.b16 %v197
    %v943 = vunpack.c.h.b16 %v197
    %v944 = vunpack.c.l.b16 %v198
    %v945 = vunpack.c.h.b16 %v198
    %v946 = vunpack.c.l.b16 %v199
    %v947 = vunpack.c.h.b16 %v199
    %v948 = vunpack.c.l.b16 %v200
    %v949 = vunpack.c.h.b16 %v200
    %v950 = vunpack.c.l.b16 %v201
    %v951 = vunpack.c.h.b16 %v201
    %v952 = vunpack.c.l.b16 %v202
    %v953 = vunpack.c.h.b16 %v202
    %v954 = vunpack.c.l.b16 %v203
    %v955 = vunpack.c.h.b16 %v203
    %v956 = vunpack.c.l.b16 %v204
    %v957 = vunpack.c.h.b16 %v204
    %v958 = vunpack.c.l.b16 %v205
    %v959 = vunpack.c.h.b16 %v205
    %v960 = vunpack.c.l.b16 %v206
    %v961 = vunpack.c.h.b16 %v206
    %v962 = vunpack.c.l.b16 %v207
    %v963 = vunpack.c.h.b16 %v207
    %v964 = vunpack.c.l.b16 %v208
    %v965 = vunpack.c.h.b16 %v208
    %v966 = vunpack.c.l.b16 %v209
    %v967 = vunpack.c.h.b16 %v209
    %v968 = vunpack.c.l.b16 %v210
    %v969 = vunpack.c.h.b16 %v210
    %v970 = vunpack.c.l.b16 %v211
    %v971 = vunpack.c.h.b16 %v211
    %v972 = vunpack.c.l.b16 %v212
    %v973 = vunpack.c.h.b16 %v212
    %v974 = vunpack.c.l.b16 %v213
    %v975 = vunpack.c.h.b16 %v213
    %v976 = vunpack.c.l.b16 %v214
    %v977 = vunpack.c.h.b16 %v214
    %v978 = vunpack.c.l.b16 %v215
    %v979 = vunpack.c.h.b16 %v215
    %v980 = vunpack.c.l.b16 %v216
    %v981 = vunpack.c.h.b16 %v216
    %v982 = vunpack.c.l.b16 %v217
    %v983 = vunpack.c.h.b16 %v217
    %v984 = vunpack.c.l.b16 %v218
    %v985 = vunpack.c.h.b16 %v218
    %v986 = vunpack.c.l.b16 %v219
    %v987 = vunpack.c.h.b16 %v219
    %v988 = vunpack.c.l.b16 %v220
    %v989 = vunpack.c.h.b16 %v220
    %v990 = vunpack.c.l.b16 %v221
    %v991 = vunpack.c.h.b16 %v221
    %v992 = vunpack.c.l.b16 %v222
    %v993 = vunpack.c.h.b16 %v222
    %v994 = vunpack.c.l.b16 %v223
    %v995 = vunpack.c.h.b16 %v223
    %v996 = vunpack.c.l.b16 %v224
    %v997 = vunpack.c.h.b16 %v224
    %v998 = vunpack.c.l.b16 %v225
    %v999 = vunpack.c.h.b16 %v225
    %v1000 = vunpack.c.l.b16 %v226
    %v1001 = vunpack.c.h.b16 %v226
    %v1002 = vunpack.c.l.b16 %v227
    %v1003 = vunpack.c.h.b16 %v227
    %v1004 = vunpack.c.l.b16 %v228
    %v1005 = vunpack.c.h.b16 %v228
    %v1006 = vunpack.c.l.b16 %v229
    %v1007 = vunpack.c.h.b16 %v229
    %v1008 = vunpack.c.l.b16 %v230
    %v1009 = vunpack.c.h.b16 %v230
    %v1010 = vunpack.c.l.b16 %v231
    %v1011 = vunpack.c.h.b16 %v231
    %v1012 = vunpack.c.l.b16 %v232
    %v1013 = vunpack.c.h.b16 %v232
    %v1014 = vunpack.c.l.b16 %v233
    %v1015 = vunpack.c.h.b16 %v233
    %v1016 = vunpack.c.l.b16 %v234
    %v1017 = vunpack.c.h.b16 %v234
    %v1018 = vunpack.c.l.b16 %v235
    %v1019 = vunpack.c.h.b16 %v235
    %v1020 = vunpack.c.l.b16 %v236
    %v1021 = vunpack.c.h.b16 %v236
    %v1022 = vunpack.c.l.b16 %v237
    %v1023 = vunpack.c.h.b16 %v237
    %v1024 = vunpack.c.l.b16 %v238
    %v1025 = vunpack.c.h.b16 %v238
    %v1026 = vunpack.c.l.b16 %v239
    %v1027 = vunpack.c.h.b16 %v239
    %v1028 = vunpack.c.l.b16 %v240
    %v1029 = vunpack.c.h.b16 %v240
    %v1030 = vunpack.c.l.b16 %v241
    %v1031 = vunpack.c.h.b16 %v241
    %v1032 = vunpack.c.l.b16 %v242
    %v1033 = vunpack.c.h.b16 %v242
    %v1034 = vunpack.c.l.b16 %v243
    %v1035 = vunpack.c.h.b16 %v243
    %v1036 = vunpack.c.l.b16 %v244
    %v1037 = vunpack.c.h.b16 %v244
    %v1038 = vunpack.c.l.b16 %v245
    %v1039 = vunpack.c.h.b16 %v245
    %v1040 = vunpack.c.l.b16 %v246
    %v1041 = vunpack.c.h.b16 %v246
    %v1042 = vunpack.c.l.b16 %v247
    %v1043 = vunpack.c.h.b16 %v247
    %v1044 = vunpack.c.l.b16 %v248
    %v1045 = vunpack.c.h.b16 %v248
    %v1046 = vunpack.c.l.b16 %v249
    %v1047 = vunpack.c.h.b16 %v249
    %v1048 = vunpack.c.l.b16 %v250
    %v1049 = vunpack.c.h.b16 %v250
    %v1050 = vunpack.c.l.b16 %v251
    %v1051 = vunpack.c.h.b16 %v251
    %v1052 = vunpack.c.l.b16 %v252
    %v1053 = vunpack.c.h.b16 %v252
    %v1054 = vunpack.c.l.b16 %v253
    %v1055 = vunpack.c.h.b16 %v253
    %v1056 = vunpack.c.l.b16 %v254
    %v1057 = vunpack.c.h.b16 %v254
    %v1058 = vunpack.c.l.b16 %v255
    %v1059 = vunpack.c.h.b16 %v255
    %v1060 = vunpack.c.l.b16 %v256
    %v1061 = vunpack.c.h.b16 %v256
    %v1062 = vunpack.c.l.b16 %v257
    %v1063 = vunpack.c.h.b16 %v257
    %v1064 = vunpack.c.l.b16 %v258
    %v1065 = vunpack.c.h.b16 %v258
    %v1066 = vunpack.c.l.b16 %v259
    %v1067 = vunpack.c.h.b16 %v259
    %v1068 = vunpack.c.l.b16 %v260
    %v1069 = vunpack.c.h.b16 %v260
    %v1070 = vunpack.c.l.b16 %v261
    %v1071 = vunpack.c.h.b16 %v261
    %v1072 = vunpack.c.l.b16 %v262
    %v1073 = vunpack.c.h.b16 %v262
    %v1074 = vunpack.c.l.b16 %v263
    %v1075 = vunpack.c.h.b16 %v263
    %v1076 = vunpack.c.l.b16 %v264
    %v1077 = vunpack.c.h.b16 %v264
    %v1078 = vunpack.c.l.b16 %v265
    %v1079 = vunpack.c.h.b16 %v265
    %v1080 = vunpack.c.l.b16 %v266
    %v1081 = vunpack.c.h.b16 %v266
    %v1082 = vunpack.c.l.b16 %v267
    %v1083 = vunpack.c.h.b16 %v267
    %v1084 = vunpack.c.l.b16 %v268
    %v1085 = vunpack.c.h.b16 %v268
    %v1086 = vunpack.c.l.b16 %v269
    %v1087 = vunpack.c.h.b16 %v269
    %v1088 = vunpack.c.l.b16 %v270
    %v1089 = vunpack.c.h.b16 %v270
    %v1090 = vunpack.c.l.b16 %v271
    %v1091 = vunpack.c.h.b16 %v271
    %v1092 = vunpack.c.l.b16 %v272
    %v1093 = vunpack.c.h.b16 %v272
    %v1094 = vunpack.c.l.b16 %v273
    %v1095 = vunpack.c.h.b16 %v273
    %v1096 = vunpack.c.l.b16 %v274
    %v1097 = vunpack.c.h.b16 %v274
    %v1098 = vunpack.c.l.b16 %v275
    %v1099 = vunpack.c.h.b16 %v275
    %v1100 = vunpack.c.l.b16 %v276
    %v1101 = vunpack.c.h.b16 %v276
    %v1102 = vunpack.c.l.b16 %v277
    %v1103 = vunpack.c.h.b16 %v277
    %v1104 = vunpack.c.l.b16 %v278
    %v1105 = vunpack.c.h.b16 %v278
    %v1106 = vunpack.c.l.b16 %v279
    %v1107 = vunpack.c.h.b16 %v279
    %v1108 = vunpack.c.l.b16 %v280
    %v1109 = vunpack.c.h.b16 %v280
    %v1110 = vunpack.c.l.b16 %v281
    %v1111 = vunpack.c.h.b16 %v281
    %v1112 = vunpack.c.l.b16 %v282
    %v1113 = vunpack.c.h.b16 %v282
    %v1114 = vunpack.c.l.b16 %v283
    %v1115 = vunpack.c.h.b16 %v283
    %v1116 = vunpack.c.l.b16 %v284
    %v1117 = vunpack.c.h.b16 %v284
    %v1118 = vunpack.c.l.b16 %v285
    %v1119 = vunpack.c.h.b16 %v285
    %v1120 = vunpack.c.l.b16 %v286
    %v1121 = vunpack.c.h.b16 %v286
    %v1122 = vunpack.c.l.b16 %v287
    %v1123 = vunpack.c.h.b16 %v287
    %v1124 = vunpack.c.l.b16 %v288
    %v1125 = vunpack.c.h.b16 %v288
    %v1126 = vunpack.c.l.b16 %v289
    %v1127 = vunpack.c.h.b16 %v289
    %v1128 = vunpack.c.l.b16 %v290
    %v1129 = vunpack.c.h.b16 %v290
    %v1130 = vunpack.c.l.b16 %v291
    %v1131 = vunpack.c.h.b16 %v291
    %v1132 = vunpack.c.l.b16 %v292
    %v1133 = vunpack.c.h.b16 %v292
    %v1134 = vunpack.c.l.b16 %v293
    %v1135 = vunpack.c.h.b16 %v293
    %v1136 = vunpack.c.l.b16 %v294
    %v1137 = vunpack.c.h.b16 %v294
    %v1138 = vunpack.c.l.b16 %v295
    %v1139 = vunpack.c.h.b16 %v295
    %v1140 = vunpack.c.l.b16 %v296
    %v1141 = vunpack.c.h.b16 %v296
    %v1142 = vunpack.c.l.b16 %v297
    %v1143 = vunpack.c.h.b16 %v297
    %v1144 = vunpack.c.l.b16 %v298
    %v1145 = vunpack.c.h.b16 %v298
    %v1146 = vunpack.c.l.b16 %v299
    %v1147 = vunpack.c.h.b16 %v299
    %v1148 = vunpack.c.l.b16 %v300
    %v1149 = vunpack.c.h.b16 %v300
    %v1150 = vunpack.c.l.b16 %v301
    %v1151 = vunpack.c.h.b16 %v301
    %v1152 = vunpack.c.l.b16 %v302
    %v1153 = vunpack.c.h.b16 %v302
    %v1154 = vunpack.c.l.b16 %v303
    %v1155 = vunpack.c.h.b16 %v303
    %v1156 = vunpack.c.l.b16 %v304
    %v1157 = vunpack.c.h.b16 %v304
    %v1158 = vunpack.c.l.b16 %v305
    %v1159 = vunpack.c.h.b16 %v305
    %v1160 = vunpack.c.l.b16 %v306
    %v1161 = vunpack.c.h.b16 %v306
    %v1162 = vunpack.c.l.b16 %v307
    %v1163 = vunpack.c.h.b16 %v307
    %v1164 = vunpack.c.l.b16 %v308
    %v1165 = vunpack.c.h.b16 %v308
    %v1166 = vunpack.c.l.b16 %v309
    %v1167 = vunpack.c.h.b16 %v309
    %v1168 = vunpack.c.l.b16 %v310
    %v1169 = vunpack.c.h.b16 %v310
    %v1170 = vunpack.c.l.b16 %v311
    %v1171 = vunpack.c.h.b16 %v311
    %v1172 = vunpack.c.l.b16 %v312
    %v1173 = vunpack.c.h.b16 %v312
    %v1174 = vunpack.c.l.b16 %v313
    %v1175 = vunpack.c.h.b16 %v313
    %v1176 = vunpack.c.l.b16 %v314
    %v1177 = vunpack.c.h.b16 %v314
    %v1178 = vunpack.c.l.b16 %v315
    %v1179 = vunpack.c.h.b16 %v315
    %v1180 = vunpack.c.l.b16 %v316
    %v1181 = vunpack.c.h.b16 %v316
    %v1182 = vunpack.c.l.b16 %v317
    %v1183 = vunpack.c.h.b16 %v317
    %v1184 = vunpack.c.l.b16 %v318
    %v1185 = vunpack.c.h.b16 %v318
    %v1186 = vunpack.c.l.b16 %v319
    %v1187 = vunpack.c.h.b16 %v319
    %v1188 = vunpack.c.l.b16 %v320
    %v1189 = vunpack.c.h.b16 %v320
    %v1190 = vunpack.c.l.b16 %v321
    %v1191 = vunpack.c.h.b16 %v321
    %v1192 = vunpack.c.l.b16 %v322
    %v1193 = vunpack.c.h.b16 %v322
    %v1194 = vunpack.c.l.b16 %v323
    %v1195 = vunpack.c.h.b16 %v323
    %v1196 = vunpack.c.l.b16 %v324
    %v1197 = vunpack.c.h.b16 %v324
    %v1198 = vunpack.c.l.b16 %v325
    %v1199 = vunpack.c.h.b16 %v325
    %v1200 = vunpack.c.l.b16 %v326
    %v1201 = vunpack.c.h.b16 %v326
    %v1202 = vunpack.c.l.b16 %v327
    %v1203 = vunpack.c.h.b16 %v327
    %v1204 = vunpack.c.l.b16 %v328
    %v1205 = vunpack.c.h.b16 %v328
    %v1206 = vunpack.c.l.b16 %v329
    %v1207 = vunpack.c.h.b16 %v329
    %v1208 = vunpack.c.l.b16 %v330
    %v1209 = vunpack.c.h.b16 %v330
    %v1210 = vunpack.c.l.b16 %v331
    %v1211 = vunpack.c.h.b16 %v331
    %v1212 = vunpack.c.l.b16 %v332
    %v1213 = vunpack.c.h.b16 %v332
    %v1214 = vunpack.c.l.b16 %v333
    %v1215 = vunpack.c.h.b16 %v333
    %v1216 = vunpack.c.l.b16 %v334
    %v1217 = vunpack.c.h.b16 %v334
    %v1218 = vunpack.c.l.b16 %v335
    %v1219 = vunpack.c.h.b16 %v335
    %v1220 = vunpack.c.l.b16 %v336
    %v1221 = vunpack.c.h.b16 %v336
    %v1222 = vunpack.c.l.b16 %v337
    %v1223 = vunpack.c.h.b16 %v337
    %v1224 = vunpack.c.l.b16 %v338
    %v1225 = vunpack.c.h.b16 %v338
    %v1226 = vunpack.c.l.b16 %v339
    %v1227 = vunpack.c.h.b16 %v339
    %v1228 = vunpack.c.l.b16 %v340
    %v1229 = vunpack.c.h.b16 %v340
    %v1230 = vunpack.c.l.b16 %v341
    %v1231 = vunpack.c.h.b16 %v341
    %v1232 = vunpack.c.l.b16 %v342
    %v1233 = vunpack.c.h.b16 %v342
    %v1234 = vunpack.c.l.b16 %v343
    %v1235 = vunpack.c.h.b16 %v343
    %v1236 = vunpack.c.l.b16 %v344
    %v1237 = vunpack.c.h.b16 %v344
    %v1238 = vunpack.c.l.b16 %v345
    %v1239 = vunpack.c.h.b16 %v345
    %v1240 = vunpack.c.l.b16 %v346
    %v1241 = vunpack.c.h.b16 %v346
    %v1242 = vunpack.c.l.b16 %v347
    %v1243 = vunpack.c.h.b16 %v347
    %v1244 = vunpack.c.l.b16 %v348
    %v1245 = vunpack.c.h.b16 %v348
    %v1246 = vunpack.c.l.b16 %v349
    %v1247 = vunpack.c.h.b16 %v349
    %v1248 = vunpack.c.l.b16 %v350
    %v1249 = vunpack.c.h.b16 %v350
    %v1250 = vunpack.c.l.b16 %v351
    %v1251 = vunpack.c.h.b16 %v351
    %v1252 = vunpack.c.l.b16 %v352
    %v1253 = vunpack.c.h.b16 %v352
    %v1254 = vunpack.c.l.b16 %v353
    %v1255 = vunpack.c.h.b16 %v353
    %v1256 = vunpack.c.l.b16 %v354
    %v1257 = vunpack.c.h.b16 %v354
    %v1258 = vunpack.c.l.b16 %v355
    %v1259 = vunpack.c.h.b16 %v355
    %v1260 = vunpack.c.l.b16 %v356
    %v1261 = vunpack.c.h.b16 %v356
    %v1262 = vunpack.c.l.b16 %v357
    %v1263 = vunpack.c.h.b16 %v357
    %v1264 = vunpack.c.l.b16 %v358
    %v1265 = vunpack.c.h.b16 %v358
    %v1266 = vunpack.c.l.b16 %v359
    %v1267 = vunpack.c.h.b16 %v359
    %v1268 = vunpack.c.l.b16 %v360
    %v1269 = vunpack.c.h.b16 %v360
    %v1270 = vunpack.c.l.b16 %v361
    %v1271 = vunpack.c.h.b16 %v361
    %v1272 = vunpack.c.l.b16 %v362
    %v1273 = vunpack.c.h.b16 %v362
    %v1274 = vunpack.c.l.b16 %v363
    %v1275 = vunpack.c.h.b16 %v363
    %v1276 = vunpack.c.l.b16 %v364
    %v1277 = vunpack.c.h.b16 %v364
    %v1278 = vunpack.c.l.b16 %v365
    %v1279 = vunpack.c.h.b16 %v365
    %v1280 = vunpack.c.l.b16 %v366
    %v1281 = vunpack.c.h.b16 %v366
    %v1282 = vunpack.c.l.b16 %v367
    %v1283 = vunpack.c.h.b16 %v367
    %v1284 = vunpack.c.l.b16 %v368
    %v1285 = vunpack.c.h.b16 %v368
    %v1286 = vunpack.c.l.b16 %v369
    %v1287 = vunpack.c.h.b16 %v369
    %v1288 = vunpack.c.l.b16 %v370
    %v1289 = vunpack.c.h.b16 %v370
    %v1290 = vunpack.c.l.b16 %v371
    %v1291 = vunpack.c.h.b16 %v371
    %v1292 = vunpack.c.l.b16 %v372
    %v1293 = vunpack.c.h.b16 %v372
    %v1294 = vunpack.c.l.b16 %v373
    %v1295 = vunpack.c.h.b16 %v373
    %v1296 = vunpack.c.l.b16 %v374
    %v1297 = vunpack.c.h.b16 %v374
    %v1298 = vunpack.c.l.b16 %v375
    %v1299 = vunpack.c.h.b16 %v375
    %v1300 = vunpack.c.l.b16 %v376
    %v1301 = vunpack.c.h.b16 %v376
    %v1302 = vunpack.c.l.b16 %v377
    %v1303 = vunpack.c.h.b16 %v377
    %v1304 = vunpack.c.l.b16 %v378
    %v1305 = vunpack.c.h.b16 %v378
    %v1306 = vunpack.c.l.b16 %v379
    %v1307 = vunpack.c.h.b16 %v379
    %v1308 = vunpack.c.l.b16 %v380
    %v1309 = vunpack.c.h.b16 %v380
    %v1310 = vunpack.c.l.b16 %v381
    %v1311 = vunpack.c.h.b16 %v381
    %v1312 = vunpack.c.l.b16 %v382
    %v1313 = vunpack.c.h.b16 %v382
    %v1314 = vunpack.c.l.b16 %v383
    %v1315 = vunpack.c.h.b16 %v383
    %v1316 = vunpack.c.l.b16 %v384
    %v1317 = vunpack.c.h.b16 %v384
    %v1318 = vunpack.c.l.b16 %v385
    %v1319 = vunpack.c.h.b16 %v385
    %v1320 = vunpack.c.l.b16 %v386
    %v1321 = vunpack.c.h.b16 %v386
    %v1322 = vunpack.c.l.b16 %v387
    %v1323 = vunpack.c.h.b16 %v387
    %v1324 = vunpack.c.l.b16 %v388
    %v1325 = vunpack.c.h.b16 %v388
    %v1326 = vunpack.c.l.b16 %v389
    %v1327 = vunpack.c.h.b16 %v389
    %v1328 = vunpack.c.l.b16 %v390
    %v1329 = vunpack.c.h.b16 %v390
    %v1330 = vunpack.c.l.b16 %v391
    %v1331 = vunpack.c.h.b16 %v391
    %v1332 = vunpack.c.l.b16 %v392
    %v1333 = vunpack.c.h.b16 %v392
    %v1334 = vunpack.c.l.b16 %v393
    %v1335 = vunpack.c.h.b16 %v393
    %v1336 = vunpack.c.l.b16 %v394
    %v1337 = vunpack.c.h.b16 %v394
    %v1338 = vunpack.c.l.b16 %v395
    %v1339 = vunpack.c.h.b16 %v395
    %v1340 = vunpack.c.l.b16 %v396
    %v1341 = vunpack.c.h.b16 %v396
    %v1342 = vunpack.c.l.b16 %v397
    %v1343 = vunpack.c.h.b16 %v397
    %v1344 = vunpack.c.l.b16 %v398
    %v1345 = vunpack.c.h.b16 %v398
    %v1346 = vunpack.c.l.b16 %v399
    %v1347 = vunpack.c.h.b16 %v399
    %v1348 = vunpack.c.l.b16 %v400
    %v1349 = vunpack.c.h.b16 %v400
    %v1350 = vunpack.c.l.b16 %v401
    %v1351 = vunpack.c.h.b16 %v401
    %v1352 = vunpack.c.l.b16 %v402
    %v1353 = vunpack.c.h.b16 %v402
    %v1354 = vunpack.c.l.b16 %v403
    %v1355 = vunpack.c.h.b16 %v403
    %v1356 = vunpack.c.l.b16 %v404
    %v1357 = vunpack.c.h.b16 %v404
    %v1358 = vunpack.c.l.b16 %v405
    %v1359 = vunpack.c.h.b16 %v405
    %v1360 = vunpack.c.l.b16 %v406
    %v1361 = vunpack.c.h.b16 %v406
    %v1362 = vunpack.c.l.b16 %v407
    %v1363 = vunpack.c.h.b16 %v407
    %v1364 = vunpack.c.l.b16 %v408
    %v1365 = vunpack.c.h.b16 %v408
    %v1366 = vunpack.c.l.b16 %v409
    %v1367 = vunpack.c.h.b16 %v409
    %v1368 = vunpack.c.l.b16 %v410
    %v1369 = vunpack.c.h.b16 %v410
    %v1370 = vunpack.c.l.b16 %v411
    %v1371 = vunpack.c.h.b16 %v411
    %v1372 = vunpack.c.l.b16 %v412
    %v1373 = vunpack.c.h.b16 %v412
    %v1374 = vunpack.c.l.b16 %v413
    %v1375 = vunpack.c.h.b16 %v413
    %v1376 = vunpack.c.l.b16 %v414
    %v1377 = vunpack.c.h.b16 %v414
    %v1378 = vunpack.c.l.b16 %v415
    %v1379 = vunpack.c.h.b16 %v415
    %v1380 = vunpack.c.l.b16 %v416
    %v1381 = vunpack.c.h.b16 %v416
    %v1382 = vunpack.c.l.b16 %v417
    %v1383 = vunpack.c.h.b16 %v417
    %v1384 = vunpack.c.l.b16 %v418
    %v1385 = vunpack.c.h.b16 %v418
    %v1386 = vunpack.c.l.b16 %v419
    %v1387 = vunpack.c.h.b16 %v419
    %v1388 = vunpack.c.l.b16 %v420
    %v1389 = vunpack.c.h.b16 %v420
    %v1390 = vunpack.c.l.b16 %v421
    %v1391 = vunpack.c.h.b16 %v421
    %v1392 = vunpack.c.l.b16 %v422
    %v1393 = vunpack.c.h.b16 %v422
    %v1394 = vunpack.c.l.b16 %v423
    %v1395 = vunpack.c.h.b16 %v423
    %v1396 = vunpack.c.l.b16 %v424
    %v1397 = vunpack.c.h.b16 %v424
    %v1398 = vunpack.c.l.b16 %v425
    %v1399 = vunpack.c.h.b16 %v425
    %v1400 = vunpack.c.l.b16 %v426
    %v1401 = vunpack.c.h.b16 %v426
    %v1402 = vunpack.c.l.b16 %v427
    %v1403 = vunpack.c.h.b16 %v427
    %v1404 = vunpack.c.l.b16 %v428
    %v1405 = vunpack.c.h.b16 %v428
    %v1406 = vunpack.c.l.b16 %v429
    %v1407 = vunpack.c.h.b16 %v429
    %v1408 = vunpack.c.l.b16 %v430
    %v1409 = vunpack.c.h.b16 %v430
    %v1410 = vunpack.c.l.b16 %v431
    %v1411 = vunpack.c.h.b16 %v431
    %v1412 = vunpack.c.l.b16 %v432
    %v1413 = vunpack.c.h.b16 %v432
    %v1414 = vunpack.c.l.b16 %v433
    %v1415 = vunpack.c.h.b16 %v433
    %v1416 = vunpack.c.l.b16 %v434
    %v1417 = vunpack.c.h.b16 %v434
    %v1418 = vunpack.c.l.b16 %v435
    %v1419 = vunpack.c.h.b16 %v435
    %v1420 = vunpack.c.l.b16 %v436
    %v1421 = vunpack.c.h.b16 %v436
    %v1422 = vunpack.c.l.b16 %v437
    %v1423 = vunpack.c.h.b16 %v437
    %v1424 = vunpack.c.l.b16 %v438
    %v1425 = vunpack.c.h.b16 %v438
    %v1426 = vunpack.c.l.b16 %v439
    %v1427 = vunpack.c.h.b16 %v439
    %v1428 = vunpack.c.l.b16 %v440
    %v1429 = vunpack.c.h.b16 %v440
    %v1430 = vunpack.c.l.b16 %v441
    %v1431 = vunpack.c.h.b16 %v441
    %v1432 = vunpack.c.l.b16 %v442
    %v1433 = vunpack.c.h.b16 %v442
    %v1434 = vunpack.c.l.b16 %v443
    %v1435 = vunpack.c.h.b16 %v443
    %v1436 = vunpack.c.l.b16 %v444
    %v1437 = vunpack.c.h.b16 %v444
    %v1438 = vunpack.c.l.b16 %v445
    %v1439 = vunpack.c.h.b16 %v445
    %v1440 = vunpack.c.l.b16 %v446
    %v1441 = vunpack.c.h.b16 %v446
    %v1442 = vunpack.c.l.b16 %v447
    %v1443 = vunpack.c.h.b16 %v447
    %v1444 = vunpack.c.l.b16 %v448
    %v1445 = vunpack.c.h.b16 %v448
    %v1446 = vunpack.c.l.b16 %v449
    %v1447 = vunpack.c.h.b16 %v449
    %v1448 = vunpack.c.l.b16 %v450
    %v1449 = vunpack.c.h.b16 %v450
    %v1450 = vunpack.c.l.b16 %v451
    %v1451 = vunpack.c.h.b16 %v451
    %v1452 = vunpack.c.l.b16 %v452
    %v1453 = vunpack.c.h.b16 %v452
    %v1454 = vunpack.c.l.b16 %v453
    %v1455 = vunpack.c.h.b16 %v453
    %v1456 = vunpack.c.l.b16 %v454
    %v1457 = vunpack.c.h.b16 %v454
    %v1458 = vunpack.c.l.b16 %v455
    %v1459 = vunpack.c.h.b16 %v455
    %v1460 = vunpack.c.l.b16 %v456
    %v1461 = vunpack.c.h.b16 %v456
    %v1462 = vunpack.c.l.b16 %v457
    %v1463 = vunpack.c.h.b16 %v457
    %v1464 = vunpack.c.l.b16 %v458
    %v1465 = vunpack.c.h.b16 %v458
    %v1466 = vunpack.c.l.b16 %v459
    %v1467 = vunpack.c.h.b16 %v459
    %v1468 = vunpack.c.l.b16 %v460
    %v1469 = vunpack.c.h.b16 %v460
    %v1470 = vunpack.c.l.b16 %v461
    %v1471 = vunpack.c.h.b16 %v461
    %v1472 = vunpack.c.l.b16 %v462
    %v1473 = vunpack.c.h.b16 %v462
    %v1474 = vunpack.c.l.b16 %v463
    %v1475 = vunpack.c.h.b16 %v463
    %v1476 = vunpack.c.l.b16 %v464
    %v1477 = vunpack.c.h.b16 %v464
    %v1478 = vunpack.c.l.b16 %v465
    %v1479 = vunpack.c.h.b16 %v465
    %v1480 = vunpack.c.l.b16 %v466
    %v1481 = vunpack.c.h.b16 %v466
    %v1482 = vunpack.c.l.b16 %v467
    %v1483 = vunpack.c.h.b16 %v467
    %v1484 = vunpack.c.l.b16 %v468
    %v1485 = vunpack.c.h.b16 %v468
    %v1486 = vunpack.c.l.b16 %v469
    %v1487 = vunpack.c.h.b16 %v469
    %v1488 = vunpack.c.l.b16 %v470
    %v1489 = vunpack.c.h.b16 %v470
    %v1490 = vunpack.c.l.b16 %v471
    %v1491 = vunpack.c.h.b16 %v471
    %v1492 = vpack.c.b16 %v860, %v852
    %v1493 = vpack.c.b16 %v861, %v853
    %v1494 = vpack.c.b16 %v862, %v854
    %v1495 = vpack.c.b16 %v863, %v855
    %v1496 = vpack.c.b16 %v864, %v856
    %v1497 = vpack.c.b16 %v865, %v857
    %v1498 = vpack.c.b16 %v866, %v858
    %v1499 = vpack.c.b16 %v867, %v859
    %v1500 = vpack.c.b16 %v876, %v868
    %v1501 = vpack.c.b16 %v877, %v869
    %v1502 = vpack.c.b16 %v878, %v870
    %v1503 = vpack.c.b16 %v879, %v871
    %v1504 = vpack.c.b16 %v880, %v872
    %v1505 = vpack.c.b16 %v881, %v873
    %v1506 = vpack.c.b16 %v882, %v874
    %v1507 = vpack.c.b16 %v883, %v875
    %v1508 = vpack.c.b16 %v892, %v884
    %v1509 = vpack.c.b16 %v893, %v885
    %v1510 = vpack.c.b16 %v894, %v886
    %v1511 = vpack.c.b16 %v895, %v887
    %v1512 = vpack.c.b16 %v896, %v888
    %v1513 = vpack.c.b16 %v897, %v889
    %v1514 = vpack.c.b16 %v898, %v890
    %v1515 = vpack.c.b16 %v899, %v891
    %v1516 = vpack.c.b16 %v908, %v900
    %v1517 = vpack.c.b16 %v909, %v901
    %v1518 = vpack.c.b16 %v910, %v902
    %v1519 = vpack.c.b16 %v911, %v903
    %v1520 = vpack.c.b16 %v912, %v904
    %v1521 = vpack.c.b16 %v913, %v905
    %v1522 = vpack.c.b16 %v914, %v906
    %v1523 = vpack.c.b16 %v915, %v907
    %v1524 = vpack.c.b16 %v924, %v916
    %v1525 = vpack.c.b16 %v925, %v917
    %v1526 = vpack.c.b16 %v926, %v918
    %v1527 = vpack.c.b16 %v927, %v919
    %v1528 = vpack.c.b16 %v928, %v920
    %v1529 = vpack.c.b16 %v929, %v921
    %v1530 = vpack.c.b16 %v930, %v922
    %v1531 = vpack.c.b16 %v931, %v923
    %v1532 = vpack.c.b16 %v940, %v932
    %v1533 = vpack.c.b16 %v941, %v933
    %v1534 = vpack.c.b16 %v942, %v934
    %v1535 = vpack.c.b16 %v943, %v935
    %v1536 = vpack.c.b16 %v944, %v936
    %v1537 = vpack.c.b16 %v945, %v937
    %v1538 = vpack.c.b16 %v946, %v938
    %v1539 = vpack.c.b16 %v947, %v939
    %v1540 = vpack.c.b16 %v956, %v948
    %v1541 = vpack.c.b16 %v957, %v949
    %v1542 = vpack.c.b16 %v958, %v950
    %v1543 = vpack.c.b16 %v959, %v951
    %v1544 = vpack.c.b16 %v960, %v952
    %v1545 = vpack.c.b16 %v961, %v953
    %v1546 = vpack.c.b16 %v962, %v954
    %v1547 = vpack.c.b16 %v963, %v955
    %v1548 = vpack.c.b16 %v972, %v964
    %v1549 = vpack.c.b16 %v973, %v965
    %v1550 = vpack.c.b16 %v974, %v966
    %v1551 = vpack.c.b16 %v975, %v967
    %v1552 = vpack.c.b16 %v976, %v968
    %v1553 = vpack.c.b16 %v977, %v969
    %v1554 = vpack.c.b16 %v978, %v970
    %v1555 = vpack.c.b16 %v979, %v971
    %v1556 = vpack.c.b16 %v988, %v980
    %v1557 = vpack.c.b16 %v989, %v981
    %v1558 = vpack.c.b16 %v990, %v982
    %v1559 = vpack.c.b16 %v991, %v983
    %v1560 = vpack.c.b16 %v992, %v984
    %v1561 = vpack.c.b16 %v993, %v985
    %v1562 = vpack.c.b16 %v994, %v986
    %v1563 = vpack.c.b16 %v995, %v987
    %v1564 = vpack.c.b16 %v1004, %v996
    %v1565 = vpack.c.b16 %v1005, %v997
    %v1566 = vpack.c.b16 %v1006, %v998
    %v1567 = vpack.c.b16 %v1007, %v999
    %v1568 = vpack.c.b16 %v1008, %v1000
    %v1569 = vpack.c.b16 %v1009, %v1001
    %v1570 = vpack.c.b16 %v1010, %v1002
    %v1571 = vpack.c.b16 %v1011, %v1003
    %v1572 = vpack.c.b16 %v1020, %v1012
    %v1573 = vpack.c.b16 %v1021, %v1013
    %v1574 = vpack.c.b16 %v1022, %v1014
    %v1575 = vpack.c.b16 %v1023, %v1015
    %v1576 = vpack.c.b16 %v1024, %v1016
    %v1577 = vpack.c.b16 %v1025, %v1017
    %v1578 = vpack.c.b16 %v1026, %v1018
    %v1579 = vpack.c.b16 %v1027, %v1019
    %v1580 = vpack.c.b16 %v1036, %v1028
    %v1581 = vpack.c.b16 %v1037, %v1029
    %v1582 = vpack.c.b16 %v1038, %v1030
    %v1583 = vpack.c.b16 %v1039, %v1031
    %v1584 = vpack.c.b16 %v1040, %v1032
    %v1585 = vpack.c.b16 %v1041, %v1033
    %v1586 = vpack.c.b16 %v1042, %v1034
    %v1587 = vpack.c.b16 %v1043, %v1035
    %v1588 = vpack.c.b16 %v1052, %v1044
    %v1589 = vpack.c.b16 %v1053, %v1045
    %v1590 = vpack.c.b16 %v1054, %v1046
    %v1591 = vpack.c.b16 %v1055, %v1047
    %v1592 = vpack.c.b16 %v1056, %v1048
    %v1593 = vpack.c.b16 %v1057, %v1049
    %v1594 = vpack.c.b16 %v1058, %v1050
    %v1595 = vpack.c.b16 %v1059, %v1051
    %v1596 = vpack.c.b16 %v1068, %v1060
    %v1597 = vpack.c.b16 %v1069, %v1061
    %v1598 = vpack.c.b16 %v1070, %v1062
    %v1599 = vpack.c.b16 %v1071, %v1063
    %v1600 = vpack.c.b16 %v1072, %v1064
    %v1601 = vpack.c.b16 %v1073, %v1065
    %v1602 = vpack.c.b16 %v1074, %v1066
    %v1603 = vpack.c.b16 %v1075, %v1067
    %v1604 = vpack.c.b16 %v1084, %v1076
    %v1605 = vpack.c.b16 %v1085, %v1077
    %v1606 = vpack.c.b16 %v1086, %v1078
    %v1607 = vpack.c.b16 %v1087, %v1079
    %v1608 = vpack.c.b16 %v1088, %v1080
    %v1609 = vpack.c.b16 %v1089, %v1081
    %v1610 = vpack.c.b16 %v1090, %v1082
    %v1611 = vpack.c.b16 %v1091, %v1083
    %v1612 = vpack.c.b16 %v1100, %v1092
    %v1613 = vpack.c.b16 %v1101, %v1093
    %v1614 = vpack.c.b16 %v1102, %v1094
    %v1615 = vpack.c.b16 %v1103, %v1095
    %v1616 = vpack.c.b16 %v1104, %v1096
    %v1617 = vpack.c.b16 %v1105, %v1097
    %v1618 = vpack.c.b16 %v1106, %v1098
    %v1619 = vpack.c.b16 %v1107, %v1099
    %v1620 = vpack.c.b16 %v1116, %v1108
    %v1621 = vpack.c.b16 %v1117, %v1109
    %v1622 = vpack.c.b16 %v1118, %v1110
    %v1623 = vpack.c.b16 %v1119, %v1111
    %v1624 = vpack.c.b16 %v1120, %v1112
    %v1625 = vpack.c.b16 %v1121, %v1113
    %v1626 = vpack.c.b16 %v1122, %v1114
    %v1627 = vpack.c.b16 %v1123, %v1115
    %v1628 = vpack.c.b16 %v1132, %v1124
    %v1629 = vpack.c.b16 %v1133, %v1125
    %v1630 = vpack.c.b16 %v1134, %v1126
    %v1631 = vpack.c.b16 %v1135, %v1127
    %v1632 = vpack.c.b16 %v1136, %v1128
    %v1633 = vpack.c.b16 %v1137, %v1129
    %v1634 = vpack.c.b16 %v1138, %v1130
    %v1635 = vpack.c.b16 %v1139, %v1131
    %v1636 = vpack.c.b16 %v1148, %v1140
    %v1637 = vpack.c.b16 %v1149, %v1141
    %v1638 = vpack.c.b16 %v1150, %v1142
    %v1639 = vpack.c.b16 %v1151, %v1143
    %v1640 = vpack.c.b16 %v1152, %v1144
    %v1641 = vpack.c.b16 %v1153, %v1145
    %v1642 = vpack.c.b16 %v1154, %v1146
    %v1643 = vpack.c.b16 %v1155, %v1147
    %v1644 = vpack.c.b16 %v1164, %v1156
    %v1645 = vpack.c.b16 %v1165, %v1157
    %v1646 = vpack.c.b16 %v1166, %v1158
    %v1647 = vpack.c.b16 %v1167, %v1159
    %v1648 = vpack.c.b16 %v1168, %v1160
    %v1649 = vpack.c.b16 %v1169, %v1161
    %v1650 = vpack.c.b16 %v1170, %v1162
    %v1651 = vpack.c.b16 %v1171, %v1163
    %v1652 = vpack.c.b16 %v1180, %v1172
    %v1653 = vpack.c.b16 %v1181, %v1173
    %v1654 = vpack.c.b16 %v1182, %v1174
    %v1655 = vpack.c.b16 %v1183, %v1175
    %v1656 = vpack.c.b16 %v1184, %v1176
    %v1657 = vpack.c.b16 %v1185, %v1177
    %v1658 = vpack.c.b16 %v1186, %v1178
    %v1659 = vpack.c.b16 %v1187, %v1179
    %v1660 = vpack.c.b16 %v1196, %v1188
    %v1661 = vpack.c.b16 %v1197, %v1189
    %v1662 = vpack.c.b16 %v1198, %v1190
    %v1663 = vpack.c.b16 %v1199, %v1191
    %v1664 = vpack.c.b16 %v1200, %v1192
    %v1665 = vpack.c.b16 %v1201, %v1193
    %v1666 = vpack.c.b16 %v1202, %v1194
    %v1667 = vpack.c.b16 %v1203, %v1195
    %v1668 = vpack.c.b16 %v1212, %v1204
    %v1669 = vpack.c.b16 %v1213, %v1205
    %v1670 = vpack.c.b16 %v1214, %v1206
    %v1671 = vpack.c.b16 %v1215, %v1207
    %v1672 = vpack.c.b16 %v1216, %v1208
    %v1673 = vpack.c.b16 %v1217, %v1209
    %v1674 = vpack.c.b16 %v1218, %v1210
    %v1675 = vpack.c.b16 %v1219, %v1211
    %v1676 = vpack.c.b16 %v1228, %v1220
    %v1677 = vpack.c.b16 %v1229, %v1221
    %v1678 = vpack.c.b16 %v1230, %v1222
    %v1679 = vpack.c.b16 %v1231, %v1223
    %v1680 = vpack.c.b16 %v1232, %v1224
    %v1681 = vpack.c.b16 %v1233, %v1225
    %v1682 = vpack.c.b16 %v1234, %v1226
    %v1683 = vpack.c.b16 %v1235, %v1227
    %v1684 = vpack.c.b16 %v1244, %v1236
    %v1685 = vpack.c.b16 %v1245, %v1237
    %v1686 = vpack.c.b16 %v1246, %v1238
    %v1687 = vpack.c.b16 %v1247, %v1239
    %v1688 = vpack.c.b16 %v1248, %v1240
    %v1689 = vpack.c.b16 %v1249, %v1241
    %v1690 = vpack.c.b16 %v1250, %v1242
    %v1691 = vpack.c.b16 %v1251, %v1243
    %v1692 = vpack.c.b16 %v1260, %v1252
    %v1693 = vpack.c.b16 %v1261, %v1253
    %v1694 = vpack.c.b16 %v1262, %v1254
    %v1695 = vpack.c.b16 %v1263, %v1255
    %v1696 = vpack.c.b16 %v1264, %v1256
    %v1697 = vpack.c.b16 %v1265, %v1257
    %v1698 = vpack.c.b16 %v1266, %v1258
    %v1699 = vpack.c.b16 %v1267, %v1259
    %v1700 = vpack.c.b16 %v1276, %v1268
    %v1701 = vpack.c.b16 %v1277, %v1269
    %v1702 = vpack.c.b16 %v1278, %v1270
    %v1703 = vpack.c.b16 %v1279, %v1271
    %v1704 = vpack.c.b16 %v1280, %v1272
    %v1705 = vpack.c.b16 %v1281, %v1273
    %v1706 = vpack.c.b16 %v1282, %v1274
    %v1707 = vpack.c.b16 %v1283, %v1275
    %v1708 = vpack.c.b16 %v1292, %v1284
    %v1709 = vpack.c.b16 %v1293, %v1285
    %v1710 = vpack.c.b16 %v1294, %v1286
    %v1711 = vpack.c.b16 %v1295, %v1287
    %v1712 = vpack.c.b16 %v1296, %v1288
    %v1713 = vpack.c.b16 %v1297, %v1289
    %v1714 = vpack.c.b16 %v1298, %v1290
    %v1715 = vpack.c.b16 %v1299, %v1291
    %v1716 = vpack.c.b16 %v1308, %v1300
    %v1717 = vpack.c.b16 %v1309, %v1301
    %v1718 = vpack.c.b16 %v1310, %v1302
    %v1719 = vpack.c.b16 %v1311, %v1303
    %v1720 = vpack.c.b16 %v1312, %v1304
    %v1721 = vpack.c.b16 %v1313, %v1305
    %v1722 = vpack.c.b16 %v1314, %v1306
    %v1723 = vpack.c.b16 %v1315, %v1307
    %v1724 = vpack.c.b16 %v1324, %v1316
    %v1725 = vpack.c.b16 %v1325, %v1317
    %v1726 = vpack.c.b16 %v1326, %v1318
    %v1727 = vpack.c.b16 %v1327, %v1319
    %v1728 = vpack.c.b16 %v1328, %v1320
    %v1729 = vpack.c.b16 %v1329, %v1321
    %v1730 = vpack.c.b16 %v1330, %v1322
    %v1731 = vpack.c.b16 %v1331, %v1323
    %v1732 = vpack.c.b16 %v1340, %v1332
    %v1733 = vpack.c.b16 %v1341, %v1333
    %v1734 = vpack.c.b16 %v1342, %v1334
    %v1735 = vpack.c.b16 %v1343, %v1335
    %v1736 = vpack.c.b16 %v1344, %v1336
    %v1737 = vpack.c.b16 %v1345, %v1337
    %v1738 = vpack.c.b16 %v1346, %v1338
    %v1739 = vpack.c.b16 %v1347, %v1339
    %v1740 = vpack.c.b16 %v1356, %v1348
    %v1741 = vpack.c.b16 %v1357, %v1349
    %v1742 = vpack.c.b16 %v1358, %v1350
    %v1743 = vpack.c.b16 %v1359, %v1351
    %v1744 = vpack.c.b16 %v1360, %v1352
    %v1745 = vpack.c.b16 %v1361, %v1353
    %v1746 = vpack.c.b16 %v1362, %v1354
    %v1747 = vpack.c.b16 %v1363, %v1355
    %v1748 = vpack.c.b16 %v1372, %v1364
    %v1749 = vpack.c.b16 %v1373, %v1365
    %v1750 = vpack.c.b16 %v1374, %v1366
    %v1751 = vpack.c.b16 %v1375, %v1367
    %v1752 = vpack.c.b16 %v1376, %v1368
    %v1753 = vpack.c.b16 %v1377, %v1369
    %v1754 = vpack.c.b16 %v1378, %v1370
    %v1755 = vpack.c.b16 %v1379, %v1371
    %v1756 = vpack.c.b16 %v1388, %v1380
    %v1757 = vpack.c.b16 %v1389, %v1381
    %v1758 = vpack.c.b16 %v1390, %v1382
    %v1759 = vpack.c.b16 %v1391, %v1383
    %v1760 = vpack.c.b16 %v1392, %v1384
    %v1761 = vpack.c.b16 %v1393, %v1385
    %v1762 = vpack.c.b16 %v1394, %v1386
    %v1763 = vpack.c.b16 %v1395, %v1387
    %v1764 = vpack.c.b16 %v1404, %v1396
    %v1765 = vpack.c.b16 %v1405, %v1397
    %v1766 = vpack.c.b16 %v1406, %v1398
    %v1767 = vpack.c.b16 %v1407, %v1399
    %v1768 = vpack.c.b16 %v1408, %v1400
    %v1769 = vpack.c.b16 %v1409, %v1401
    %v1770 = vpack.c.b16 %v1410, %v1402
    %v1771 = vpack.c.b16 %v1411, %v1403
    %v1772 = vpack.c.b16 %v1420, %v1412
    %v1773 = vpack.c.b16 %v1421, %v1413
    %v1774 = vpack.c.b16 %v1422, %v1414
    %v1775 = vpack.c.b16 %v1423, %v1415
    %v1776 = vpack.c.b16 %v1424, %v1416
    %v1777 = vpack.c.b16 %v1425, %v1417
    %v1778 = vpack.c.b16 %v1426, %v1418
    %v1779 = vpack.c.b16 %v1427, %v1419
    %v1780 = vpack.c.b16 %v1436, %v1428
    %v1781 = vpack.c.b16 %v1437, %v1429
    %v1782 = vpack.c.b16 %v1438, %v1430
    %v1783 = vpack.c.b16 %v1439, %v1431
    %v1784 = vpack.c.b16 %v1440, %v1432
    %v1785 = vpack.c.b16 %v1441, %v1433
    %v1786 = vpack.c.b16 %v1442, %v1434
    %v1787 = vpack.c.b16 %v1443, %v1435
    %v1788 = vpack.c.b16 %v1452, %v1444
    %v1789 = vpack.c.b16 %v1453, %v1445
    %v1790 = vpack.c.b16 %v1454, %v1446
    %v1791 = vpack.c.b16 %v1455, %v1447
    %v1792 = vpack.c.b16 %v1456, %v1448
    %v1793 = vpack.c.b16 %v1457, %v1449
    %v1794 = vpack.c.b16 %v1458, %v1450
    %v1795 = vpack.c.b16 %v1459, %v1451
    %v1796 = vpack.c.b16 %v1468, %v1460
    %v1797 = vpack.c.b16 %v1469, %v1461
    %v1798 = vpack.c.b16 %v1470, %v1462
    %v1799 = vpack.c.b16 %v1471, %v1463
    %v1800 = vpack.c.b16 %v1472, %v1464
    %v1801 = vpack.c.b16 %v1473, %v1465
    %v1802 = vpack.c.b16 %v1474, %v1466
    %v1803 = vpack.c.b16 %v1475, %v1467
    %v1804 = vpack.c.b16 %v1484, %v1476
    %v1805 = vpack.c.b16 %v1485, %v1477
    %v1806 = vpack.c.b16 %v1486, %v1478
    %v1807 = vpack.c.b16 %v1487, %v1479
    %v1808 = vpack.c.b16 %v1488, %v1480
    %v1809 = vpack.c.b16 %v1489, %v1481
    %v1810 = vpack.c.b16 %v1490, %v1482
    %v1811 = vpack.c.b16 %v1491, %v1483
    %2132 = vmatprep.subr.bf16.mxu0 %v1493
    %2133 = vmatpush1.bf16.msra.mxu0 %v1492
    %2134 = vmatprep.subr.bf16.mxu0 %v1501
    %2135 = vmatpush1.bf16.msra.mxu0 %v1500
    %2136 = vmatprep.subr.bf16.mxu0 %v1509
    %2137 = vmatpush1.bf16.msra.mxu0 %v1508
    %2138 = vmatprep.subr.bf16.mxu0 %v1517
    %2139 = vmatpush1.bf16.msra.mxu0 %v1516
    %2140 = vmatprep.subr.bf16.mxu0 %v1525
    %2141 = vmatpush1.bf16.msra.mxu0 %v1524
    %2142 = vmatprep.subr.bf16.mxu0 %v1533
    %2143 = vmatpush1.bf16.msra.mxu0 %v1532
    %2144 = vmatprep.subr.bf16.mxu0 %v1541
    %2145 = vmatpush1.bf16.msra.mxu0 %v1540
    %2146 = vmatprep.subr.bf16.mxu0 %v1549
    %2147 = vmatpush1.bf16.msra.mxu0 %v1548
    %2148 = vmatprep.subr.bf16.mxu0 %v1557
    %2149 = vmatpush1.bf16.msra.mxu0 %v1556
    %2150 = vmatprep.subr.bf16.mxu0 %v1565
    %2151 = vmatpush1.bf16.msra.mxu0 %v1564
    %2152 = vmatprep.subr.bf16.mxu0 %v1573
    %2153 = vmatpush1.bf16.msra.mxu0 %v1572
    %2154 = vmatprep.subr.bf16.mxu0 %v1581
    %2155 = vmatpush1.bf16.msra.mxu0 %v1580
    %2156 = vmatprep.subr.bf16.mxu0 %v1589
    %2157 = vmatpush1.bf16.msra.mxu0 %v1588
    %2158 = vmatprep.subr.bf16.mxu0 %v1597
    %2159 = vmatpush1.bf16.msra.mxu0 %v1596
    %2160 = vmatprep.subr.bf16.mxu0 %v1605
    %2161 = vmatpush1.bf16.msra.mxu0 %v1604
    %2162 = vmatprep.subr.bf16.mxu0 %v1613
    %2163 = vmatpush1.bf16.msra.mxu0 %v1612
    %2164 = vmatprep.mubr.bf16.mxu0 %v523
    %2165 = vmatmul.mubr.bf16.gmra.mrb[0].mxu0 %v522
    %v2166 = vpop.f32.mrb[0].mxu0
    %v2167 = vadd.f32 %v477, %v2166
    %v2168 = vpop.f32.mrb[0].mxu0
    %v2169 = vadd.f32 %v481, %v2168
    %v2170 = vpop.f32.mrb[0].mxu0
    %v2171 = vpop.f32.mrb[0].mxu0
    %2172 = vdwg.mxu0
    %2173 = vmatprep.subr.bf16.mxu0 %v1621
    %2174 = vmatpush1.bf16.msra.mxu0 %v1620
    %2175 = vmatprep.subr.bf16.mxu0 %v1629
    %2176 = vmatpush1.bf16.msra.mxu0 %v1628
    %2177 = vmatprep.subr.bf16.mxu0 %v1637
    %2178 = vmatpush1.bf16.msra.mxu0 %v1636
    %2179 = vmatprep.subr.bf16.mxu0 %v1645
    %2180 = vmatpush1.bf16.msra.mxu0 %v1644
    %2181 = vmatprep.subr.bf16.mxu0 %v1653
    %2182 = vmatpush1.bf16.msra.mxu0 %v1652
    %2183 = vmatprep.subr.bf16.mxu0 %v1661
    %2184 = vmatpush1.bf16.msra.mxu0 %v1660
    %2185 = vmatprep.subr.bf16.mxu0 %v1669
    %2186 = vmatpush1.bf16.msra.mxu0 %v1668
    %2187 = vmatprep.subr.bf16.mxu0 %v1677
    %2188 = vmatpush1.bf16.msra.mxu0 %v1676
    %2189 = vmatprep.subr.bf16.mxu0 %v1685
    %2190 = vmatpush1.bf16.msra.mxu0 %v1684
    %2191 = vmatprep.subr.bf16.mxu0 %v1693
    %2192 = vmatpush1.bf16.msra.mxu0 %v1692
    %2193 = vmatprep.subr.bf16.mxu0 %v1701
    %2194 = vmatpush1.bf16.msra.mxu0 %v1700
    %2195 = vmatprep.subr.bf16.mxu0 %v1709
    %2196 = vmatpush1.bf16.msra.mxu0 %v1708
    %2197 = vmatprep.subr.bf16.mxu0 %v1717
    %2198 = vmatpush1.bf16.msra.mxu0 %v1716
    %2199 = vmatprep.subr.bf16.mxu0 %v1725
    %2200 = vmatpush1.bf16.msra.mxu0 %v1724
    %2201 = vmatprep.subr.bf16.mxu0 %v1733
    %2202 = vmatpush1.bf16.msra.mxu0 %v1732
    %2203 = vmatprep.subr.bf16.mxu0 %v1741
    %2204 = vmatpush1.bf16.msra.mxu0 %v1740
    %2205 = vmatprep.mubr.bf16.mxu0 %v525
    %2206 = vmatmul.mubr.bf16.gmra.mrb[0].mxu0 %v524
    %v2207 = vpop.f32.mrb[0].mxu0
    %v2208 = vadd.f32 %v2167, %v2207
    %v2209 = vpop.f32.mrb[0].mxu0
    %v2210 = vadd.f32 %v2169, %v2209
    %v2211 = vpop.f32.mrb[0].mxu0
    %v2212 = vpop.f32.mrb[0].mxu0
    %2213 = vdwg.mxu0
    %2214 = vmatprep.subr.bf16.mxu0 %v1749
    %2215 = vmatpush1.bf16.msra.mxu0 %v1748
    %2216 = vmatprep.subr.bf16.mxu0 %v1757
    %2217 = vmatpush1.bf16.msra.mxu0 %v1756
    %2218 = vmatprep.subr.bf16.mxu0 %v1765
    %2219 = vmatpush1.bf16.msra.mxu0 %v1764
    %2220 = vmatprep.subr.bf16.mxu0 %v1773
    %2221 = vmatpush1.bf16.msra.mxu0 %v1772
    %2222 = vmatprep.subr.bf16.mxu0 %v1781
    %2223 = vmatpush1.bf16.msra.mxu0 %v1780
    %2224 = vmatprep.subr.bf16.mxu0 %v1789
    %2225 = vmatpush1.bf16.msra.mxu0 %v1788
    %2226 = vmatprep.subr.bf16.mxu0 %v1797
    %2227 = vmatpush1.bf16.msra.mxu0 %v1796
    %2228 = vmatprep.subr.bf16.mxu0 %v1805
    %2229 = vmatpush1.bf16.msra.mxu0 %v1804
    %2230 = vmatprep.subr.bf16.mxu0 0
    %2231 = vmatpush1.bf16.msra.mxu0 0
    %2232 = vmatprep.subr.bf16.mxu0 0
    %2233 = vmatpush1.bf16.msra.mxu0 0
    %2234 = vmatprep.subr.bf16.mxu0 0
    %2235 = vmatpush1.bf16.msra.mxu0 0
    %2236 = vmatprep.subr.bf16.mxu0 0
    %2237 = vmatpush1.bf16.msra.mxu0 0
    %2238 = vmatprep.subr.bf16.mxu0 0
    %2239 = vmatpush1.bf16.msra.mxu0 0
    %2240 = vmatprep.subr.bf16.mxu0 0
    %2241 = vmatpush1.bf16.msra.mxu0 0
    %2242 = vmatprep.subr.bf16.mxu0 0
    %2243 = vmatpush1.bf16.msra.mxu0 0
    %2244 = vmatprep.subr.bf16.mxu0 0
    %2245 = vmatpush1.bf16.msra.mxu0 0
    %2246 = vmatprep.mubr.bf16.mxu0 0
    %2247 = vmatmul.mubr.bf16.gmra.mrb[0].mxu0 %v526
    %v2248 = vpop.f32.mrb[0].mxu0
    %v2249 = vadd.f32 %v2208, %v2248
    %v2250 = vpop.f32.mrb[0].mxu0
    %v2251 = vadd.f32 %v2210, %v2250
    %v2252 = vpop.f32.mrb[0].mxu0
    %v2253 = vpop.f32.mrb[0].mxu0
    %2254 = vdwg.mxu0
    %2255 = vmatprep.subr.bf16.mxu0 %v1495
    %2256 = vmatpush1.bf16.msra.mxu0 %v1494
    %2257 = vmatprep.subr.bf16.mxu0 %v1503
    %2258 = vmatpush1.bf16.msra.mxu0 %v1502
    %2259 = vmatprep.subr.bf16.mxu0 %v1511
    %2260 = vmatpush1.bf16.msra.mxu0 %v1510
    %2261 = vmatprep.subr.bf16.mxu0 %v1519
    %2262 = vmatpush1.bf16.msra.mxu0 %v1518
    %2263 = vmatprep.subr.bf16.mxu0 %v1527
    %2264 = vmatpush1.bf16.msra.mxu0 %v1526
    %2265 = vmatprep.subr.bf16.mxu0 %v1535
    %2266 = vmatpush1.bf16.msra.mxu0 %v1534
    %2267 = vmatprep.subr.bf16.mxu0 %v1543
    %2268 = vmatpush1.bf16.msra.mxu0 %v1542
    %2269 = vmatprep.subr.bf16.mxu0 %v1551
    %2270 = vmatpush1.bf16.msra.mxu0 %v1550
    %2271 = vmatprep.subr.bf16.mxu0 %v1559
    %2272 = vmatpush1.bf16.msra.mxu0 %v1558
    %2273 = vmatprep.subr.bf16.mxu0 %v1567
    %2274 = vmatpush1.bf16.msra.mxu0 %v1566
    %2275 = vmatprep.subr.bf16.mxu0 %v1575
    %2276 = vmatpush1.bf16.msra.mxu0 %v1574
    %2277 = vmatprep.subr.bf16.mxu0 %v1583
    %2278 = vmatpush1.bf16.msra.mxu0 %v1582
    %2279 = vmatprep.subr.bf16.mxu0 %v1591
    %2280 = vmatpush1.bf16.msra.mxu0 %v1590
    %2281 = vmatprep.subr.bf16.mxu0 %v1599
    %2282 = vmatpush1.bf16.msra.mxu0 %v1598
    %2283 = vmatprep.subr.bf16.mxu0 %v1607
    %2284 = vmatpush1.bf16.msra.mxu0 %v1606
    %2285 = vmatprep.subr.bf16.mxu0 %v1615
    %2286 = vmatpush1.bf16.msra.mxu0 %v1614
    %2287 = vmatprep.mubr.bf16.mxu0 %v523
    %2288 = vmatmul.mubr.bf16.gmra.mrb[0].mxu0 %v522
    %v2289 = vpop.f32.mrb[0].mxu0
    %v2290 = vadd.f32 %v485, %v2289
    %v2291 = vpop.f32.mrb[0].mxu0
    %v2292 = vadd.f32 %v489, %v2291
    %v2293 = vpop.f32.mrb[0].mxu0
    %v2294 = vpop.f32.mrb[0].mxu0
    %2295 = vdwg.mxu0
    %2296 = vmatprep.subr.bf16.mxu0 %v1623
    %2297 = vmatpush1.bf16.msra.mxu0 %v1622
    %2298 = vmatprep.subr.bf16.mxu0 %v1631
    %2299 = vmatpush1.bf16.msra.mxu0 %v1630
    %2300 = vmatprep.subr.bf16.mxu0 %v1639
    %2301 = vmatpush1.bf16.msra.mxu0 %v1638
    %2302 = vmatprep.subr.bf16.mxu0 %v1647
    %2303 = vmatpush1.bf16.msra.mxu0 %v1646
    %2304 = vmatprep.subr.bf16.mxu0 %v1655
    %2305 = vmatpush1.bf16.msra.mxu0 %v1654
    %2306 = vmatprep.subr.bf16.mxu0 %v1663
    %2307 = vmatpush1.bf16.msra.mxu0 %v1662
    %2308 = vmatprep.subr.bf16.mxu0 %v1671
    %2309 = vmatpush1.bf16.msra.mxu0 %v1670
    %2310 = vmatprep.subr.bf16.mxu0 %v1679
    %2311 = vmatpush1.bf16.msra.mxu0 %v1678
    %2312 = vmatprep.subr.bf16.mxu0 %v1687
    %2313 = vmatpush1.bf16.msra.mxu0 %v1686
    %2314 = vmatprep.subr.bf16.mxu0 %v1695
    %2315 = vmatpush1.bf16.msra.mxu0 %v1694
    %2316 = vmatprep.subr.bf16.mxu0 %v1703
    %2317 = vmatpush1.bf16.msra.mxu0 %v1702
    %2318 = vmatprep.subr.bf16.mxu0 %v1711
    %2319 = vmatpush1.bf16.msra.mxu0 %v1710
    %2320 = vmatprep.subr.bf16.mxu0 %v1719
    %2321 = vmatpush1.bf16.msra.mxu0 %v1718
    %2322 = vmatprep.subr.bf16.mxu0 %v1727
    %2323 = vmatpush1.bf16.msra.mxu0 %v1726
    %2324 = vmatprep.subr.bf16.mxu0 %v1735
    %2325 = vmatpush1.bf16.msra.mxu0 %v1734
    %2326 = vmatprep.subr.bf16.mxu0 %v1743
    %2327 = vmatpush1.bf16.msra.mxu0 %v1742
    %2328 = vmatprep.mubr.bf16.mxu0 %v525
    %2329 = vmatmul.mubr.bf16.gmra.mrb[0].mxu0 %v524
    %v2330 = vpop.f32.mrb[0].mxu0
    %v2331 = vadd.f32 %v2290, %v2330
    %v2332 = vpop.f32.mrb[0].mxu0
    %v2333 = vadd.f32 %v2292, %v2332
    %v2334 = vpop.f32.mrb[0].mxu0
    %v2335 = vpop.f32.mrb[0].mxu0
    %2336 = vdwg.mxu0
    %2337 = vmatprep.subr.bf16.mxu0 %v1751
    %2338 = vmatpush1.bf16.msra.mxu0 %v1750
    %2339 = vmatprep.subr.bf16.mxu0 %v1759
    %2340 = vmatpush1.bf16.msra.mxu0 %v1758
    %2341 = vmatprep.subr.bf16.mxu0 %v1767
    %2342 = vmatpush1.bf16.msra.mxu0 %v1766
    %2343 = vmatprep.subr.bf16.mxu0 %v1775
    %2344 = vmatpush1.bf16.msra.mxu0 %v1774
    %2345 = vmatprep.subr.bf16.mxu0 %v1783
    %2346 = vmatpush1.bf16.msra.mxu0 %v1782
    %2347 = vmatprep.subr.bf16.mxu0 %v1791
    %2348 = vmatpush1.bf16.msra.mxu0 %v1790
    %2349 = vmatprep.subr.bf16.mxu0 %v1799
    %2350 = vmatpush1.bf16.msra.mxu0 %v1798
    %2351 = vmatprep.subr.bf16.mxu0 %v1807
    %2352 = vmatpush1.bf16.msra.mxu0 %v1806
    %2353 = vmatprep.subr.bf16.mxu0 0
    %2354 = vmatpush1.bf16.msra.mxu0 0
    %2355 = vmatprep.subr.bf16.mxu0 0
    %2356 = vmatpush1.bf16.msra.mxu0 0
    %2357 = vmatprep.subr.bf16.mxu0 0
    %2358 = vmatpush1.bf16.msra.mxu0 0
    %2359 = vmatprep.subr.bf16.mxu0 0
    %2360 = vmatpush1.bf16.msra.mxu0 0
    %2361 = vmatprep.subr.bf16.mxu0 0
    %2362 = vmatpush1.bf16.msra.mxu0 0
    %2363 = vmatprep.subr.bf16.mxu0 0
    %2364 = vmatpush1.bf16.msra.mxu0 0
    %2365 = vmatprep.subr.bf16.mxu0 0
    %2366 = vmatpush1.bf16.msra.mxu0 0
    %2367 = vmatprep.subr.bf16.mxu0 0
    %2368 = vmatpush1.bf16.msra.mxu0 0
    %2369 = vmatprep.mubr.bf16.mxu0 0
    %2370 = vmatmul.mubr.bf16.gmra.mrb[0].mxu0 %v526
    %v2371 = vpop.f32.mrb[0].mxu0
    %v2372 = vadd.f32 %v2331, %v2371
    %v2373 = vpop.f32.mrb[0].mxu0
    %v2374 = vadd.f32 %v2333, %v2373
    %v2375 = vpop.f32.mrb[0].mxu0
    %v2376 = vpop.f32.mrb[0].mxu0
    %2377 = vdwg.mxu0
    %2378 = vmatprep.subr.bf16.mxu0 %v1497
    %2379 = vmatpush1.bf16.msra.mxu0 %v1496
    %2380 = vmatprep.subr.bf16.mxu0 %v1505
    %2381 = vmatpush1.bf16.msra.mxu0 %v1504
    %2382 = vmatprep.subr.bf16.mxu0 %v1513
    %2383 = vmatpush1.bf16.msra.mxu0 %v1512
    %2384 = vmatprep.subr.bf16.mxu0 %v1521
    %2385 = vmatpush1.bf16.msra.mxu0 %v1520
    %2386 = vmatprep.subr.bf16.mxu0 %v1529
    %2387 = vmatpush1.bf16.msra.mxu0 %v1528
    %2388 = vmatprep.subr.bf16.mxu0 %v1537
    %2389 = vmatpush1.bf16.msra.mxu0 %v1536
    %2390 = vmatprep.subr.bf16.mxu0 %v1545
    %2391 = vmatpush1.bf16.msra.mxu0 %v1544
    %2392 = vmatprep.subr.bf16.mxu0 %v1553
    %2393 = vmatpush1.bf16.msra.mxu0 %v1552
    %2394 = vmatprep.subr.bf16.mxu0 %v1561
    %2395 = vmatpush1.bf16.msra.mxu0 %v1560
    %2396 = vmatprep.subr.bf16.mxu0 %v1569
    %2397 = vmatpush1.bf16.msra.mxu0 %v1568
    %2398 = vmatprep.subr.bf16.mxu0 %v1577
    %2399 = vmatpush1.bf16.msra.mxu0 %v1576
    %2400 = vmatprep.subr.bf16.mxu0 %v1585
    %2401 = vmatpush1.bf16.msra.mxu0 %v1584
    %2402 = vmatprep.subr.bf16.mxu0 %v1593
    %2403 = vmatpush1.bf16.msra.mxu0 %v1592
    %2404 = vmatprep.subr.bf16.mxu0 %v1601
    %2405 = vmatpush1.bf16.msra.mxu0 %v1600
    %2406 = vmatprep.subr.bf16.mxu0 %v1609
    %2407 = vmatpush1.bf16.msra.mxu0 %v1608
    %2408 = vmatprep.subr.bf16.mxu0 %v1617
    %2409 = vmatpush1.bf16.msra.mxu0 %v1616
    %2410 = vmatprep.mubr.bf16.mxu0 %v523
    %2411 = vmatmul.mubr.bf16.gmra.mrb[0].mxu0 %v522
    %v2412 = vpop.f32.mrb[0].mxu0
    %v2413 = vadd.f32 %v493, %v2412
    %v2414 = vpop.f32.mrb[0].mxu0
    %v2415 = vadd.f32 %v497, %v2414
    %v2416 = vpop.f32.mrb[0].mxu0
    %v2417 = vpop.f32.mrb[0].mxu0
    %2418 = vdwg.mxu0
    %2419 = vmatprep.subr.bf16.mxu0 %v1625
    %2420 = vmatpush1.bf16.msra.mxu0 %v1624
    %2421 = vmatprep.subr.bf16.mxu0 %v1633
    %2422 = vmatpush1.bf16.msra.mxu0 %v1632
    %2423 = vmatprep.subr.bf16.mxu0 %v1641
    %2424 = vmatpush1.bf16.msra.mxu0 %v1640
    %2425 = vmatprep.subr.bf16.mxu0 %v1649
    %2426 = vmatpush1.bf16.msra.mxu0 %v1648
    %2427 = vmatprep.subr.bf16.mxu0 %v1657
    %2428 = vmatpush1.bf16.msra.mxu0 %v1656
    %2429 = vmatprep.subr.bf16.mxu0 %v1665
    %2430 = vmatpush1.bf16.msra.mxu0 %v1664
    %2431 = vmatprep.subr.bf16.mxu0 %v1673
    %2432 = vmatpush1.bf16.msra.mxu0 %v1672
    %2433 = vmatprep.subr.bf16.mxu0 %v1681
    %2434 = vmatpush1.bf16.msra.mxu0 %v1680
    %2435 = vmatprep.subr.bf16.mxu0 %v1689
    %2436 = vmatpush1.bf16.msra.mxu0 %v1688
    %2437 = vmatprep.subr.bf16.mxu0 %v1697
    %2438 = vmatpush1.bf16.msra.mxu0 %v1696
    %2439 = vmatprep.subr.bf16.mxu0 %v1705
    %2440 = vmatpush1.bf16.msra.mxu0 %v1704
    %2441 = vmatprep.subr.bf16.mxu0 %v1713
    %2442 = vmatpush1.bf16.msra.mxu0 %v1712
    %2443 = vmatprep.subr.bf16.mxu0 %v1721
    %2444 = vmatpush1.bf16.msra.mxu0 %v1720
    %2445 = vmatprep.subr.bf16.mxu0 %v1729
    %2446 = vmatpush1.bf16.msra.mxu0 %v1728
    %2447 = vmatprep.subr.bf16.mxu0 %v1737
    %2448 = vmatpush1.bf16.msra.mxu0 %v1736
    %2449 = vmatprep.subr.bf16.mxu0 %v1745
    %2450 = vmatpush1.bf16.msra.mxu0 %v1744
    %2451 = vmatprep.mubr.bf16.mxu0 %v525
    %2452 = vmatmul.mubr.bf16.gmra.mrb[0].mxu0 %v524
    %v2453 = vpop.f32.mrb[0].mxu0
    %v2454 = vadd.f32 %v2413, %v2453
    %v2455 = vpop.f32.mrb[0].mxu0
    %v2456 = vadd.f32 %v2415, %v2455
    %v2457 = vpop.f32.mrb[0].mxu0
    %v2458 = vpop.f32.mrb[0].mxu0
    %2459 = vdwg.mxu0
    %2460 = vmatprep.subr.bf16.mxu0 %v1753
    %2461 = vmatpush1.bf16.msra.mxu0 %v1752
    %2462 = vmatprep.subr.bf16.mxu0 %v1761
    %2463 = vmatpush1.bf16.msra.mxu0 %v1760
    %2464 = vmatprep.subr.bf16.mxu0 %v1769
    %2465 = vmatpush1.bf16.msra.mxu0 %v1768
    %2466 = vmatprep.subr.bf16.mxu0 %v1777
    %2467 = vmatpush1.bf16.msra.mxu0 %v1776
    %2468 = vmatprep.subr.bf16.mxu0 %v1785
    %2469 = vmatpush1.bf16.msra.mxu0 %v1784
    %2470 = vmatprep.subr.bf16.mxu0 %v1793
    %2471 = vmatpush1.bf16.msra.mxu0 %v1792
    %2472 = vmatprep.subr.bf16.mxu0 %v1801
    %2473 = vmatpush1.bf16.msra.mxu0 %v1800
    %2474 = vmatprep.subr.bf16.mxu0 %v1809
    %2475 = vmatpush1.bf16.msra.mxu0 %v1808
    %2476 = vmatprep.subr.bf16.mxu0 0
    %2477 = vmatpush1.bf16.msra.mxu0 0
    %2478 = vmatprep.subr.bf16.mxu0 0
    %2479 = vmatpush1.bf16.msra.mxu0 0
    %2480 = vmatprep.subr.bf16.mxu0 0
    %2481 = vmatpush1.bf16.msra.mxu0 0
    %2482 = vmatprep.subr.bf16.mxu0 0
    %2483 = vmatpush1.bf16.msra.mxu0 0
    %2484 = vmatprep.subr.bf16.mxu0 0
    %2485 = vmatpush1.bf16.msra.mxu0 0
    %2486 = vmatprep.subr.bf16.mxu0 0
    %2487 = vmatpush1.bf16.msra.mxu0 0
    %2488 = vmatprep.subr.bf16.mxu0 0
    %2489 = vmatpush1.bf16.msra.mxu0 0
    %2490 = vmatprep.subr.bf16.mxu0 0
    %2491 = vmatpush1.bf16.msra.mxu0 0
    %2492 = vmatprep.mubr.bf16.mxu0 0
    %2493 = vmatmul.mubr.bf16.gmra.mrb[0].mxu0 %v526
    %v2494 = vpop.f32.mrb[0].mxu0
    %v2495 = vadd.f32 %v2454, %v2494
    %v2496 = vpop.f32.mrb[0].mxu0
    %v2497 = vadd.f32 %v2456, %v2496
    %v2498 = vpop.f32.mrb[0].mxu0
    %v2499 = vpop.f32.mrb[0].mxu0
    %2500 = vdwg.mxu0
    %2501 = vmatprep.subr.bf16.mxu0 %v1499
    %2502 = vmatpush1.bf16.msra.mxu0 %v1498
    %2503 = vmatprep.subr.bf16.mxu0 %v1507
    %2504 = vmatpush1.bf16.msra.mxu0 %v1506
    %2505 = vmatprep.subr.bf16.mxu0 %v1515
    %2506 = vmatpush1.bf16.msra.mxu0 %v1514
    %2507 = vmatprep.subr.bf16.mxu0 %v1523
    %2508 = vmatpush1.bf16.msra.mxu0 %v1522
    %2509 = vmatprep.subr.bf16.mxu0 %v1531
    %2510 = vmatpush1.bf16.msra.mxu0 %v1530
    %2511 = vmatprep.subr.bf16.mxu0 %v1539
    %2512 = vmatpush1.bf16.msra.mxu0 %v1538
    %2513 = vmatprep.subr.bf16.mxu0 %v1547
    %2514 = vmatpush1.bf16.msra.mxu0 %v1546
    %2515 = vmatprep.subr.bf16.mxu0 %v1555
    %2516 = vmatpush1.bf16.msra.mxu0 %v1554
    %2517 = vmatprep.subr.bf16.mxu0 %v1563
    %2518 = vmatpush1.bf16.msra.mxu0 %v1562
    %2519 = vmatprep.subr.bf16.mxu0 %v1571
    %2520 = vmatpush1.bf16.msra.mxu0 %v1570
    %2521 = vmatprep.subr.bf16.mxu0 %v1579
    %2522 = vmatpush1.bf16.msra.mxu0 %v1578
    %2523 = vmatprep.subr.bf16.mxu0 %v1587
    %2524 = vmatpush1.bf16.msra.mxu0 %v1586
    %2525 = vmatprep.subr.bf16.mxu0 %v1595
    %2526 = vmatpush1.bf16.msra.mxu0 %v1594
    %2527 = vmatprep.subr.bf16.mxu0 %v1603
    %2528 = vmatpush1.bf16.msra.mxu0 %v1602
    %2529 = vmatprep.subr.bf16.mxu0 %v1611
    %2530 = vmatpush1.bf16.msra.mxu0 %v1610
    %2531 = vmatprep.subr.bf16.mxu0 %v1619
    %2532 = vmatpush1.bf16.msra.mxu0 %v1618
    %2533 = vmatprep.mubr.bf16.mxu0 %v523
    %2534 = vmatmul.mubr.bf16.gmra.mrb[0].mxu0 %v522
    %v2535 = vpop.f32.mrb[0].mxu0
    %v2536 = vadd.f32 %v501, %v2535
    %v2537 = vpop.f32.mrb[0].mxu0
    %v2538 = vadd.f32 %v505, %v2537
    %v2539 = vpop.f32.mrb[0].mxu0
    %v2540 = vpop.f32.mrb[0].mxu0
    %2541 = vdwg.mxu0
    %2542 = vmatprep.subr.bf16.mxu0 %v1627
    %2543 = vmatpush1.bf16.msra.mxu0 %v1626
    %2544 = vmatprep.subr.bf16.mxu0 %v1635
    %2545 = vmatpush1.bf16.msra.mxu0 %v1634
    %2546 = vmatprep.subr.bf16.mxu0 %v1643
    %2547 = vmatpush1.bf16.msra.mxu0 %v1642
    %2548 = vmatprep.subr.bf16.mxu0 %v1651
    %2549 = vmatpush1.bf16.msra.mxu0 %v1650
    %2550 = vmatprep.subr.bf16.mxu0 %v1659
    %2551 = vmatpush1.bf16.msra.mxu0 %v1658
    %2552 = vmatprep.subr.bf16.mxu0 %v1667
    %2553 = vmatpush1.bf16.msra.mxu0 %v1666
    %2554 = vmatprep.subr.bf16.mxu0 %v1675
    %2555 = vmatpush1.bf16.msra.mxu0 %v1674
    %2556 = vmatprep.subr.bf16.mxu0 %v1683
    %2557 = vmatpush1.bf16.msra.mxu0 %v1682
    %2558 = vmatprep.subr.bf16.mxu0 %v1691
    %2559 = vmatpush1.bf16.msra.mxu0 %v1690
    %2560 = vmatprep.subr.bf16.mxu0 %v1699
    %2561 = vmatpush1.bf16.msra.mxu0 %v1698
    %2562 = vmatprep.subr.bf16.mxu0 %v1707
    %2563 = vmatpush1.bf16.msra.mxu0 %v1706
    %2564 = vmatprep.subr.bf16.mxu0 %v1715
    %2565 = vmatpush1.bf16.msra.mxu0 %v1714
    %2566 = vmatprep.subr.bf16.mxu0 %v1723
    %2567 = vmatpush1.bf16.msra.mxu0 %v1722
    %2568 = vmatprep.subr.bf16.mxu0 %v1731
    %2569 = vmatpush1.bf16.msra.mxu0 %v1730
    %2570 = vmatprep.subr.bf16.mxu0 %v1739
    %2571 = vmatpush1.bf16.msra.mxu0 %v1738
    %2572 = vmatprep.subr.bf16.mxu0 %v1747
    %2573 = vmatpush1.bf16.msra.mxu0 %v1746
    %2574 = vmatprep.mubr.bf16.mxu0 %v525
    %2575 = vmatmul.mubr.bf16.gmra.mrb[0].mxu0 %v524
    %v2576 = vpop.f32.mrb[0].mxu0
    %v2577 = vadd.f32 %v2536, %v2576
    %v2578 = vpop.f32.mrb[0].mxu0
    %v2579 = vadd.f32 %v2538, %v2578
    %v2580 = vpop.f32.mrb[0].mxu0
    %v2581 = vpop.f32.mrb[0].mxu0
    %2582 = vdwg.mxu0
    %2583 = vmatprep.subr.bf16.mxu0 %v1755
    %2584 = vmatpush1.bf16.msra.mxu0 %v1754
    %2585 = vmatprep.subr.bf16.mxu0 %v1763
    %2586 = vmatpush1.bf16.msra.mxu0 %v1762
    %2587 = vmatprep.subr.bf16.mxu0 %v1771
    %2588 = vmatpush1.bf16.msra.mxu0 %v1770
    %2589 = vmatprep.subr.bf16.mxu0 %v1779
    %2590 = vmatpush1.bf16.msra.mxu0 %v1778
    %2591 = vmatprep.subr.bf16.mxu0 %v1787
    %2592 = vmatpush1.bf16.msra.mxu0 %v1786
    %2593 = vmatprep.subr.bf16.mxu0 %v1795
    %2594 = vmatpush1.bf16.msra.mxu0 %v1794
    %2595 = vmatprep.subr.bf16.mxu0 %v1803
    %2596 = vmatpush1.bf16.msra.mxu0 %v1802
    %2597 = vmatprep.subr.bf16.mxu0 %v1811
    %2598 = vmatpush1.bf16.msra.mxu0 %v1810
    %2599 = vmatprep.subr.bf16.mxu0 0
    %2600 = vmatpush1.bf16.msra.mxu0 0
    %2601 = vmatprep.subr.bf16.mxu0 0
    %2602 = vmatpush1.bf16.msra.mxu0 0
    %2603 = vmatprep.subr.bf16.mxu0 0
    %2604 = vmatpush1.bf16.msra.mxu0 0
    %2605 = vmatprep.subr.bf16.mxu0 0
    %2606 = vmatpush1.bf16.msra.mxu0 0
    %2607 = vmatprep.subr.bf16.mxu0 0
    %2608 = vmatpush1.bf16.msra.mxu0 0
    %2609 = vmatprep.subr.bf16.mxu0 0
    %2610 = vmatpush1.bf16.msra.mxu0 0
    %2611 = vmatprep.subr.bf16.mxu0 0
    %2612 = vmatpush1.bf16.msra.mxu0 0
    %2613 = vmatprep.subr.bf16.mxu0 0
    %2614 = vmatpush1.bf16.msra.mxu0 0
    %2615 = vmatprep.mubr.bf16.mxu0 0
    %2616 = vmatmul.mubr.bf16.gmra.mrb[0].mxu0 %v526
    %v2617 = vpop.f32.mrb[0].mxu0
    %v2618 = vadd.f32 %v2577, %v2617
    %v2619 = vpop.f32.mrb[0].mxu0
    %v2620 = vadd.f32 %v2579, %v2619
    %v2621 = vpop.f32.mrb[0].mxu0
    %v2622 = vpop.f32.mrb[0].mxu0
    %2623 = vdwg.mxu0
    %v2624 = vtanh.pop %v2249
    %v2625 = vtanh.pop %v2251
    %v2626 = vtanh.pop %v2372
    %v2627 = vtanh.pop %v2374
    %v2628 = vtanh.pop %v2495
    %v2629 = vtanh.pop %v2497
    %v2630 = vtanh.pop %v2618
    %v2631 = vtanh.pop %v2620
    %v2632 = vpack.c.bf16 %v2624, %v2624
    %v2633 = vpack.c.bf16 %v2625, %v2625
    %v2634 = vpack.c.bf16 %v2626, %v2626
    %v2635 = vpack.c.bf16 %v2627, %v2627
    %v2636 = vpack.c.bf16 %v2628, %v2628
    %v2637 = vpack.c.bf16 %v2629, %v2629
    %v2638 = vpack.c.bf16 %v2630, %v2630
    %v2639 = vpack.c.bf16 %v2631, %v2631
    %v2640 = vld [vmem:[#allocation8] sm:$0xff]
    %v2641 = vld [vmem:[#allocation8 + $0x8] sm:$0xff]
    %v2642 = vld [vmem:[#allocation8 + $0x10] sm:$0xff]
    %v2643 = vld [vmem:[#allocation8 + $0x18] sm:$0xff]
    %v2644 = vld [vmem:[#allocation8 + $0x20] sm:$0xff]
    %v2645 = vld [vmem:[#allocation8 + $0x28] sm:$0xff]
    %v2646 = vld [vmem:[#allocation8 + $0x30] sm:$0xff]
    %v2647 = vld [vmem:[#allocation8 + $0x38] sm:$0xff]
    %v2648 = vld [vmem:[#allocation8 + $0x40] sm:$0xff]
    %v2649 = vld [vmem:[#allocation8 + $0x48] sm:$0xff]
    %v2650 = vld [vmem:[#allocation8 + $0x50] sm:$0xff]
    %v2651 = vld [vmem:[#allocation8 + $0x58] sm:$0xff]
    %v2652 = vld [vmem:[#allocation8 + $0x60] sm:$0xff]
    %v2653 = vld [vmem:[#allocation8 + $0x68] sm:$0xff]
    %v2654 = vld [vmem:[#allocation8 + $0x70] sm:$0xff]
    %v2655 = vld [vmem:[#allocation8 + $0x78] sm:$0xff]
    %v2656 = vld [vmem:[#allocation8 + $0x80] sm:$0xff]
    %v2657 = vld [vmem:[#allocation8 + $0x88] sm:$0xff]
    %v2658 = vld [vmem:[#allocation8 + $0x90] sm:$0xff]
    %v2659 = vld [vmem:[#allocation8 + $0x98] sm:$0xff]
    %v2660 = vld [vmem:[#allocation8 + $0xa0] sm:$0xff]
    %v2661 = vld [vmem:[#allocation8 + $0xa8] sm:$0xff]
    %v2662 = vld [vmem:[#allocation8 + $0xb0] sm:$0xff]
    %v2663 = vld [vmem:[#allocation8 + $0xb8] sm:$0xff]
    %v2664 = vld [vmem:[#allocation8 + $0xc0] sm:$0xff]
    %v2665 = vld [vmem:[#allocation8 + $0xc8] sm:$0xff]
    %v2666 = vld [vmem:[#allocation8 + $0xd0] sm:$0xff]
    %v2667 = vld [vmem:[#allocation8 + $0xd8] sm:$0xff]
    %v2668 = vld [vmem:[#allocation8 + $0xe0] sm:$0xff]
    %v2669 = vld [vmem:[#allocation8 + $0xe8] sm:$0xff]
    %v2670 = vld [vmem:[#allocation8 + $0xf0] sm:$0xff]
    %v2671 = vld [vmem:[#allocation8 + $0xf8] sm:$0xff]
    %v2672 = vld [vmem:[#allocation8 + $0x100] sm:$0xff]
    %v2673 = vld [vmem:[#allocation8 + $0x108] sm:$0xff]
    %v2674 = vld [vmem:[#allocation8 + $0x110] sm:$0xff]
    %v2675 = vld [vmem:[#allocation8 + $0x118] sm:$0xff]
    %v2676 = vld [vmem:[#allocation8 + $0x120] sm:$0xff]
    %v2677 = vld [vmem:[#allocation8 + $0x128] sm:$0xff]
    %v2678 = vld [vmem:[#allocation8 + $0x130] sm:$0xff]
    %v2679 = vld [vmem:[#allocation8 + $0x138] sm:$0xff]
    %v2680 = vld [vmem:[#allocation8 + $0x140] sm:$0xff]
    %v2681 = vld [vmem:[#allocation8 + $0x148] sm:$0xff]
    %v2682 = vld [vmem:[#allocation8 + $0x150] sm:$0xff]
    %v2683 = vld [vmem:[#allocation8 + $0x158] sm:$0xff]
    %v2684 = vld [vmem:[#allocation8 + $0x160] sm:$0xff]
    %v2685 = vld [vmem:[#allocation8 + $0x168] sm:$0xff]
    %v2686 = vld [vmem:[#allocation8 + $0x170] sm:$0xff]
    %v2687 = vld [vmem:[#allocation8 + $0x178] sm:$0xff]
    %v2688 = vld [vmem:[#allocation8 + $0x180] sm:$0xff]
    %v2689 = vld [vmem:[#allocation8 + $0x188] sm:$0xff]
    %v2690 = vld [vmem:[#allocation8 + $0x190] sm:$0xff]
    %v2691 = vld [vmem:[#allocation8 + $0x198] sm:$0xff]
    %v2692 = vld [vmem:[#allocation8 + $0x1a0] sm:$0xff]
    %v2693 = vld [vmem:[#allocation8 + $0x1a8] sm:$0xff]
    %v2694 = vld [vmem:[#allocation8 + $0x1b0] sm:$0xff]
    %v2695 = vld [vmem:[#allocation8 + $0x1b8] sm:$0xff]
    %v2696 = vld [vmem:[#allocation8 + $0x1c0] sm:$0xff]
    %v2697 = vld [vmem:[#allocation8 + $0x1c8] sm:$0xff]
    %v2698 = vld [vmem:[#allocation8 + $0x1d0] sm:$0xff]
    %v2699 = vld [vmem:[#allocation8 + $0x1d8] sm:$0xff]
    %v2700 = vld [vmem:[#allocation8 + $0x1e0] sm:$0xff]
    %v2701 = vld [vmem:[#allocation8 + $0x1e8] sm:$0xff]
    %v2702 = vld [vmem:[#allocation8 + $0x1f0] sm:$0xff]
    %v2703 = vld [vmem:[#allocation8 + $0x1f8] sm:$0xff]
    %v2704 = vld [vmem:[#allocation8 + $0x200] sm:$0xff]
    %v2705 = vld [vmem:[#allocation8 + $0x208] sm:$0xff]
    %v2706 = vld [vmem:[#allocation8 + $0x210] sm:$0xff]
    %v2707 = vld [vmem:[#allocation8 + $0x218] sm:$0xff]
    %v2708 = vld [vmem:[#allocation8 + $0x220] sm:$0xff]
    %v2709 = vld [vmem:[#allocation8 + $0x228] sm:$0xff]
    %v2710 = vld [vmem:[#allocation8 + $0x230] sm:$0xff]
    %v2711 = vld [vmem:[#allocation8 + $0x238] sm:$0xff]
    %v2712 = vld [vmem:[#allocation8 + $0x240] sm:$0xff]
    %v2713 = vld [vmem:[#allocation8 + $0x248] sm:$0xff]
    %v2714 = vld [vmem:[#allocation8 + $0x250] sm:$0xff]
    %v2715 = vld [vmem:[#allocation8 + $0x258] sm:$0xff]
    %v2716 = vld [vmem:[#allocation8 + $0x260] sm:$0xff]
    %v2717 = vld [vmem:[#allocation8 + $0x268] sm:$0xff]
    %v2718 = vld [vmem:[#allocation8 + $0x270] sm:$0xff]
    %v2719 = vld [vmem:[#allocation8 + $0x278] sm:$0xff]
    %v2720 = vld [vmem:[#allocation8 + $0x280] sm:$0xff]
    %v2721 = vld [vmem:[#allocation8 + $0x288] sm:$0xff]
    %v2722 = vld [vmem:[#allocation8 + $0x290] sm:$0xff]
    %v2723 = vld [vmem:[#allocation8 + $0x298] sm:$0xff]
    %v2724 = vld [vmem:[#allocation8 + $0x2a0] sm:$0xff]
    %v2725 = vld [vmem:[#allocation8 + $0x2a8] sm:$0xff]
    %v2726 = vld [vmem:[#allocation8 + $0x2b0] sm:$0xff]
    %v2727 = vld [vmem:[#allocation8 + $0x2b8] sm:$0xff]
    %v2728 = vld [vmem:[#allocation8 + $0x2c0] sm:$0xff]
    %v2729 = vld [vmem:[#allocation8 + $0x2c8] sm:$0xff]
    %v2730 = vld [vmem:[#allocation8 + $0x2d0] sm:$0xff]
    %v2731 = vld [vmem:[#allocation8 + $0x2d8] sm:$0xff]
    %v2732 = vld [vmem:[#allocation8 + $0x2e0] sm:$0xff]
    %v2733 = vld [vmem:[#allocation8 + $0x2e8] sm:$0xff]
    %v2734 = vld [vmem:[#allocation8 + $0x2f0] sm:$0xff]
    %v2735 = vld [vmem:[#allocation8 + $0x2f8] sm:$0xff]
    %v2736 = vld [vmem:[#allocation8 + $0x300] sm:$0xff]
    %v2737 = vld [vmem:[#allocation8 + $0x308] sm:$0xff]
    %v2738 = vld [vmem:[#allocation8 + $0x310] sm:$0xff]
    %v2739 = vld [vmem:[#allocation8 + $0x318] sm:$0xff]
    %v2740 = vld [vmem:[#allocation8 + $0x320] sm:$0xff]
    %v2741 = vld [vmem:[#allocation8 + $0x328] sm:$0xff]
    %v2742 = vld [vmem:[#allocation8 + $0x330] sm:$0xff]
    %v2743 = vld [vmem:[#allocation8 + $0x338] sm:$0xff]
    %v2744 = vld [vmem:[#allocation8 + $0x340] sm:$0xff]
    %v2745 = vld [vmem:[#allocation8 + $0x348] sm:$0xff]
    %v2746 = vld [vmem:[#allocation8 + $0x350] sm:$0xff]
    %v2747 = vld [vmem:[#allocation8 + $0x358] sm:$0xff]
    %v2748 = vld [vmem:[#allocation8 + $0x360] sm:$0xff]
    %v2749 = vld [vmem:[#allocation8 + $0x368] sm:$0xff]
    %v2750 = vld [vmem:[#allocation8 + $0x370] sm:$0xff]
    %v2751 = vld [vmem:[#allocation8 + $0x378] sm:$0xff]
    %v2752 = vld [vmem:[#allocation8 + $0x380] sm:$0xff]
    %v2753 = vld [vmem:[#allocation8 + $0x388] sm:$0xff]
    %v2754 = vld [vmem:[#allocation8 + $0x390] sm:$0xff]
    %v2755 = vld [vmem:[#allocation8 + $0x398] sm:$0xff]
    %v2756 = vld [vmem:[#allocation8 + $0x3a0] sm:$0xff]
    %v2757 = vld [vmem:[#allocation8 + $0x3a8] sm:$0xff]
    %v2758 = vld [vmem:[#allocation8 + $0x3b0] sm:$0xff]
    %v2759 = vld [vmem:[#allocation8 + $0x3b8] sm:$0xff]
    %v2760 = vld [vmem:[#allocation8 + $0x3c0] sm:$0xff]
    %v2761 = vld [vmem:[#allocation8 + $0x3c8] sm:$0xff]
    %v2762 = vld [vmem:[#allocation8 + $0x3d0] sm:$0xff]
    %v2763 = vld [vmem:[#allocation8 + $0x3d8] sm:$0xff]
    %v2764 = vld [vmem:[#allocation8 + $0x3e0] sm:$0xff]
    %v2765 = vld [vmem:[#allocation8 + $0x3e8] sm:$0xff]
    %v2766 = vld [vmem:[#allocation8 + $0x3f0] sm:$0xff]
    %v2767 = vld [vmem:[#allocation8 + $0x3f8] sm:$0xff]
    %v2768 = vld [vmem:[#allocation8 + $0x400] sm:$0xff]
    %v2769 = vld [vmem:[#allocation8 + $0x408] sm:$0xff]
    %v2770 = vld [vmem:[#allocation8 + $0x410] sm:$0xff]
    %v2771 = vld [vmem:[#allocation8 + $0x418] sm:$0xff]
    %v2772 = vld [vmem:[#allocation8 + $0x420] sm:$0xff]
    %v2773 = vld [vmem:[#allocation8 + $0x428] sm:$0xff]
    %v2774 = vld [vmem:[#allocation8 + $0x430] sm:$0xff]
    %v2775 = vld [vmem:[#allocation8 + $0x438] sm:$0xff]
    %v2776 = vld [vmem:[#allocation8 + $0x440] sm:$0xff]
    %v2777 = vld [vmem:[#allocation8 + $0x448] sm:$0xff]
    %v2778 = vld [vmem:[#allocation8 + $0x450] sm:$0xff]
    %v2779 = vld [vmem:[#allocation8 + $0x458] sm:$0xff]
    %v2780 = vld [vmem:[#allocation8 + $0x460] sm:$0xff]
    %v2781 = vld [vmem:[#allocation8 + $0x468] sm:$0xff]
    %v2782 = vld [vmem:[#allocation8 + $0x470] sm:$0xff]
    %v2783 = vld [vmem:[#allocation8 + $0x478] sm:$0xff]
    %v2784 = vld [vmem:[#allocation8 + $0x480] sm:$0xff]
    %v2785 = vld [vmem:[#allocation8 + $0x488] sm:$0xff]
    %v2786 = vld [vmem:[#allocation8 + $0x490] sm:$0xff]
    %v2787 = vld [vmem:[#allocation8 + $0x498] sm:$0xff]
    %v2788 = vld [vmem:[#allocation8 + $0x4a0] sm:$0xff]
    %v2789 = vld [vmem:[#allocation8 + $0x4a8] sm:$0xff]
    %v2790 = vld [vmem:[#allocation8 + $0x4b0] sm:$0xff]
    %v2791 = vld [vmem:[#allocation8 + $0x4b8] sm:$0xff]
    %v2792 = vld [vmem:[#allocation8 + $0x4c0] sm:$0xff]
    %v2793 = vld [vmem:[#allocation8 + $0x4c8] sm:$0xff]
    %v2794 = vld [vmem:[#allocation8 + $0x4d0] sm:$0xff]
    %v2795 = vld [vmem:[#allocation8 + $0x4d8] sm:$0xff]
    %v2796 = vld [vmem:[#allocation8 + $0x4e0] sm:$0xff]
    %v2797 = vld [vmem:[#allocation8 + $0x4e8] sm:$0xff]
    %v2798 = vld [vmem:[#allocation8 + $0x4f0] sm:$0xff]
    %v2799 = vld [vmem:[#allocation8 + $0x4f8] sm:$0xff]
    %v2800 = vld [vmem:[#allocation8 + $0x500] sm:$0xff]
    %v2801 = vld [vmem:[#allocation8 + $0x508] sm:$0xff]
    %v2802 = vld [vmem:[#allocation8 + $0x510] sm:$0xff]
    %v2803 = vld [vmem:[#allocation8 + $0x518] sm:$0xff]
    %v2804 = vld [vmem:[#allocation8 + $0x520] sm:$0xff]
    %v2805 = vld [vmem:[#allocation8 + $0x528] sm:$0xff]
    %v2806 = vld [vmem:[#allocation8 + $0x530] sm:$0xff]
    %v2807 = vld [vmem:[#allocation8 + $0x538] sm:$0xff]
    %v2808 = vld [vmem:[#allocation8 + $0x540] sm:$0xff]
    %v2809 = vld [vmem:[#allocation8 + $0x548] sm:$0xff]
    %v2810 = vld [vmem:[#allocation8 + $0x550] sm:$0xff]
    %v2811 = vld [vmem:[#allocation8 + $0x558] sm:$0xff]
    %v2812 = vld [vmem:[#allocation8 + $0x560] sm:$0xff]
    %v2813 = vld [vmem:[#allocation8 + $0x568] sm:$0xff]
    %v2814 = vld [vmem:[#allocation8 + $0x570] sm:$0xff]
    %v2815 = vld [vmem:[#allocation8 + $0x578] sm:$0xff]
    %v2816 = vld [vmem:[#allocation8 + $0x580] sm:$0xff]
    %v2817 = vld [vmem:[#allocation8 + $0x588] sm:$0xff]
    %v2818 = vld [vmem:[#allocation8 + $0x590] sm:$0xff]
    %v2819 = vld [vmem:[#allocation8 + $0x598] sm:$0xff]
    %v2820 = vld [vmem:[#allocation8 + $0x5a0] sm:$0xff]
    %v2821 = vld [vmem:[#allocation8 + $0x5a8] sm:$0xff]
    %v2822 = vld [vmem:[#allocation8 + $0x5b0] sm:$0xff]
    %v2823 = vld [vmem:[#allocation8 + $0x5b8] sm:$0xff]
    %v2824 = vld [vmem:[#allocation8 + $0x5c0] sm:$0xff]
    %v2825 = vld [vmem:[#allocation8 + $0x5c8] sm:$0xff]
    %v2826 = vld [vmem:[#allocation8 + $0x5d0] sm:$0xff]
    %v2827 = vld [vmem:[#allocation8 + $0x5d8] sm:$0xff]
    %v2828 = vld [vmem:[#allocation8 + $0x5e0] sm:$0xff]
    %v2829 = vld [vmem:[#allocation8 + $0x5e8] sm:$0xff]
    %v2830 = vld [vmem:[#allocation8 + $0x5f0] sm:$0xff]
    %v2831 = vld [vmem:[#allocation8 + $0x5f8] sm:$0xff]
    %v2832 = vld [vmem:[#allocation8 + $0x600] sm:$0xff]
    %v2833 = vld [vmem:[#allocation8 + $0x608] sm:$0xff]
    %v2834 = vld [vmem:[#allocation8 + $0x610] sm:$0xff]
    %v2835 = vld [vmem:[#allocation8 + $0x618] sm:$0xff]
    %v2836 = vld [vmem:[#allocation8 + $0x620] sm:$0xff]
    %v2837 = vld [vmem:[#allocation8 + $0x628] sm:$0xff]
    %v2838 = vld [vmem:[#allocation8 + $0x630] sm:$0xff]
    %v2839 = vld [vmem:[#allocation8 + $0x638] sm:$0xff]
    %v2840 = vld [vmem:[#allocation8 + $0x640] sm:$0xff]
    %v2841 = vld [vmem:[#allocation8 + $0x648] sm:$0xff]
    %v2842 = vld [vmem:[#allocation8 + $0x650] sm:$0xff]
    %v2843 = vld [vmem:[#allocation8 + $0x658] sm:$0xff]
    %v2844 = vld [vmem:[#allocation8 + $0x660] sm:$0xff]
    %v2845 = vld [vmem:[#allocation8 + $0x668] sm:$0xff]
    %v2846 = vld [vmem:[#allocation8 + $0x670] sm:$0xff]
    %v2847 = vld [vmem:[#allocation8 + $0x678] sm:$0xff]
    %v2848 = vld [vmem:[#allocation8 + $0x680] sm:$0xff]
    %v2849 = vld [vmem:[#allocation8 + $0x688] sm:$0xff]
    %v2850 = vld [vmem:[#allocation8 + $0x690] sm:$0xff]
    %v2851 = vld [vmem:[#allocation8 + $0x698] sm:$0xff]
    %v2852 = vld [vmem:[#allocation8 + $0x6a0] sm:$0xff]
    %v2853 = vld [vmem:[#allocation8 + $0x6a8] sm:$0xff]
    %v2854 = vld [vmem:[#allocation8 + $0x6b0] sm:$0xff]
    %v2855 = vld [vmem:[#allocation8 + $0x6b8] sm:$0xff]
    %v2856 = vld [vmem:[#allocation8 + $0x6c0] sm:$0xff]
    %v2857 = vld [vmem:[#allocation8 + $0x6c8] sm:$0xff]
    %v2858 = vld [vmem:[#allocation8 + $0x6d0] sm:$0xff]
    %v2859 = vld [vmem:[#allocation8 + $0x6d8] sm:$0xff]
    %v2860 = vld [vmem:[#allocation8 + $0x6e0] sm:$0xff]
    %v2861 = vld [vmem:[#allocation8 + $0x6e8] sm:$0xff]
    %v2862 = vld [vmem:[#allocation8 + $0x6f0] sm:$0xff]
    %v2863 = vld [vmem:[#allocation8 + $0x6f8] sm:$0xff]
    %v2864 = vld [vmem:[#allocation8 + $0x700] sm:$0xff]
    %v2865 = vld [vmem:[#allocation8 + $0x708] sm:$0xff]
    %v2866 = vld [vmem:[#allocation8 + $0x710] sm:$0xff]
    %v2867 = vld [vmem:[#allocation8 + $0x718] sm:$0xff]
    %v2868 = vld [vmem:[#allocation8 + $0x720] sm:$0xff]
    %v2869 = vld [vmem:[#allocation8 + $0x728] sm:$0xff]
    %v2870 = vld [vmem:[#allocation8 + $0x730] sm:$0xff]
    %v2871 = vld [vmem:[#allocation8 + $0x738] sm:$0xff]
    %v2872 = vld [vmem:[#allocation8 + $0x740] sm:$0xff]
    %v2873 = vld [vmem:[#allocation8 + $0x748] sm:$0xff]
    %v2874 = vld [vmem:[#allocation8 + $0x750] sm:$0xff]
    %v2875 = vld [vmem:[#allocation8 + $0x758] sm:$0xff]
    %v2876 = vld [vmem:[#allocation8 + $0x760] sm:$0xff]
    %v2877 = vld [vmem:[#allocation8 + $0x768] sm:$0xff]
    %v2878 = vld [vmem:[#allocation8 + $0x770] sm:$0xff]
    %v2879 = vld [vmem:[#allocation8 + $0x778] sm:$0xff]
    %v2880 = vld [vmem:[#allocation8 + $0x780] sm:$0xff]
    %v2881 = vld [vmem:[#allocation8 + $0x788] sm:$0xff]
    %v2882 = vld [vmem:[#allocation8 + $0x790] sm:$0xff]
    %v2883 = vld [vmem:[#allocation8 + $0x798] sm:$0xff]
    %v2884 = vld [vmem:[#allocation8 + $0x7a0] sm:$0xff]
    %v2885 = vld [vmem:[#allocation8 + $0x7a8] sm:$0xff]
    %v2886 = vld [vmem:[#allocation8 + $0x7b0] sm:$0xff]
    %v2887 = vld [vmem:[#allocation8 + $0x7b8] sm:$0xff]
    %v2888 = vld [vmem:[#allocation8 + $0x7c0] sm:$0xff]
    %v2889 = vld [vmem:[#allocation8 + $0x7c8] sm:$0xff]
    %v2890 = vld [vmem:[#allocation8 + $0x7d0] sm:$0xff]
    %v2891 = vld [vmem:[#allocation8 + $0x7d8] sm:$0xff]
    %v2892 = vld [vmem:[#allocation8 + $0x7e0] sm:$0xff]
    %v2893 = vld [vmem:[#allocation8 + $0x7e8] sm:$0xff]
    %v2894 = vld [vmem:[#allocation8 + $0x7f0] sm:$0xff]
    %v2895 = vld [vmem:[#allocation8 + $0x7f8] sm:$0xff]
    %v2896 = vld [vmem:[#allocation10] sm:$0xf]
    %v2898 = vlaneseq
    %v2899 = vshrl.u32 %v2898, 7
    %v2900 = vsub.s32 0, %v2899
    %v2901 = vrot.slane %v2896, %v2900
    %v2902 = vlaneseq
    %v2903 = vshrl.u32 %v2902, 7
    %v2904 = vsub.s32 1, %v2903
    %v2905 = vrot.slane %v2896, %v2904
    %v2906 = vlaneseq
    %v2907 = vshrl.u32 %v2906, 7
    %v2908 = vsub.s32 2, %v2907
    %v2909 = vrot.slane %v2896, %v2908
    %v2910 = vlaneseq
    %v2911 = vshrl.u32 %v2910, 7
    %v2912 = vsub.s32 3, %v2911
    %v2913 = vrot.slane %v2896, %v2912
    %v3174 = vunpack.c.l.b16 %v2640
    %v3175 = vunpack.c.h.b16 %v2640
    %v3176 = vunpack.c.l.b16 %v2641
    %v3177 = vunpack.c.h.b16 %v2641
    %v3178 = vunpack.c.l.b16 %v2642
    %v3179 = vunpack.c.h.b16 %v2642
    %v3180 = vunpack.c.l.b16 %v2643
    %v3181 = vunpack.c.h.b16 %v2643
    %v3182 = vunpack.c.l.b16 %v2644
    %v3183 = vunpack.c.h.b16 %v2644
    %v3184 = vunpack.c.l.b16 %v2645
    %v3185 = vunpack.c.h.b16 %v2645
    %v3186 = vunpack.c.l.b16 %v2646
    %v3187 = vunpack.c.h.b16 %v2646
    %v3188 = vunpack.c.l.b16 %v2647
    %v3189 = vunpack.c.h.b16 %v2647
    %v3190 = vunpack.c.l.b16 %v2648
    %v3191 = vunpack.c.h.b16 %v2648
    %v3192 = vunpack.c.l.b16 %v2649
    %v3193 = vunpack.c.h.b16 %v2649
    %v3194 = vunpack.c.l.b16 %v2650
    %v3195 = vunpack.c.h.b16 %v2650
    %v3196 = vunpack.c.l.b16 %v2651
    %v3197 = vunpack.c.h.b16 %v2651
    %v3198 = vunpack.c.l.b16 %v2652
    %v3199 = vunpack.c.h.b16 %v2652
    %v3200 = vunpack.c.l.b16 %v2653
    %v3201 = vunpack.c.h.b16 %v2653
    %v3202 = vunpack.c.l.b16 %v2654
    %v3203 = vunpack.c.h.b16 %v2654
    %v3204 = vunpack.c.l.b16 %v2655
    %v3205 = vunpack.c.h.b16 %v2655
    %v3206 = vunpack.c.l.b16 %v2656
    %v3207 = vunpack.c.h.b16 %v2656
    %v3208 = vunpack.c.l.b16 %v2657
    %v3209 = vunpack.c.h.b16 %v2657
    %v3210 = vunpack.c.l.b16 %v2658
    %v3211 = vunpack.c.h.b16 %v2658
    %v3212 = vunpack.c.l.b16 %v2659
    %v3213 = vunpack.c.h.b16 %v2659
    %v3214 = vunpack.c.l.b16 %v2660
    %v3215 = vunpack.c.h.b16 %v2660
    %v3216 = vunpack.c.l.b16 %v2661
    %v3217 = vunpack.c.h.b16 %v2661
    %v3218 = vunpack.c.l.b16 %v2662
    %v3219 = vunpack.c.h.b16 %v2662
    %v3220 = vunpack.c.l.b16 %v2663
    %v3221 = vunpack.c.h.b16 %v2663
    %v3222 = vunpack.c.l.b16 %v2664
    %v3223 = vunpack.c.h.b16 %v2664
    %v3224 = vunpack.c.l.b16 %v2665
    %v3225 = vunpack.c.h.b16 %v2665
    %v3226 = vunpack.c.l.b16 %v2666
    %v3227 = vunpack.c.h.b16 %v2666
    %v3228 = vunpack.c.l.b16 %v2667
    %v3229 = vunpack.c.h.b16 %v2667
    %v3230 = vunpack.c.l.b16 %v2668
    %v3231 = vunpack.c.h.b16 %v2668
    %v3232 = vunpack.c.l.b16 %v2669
    %v3233 = vunpack.c.h.b16 %v2669
    %v3234 = vunpack.c.l.b16 %v2670
    %v3235 = vunpack.c.h.b16 %v2670
    %v3236 = vunpack.c.l.b16 %v2671
    %v3237 = vunpack.c.h.b16 %v2671
    %v3238 = vunpack.c.l.b16 %v2672
    %v3239 = vunpack.c.h.b16 %v2672
    %v3240 = vunpack.c.l.b16 %v2673
    %v3241 = vunpack.c.h.b16 %v2673
    %v3242 = vunpack.c.l.b16 %v2674
    %v3243 = vunpack.c.h.b16 %v2674
    %v3244 = vunpack.c.l.b16 %v2675
    %v3245 = vunpack.c.h.b16 %v2675
    %v3246 = vunpack.c.l.b16 %v2676
    %v3247 = vunpack.c.h.b16 %v2676
    %v3248 = vunpack.c.l.b16 %v2677
    %v3249 = vunpack.c.h.b16 %v2677
    %v3250 = vunpack.c.l.b16 %v2678
    %v3251 = vunpack.c.h.b16 %v2678
    %v3252 = vunpack.c.l.b16 %v2679
    %v3253 = vunpack.c.h.b16 %v2679
    %v3254 = vunpack.c.l.b16 %v2680
    %v3255 = vunpack.c.h.b16 %v2680
    %v3256 = vunpack.c.l.b16 %v2681
    %v3257 = vunpack.c.h.b16 %v2681
    %v3258 = vunpack.c.l.b16 %v2682
    %v3259 = vunpack.c.h.b16 %v2682
    %v3260 = vunpack.c.l.b16 %v2683
    %v3261 = vunpack.c.h.b16 %v2683
    %v3262 = vunpack.c.l.b16 %v2684
    %v3263 = vunpack.c.h.b16 %v2684
    %v3264 = vunpack.c.l.b16 %v2685
    %v3265 = vunpack.c.h.b16 %v2685
    %v3266 = vunpack.c.l.b16 %v2686
    %v3267 = vunpack.c.h.b16 %v2686
    %v3268 = vunpack.c.l.b16 %v2687
    %v3269 = vunpack.c.h.b16 %v2687
    %v3270 = vunpack.c.l.b16 %v2688
    %v3271 = vunpack.c.h.b16 %v2688
    %v3272 = vunpack.c.l.b16 %v2689
    %v3273 = vunpack.c.h.b16 %v2689
    %v3274 = vunpack.c.l.b16 %v2690
    %v3275 = vunpack.c.h.b16 %v2690
    %v3276 = vunpack.c.l.b16 %v2691
    %v3277 = vunpack.c.h.b16 %v2691
    %v3278 = vunpack.c.l.b16 %v2692
    %v3279 = vunpack.c.h.b16 %v2692
    %v3280 = vunpack.c.l.b16 %v2693
    %v3281 = vunpack.c.h.b16 %v2693
    %v3282 = vunpack.c.l.b16 %v2694
    %v3283 = vunpack.c.h.b16 %v2694
    %v3284 = vunpack.c.l.b16 %v2695
    %v3285 = vunpack.c.h.b16 %v2695
    %v3286 = vunpack.c.l.b16 %v2696
    %v3287 = vunpack.c.h.b16 %v2696
    %v3288 = vunpack.c.l.b16 %v2697
    %v3289 = vunpack.c.h.b16 %v2697
    %v3290 = vunpack.c.l.b16 %v2698
    %v3291 = vunpack.c.h.b16 %v2698
    %v3292 = vunpack.c.l.b16 %v2699
    %v3293 = vunpack.c.h.b16 %v2699
    %v3294 = vunpack.c.l.b16 %v2700
    %v3295 = vunpack.c.h.b16 %v2700
    %v3296 = vunpack.c.l.b16 %v2701
    %v3297 = vunpack.c.h.b16 %v2701
    %v3298 = vunpack.c.l.b16 %v2702
    %v3299 = vunpack.c.h.b16 %v2702
    %v3300 = vunpack.c.l.b16 %v2703
    %v3301 = vunpack.c.h.b16 %v2703
    %v3302 = vunpack.c.l.b16 %v2704
    %v3303 = vunpack.c.h.b16 %v2704
    %v3304 = vunpack.c.l.b16 %v2705
    %v3305 = vunpack.c.h.b16 %v2705
    %v3306 = vunpack.c.l.b16 %v2706
    %v3307 = vunpack.c.h.b16 %v2706
    %v3308 = vunpack.c.l.b16 %v2707
    %v3309 = vunpack.c.h.b16 %v2707
    %v3310 = vunpack.c.l.b16 %v2708
    %v3311 = vunpack.c.h.b16 %v2708
    %v3312 = vunpack.c.l.b16 %v2709
    %v3313 = vunpack.c.h.b16 %v2709
    %v3314 = vunpack.c.l.b16 %v2710
    %v3315 = vunpack.c.h.b16 %v2710
    %v3316 = vunpack.c.l.b16 %v2711
    %v3317 = vunpack.c.h.b16 %v2711
    %v3318 = vunpack.c.l.b16 %v2712
    %v3319 = vunpack.c.h.b16 %v2712
    %v3320 = vunpack.c.l.b16 %v2713
    %v3321 = vunpack.c.h.b16 %v2713
    %v3322 = vunpack.c.l.b16 %v2714
    %v3323 = vunpack.c.h.b16 %v2714
    %v3324 = vunpack.c.l.b16 %v2715
    %v3325 = vunpack.c.h.b16 %v2715
    %v3326 = vunpack.c.l.b16 %v2716
    %v3327 = vunpack.c.h.b16 %v2716
    %v3328 = vunpack.c.l.b16 %v2717
    %v3329 = vunpack.c.h.b16 %v2717
    %v3330 = vunpack.c.l.b16 %v2718
    %v3331 = vunpack.c.h.b16 %v2718
    %v3332 = vunpack.c.l.b16 %v2719
    %v3333 = vunpack.c.h.b16 %v2719
    %v3334 = vunpack.c.l.b16 %v2720
    %v3335 = vunpack.c.h.b16 %v2720
    %v3336 = vunpack.c.l.b16 %v2721
    %v3337 = vunpack.c.h.b16 %v2721
    %v3338 = vunpack.c.l.b16 %v2722
    %v3339 = vunpack.c.h.b16 %v2722
    %v3340 = vunpack.c.l.b16 %v2723
    %v3341 = vunpack.c.h.b16 %v2723
    %v3342 = vunpack.c.l.b16 %v2724
    %v3343 = vunpack.c.h.b16 %v2724
    %v3344 = vunpack.c.l.b16 %v2725
    %v3345 = vunpack.c.h.b16 %v2725
    %v3346 = vunpack.c.l.b16 %v2726
    %v3347 = vunpack.c.h.b16 %v2726
    %v3348 = vunpack.c.l.b16 %v2727
    %v3349 = vunpack.c.h.b16 %v2727
    %v3350 = vunpack.c.l.b16 %v2728
    %v3351 = vunpack.c.h.b16 %v2728
    %v3352 = vunpack.c.l.b16 %v2729
    %v3353 = vunpack.c.h.b16 %v2729
    %v3354 = vunpack.c.l.b16 %v2730
    %v3355 = vunpack.c.h.b16 %v2730
    %v3356 = vunpack.c.l.b16 %v2731
    %v3357 = vunpack.c.h.b16 %v2731
    %v3358 = vunpack.c.l.b16 %v2732
    %v3359 = vunpack.c.h.b16 %v2732
    %v3360 = vunpack.c.l.b16 %v2733
    %v3361 = vunpack.c.h.b16 %v2733
    %v3362 = vunpack.c.l.b16 %v2734
    %v3363 = vunpack.c.h.b16 %v2734
    %v3364 = vunpack.c.l.b16 %v2735
    %v3365 = vunpack.c.h.b16 %v2735
    %v3366 = vunpack.c.l.b16 %v2736
    %v3367 = vunpack.c.h.b16 %v2736
    %v3368 = vunpack.c.l.b16 %v2737
    %v3369 = vunpack.c.h.b16 %v2737
    %v3370 = vunpack.c.l.b16 %v2738
    %v3371 = vunpack.c.h.b16 %v2738
    %v3372 = vunpack.c.l.b16 %v2739
    %v3373 = vunpack.c.h.b16 %v2739
    %v3374 = vunpack.c.l.b16 %v2740
    %v3375 = vunpack.c.h.b16 %v2740
    %v3376 = vunpack.c.l.b16 %v2741
    %v3377 = vunpack.c.h.b16 %v2741
    %v3378 = vunpack.c.l.b16 %v2742
    %v3379 = vunpack.c.h.b16 %v2742
    %v3380 = vunpack.c.l.b16 %v2743
    %v3381 = vunpack.c.h.b16 %v2743
    %v3382 = vunpack.c.l.b16 %v2744
    %v3383 = vunpack.c.h.b16 %v2744
    %v3384 = vunpack.c.l.b16 %v2745
    %v3385 = vunpack.c.h.b16 %v2745
    %v3386 = vunpack.c.l.b16 %v2746
    %v3387 = vunpack.c.h.b16 %v2746
    %v3388 = vunpack.c.l.b16 %v2747
    %v3389 = vunpack.c.h.b16 %v2747
    %v3390 = vunpack.c.l.b16 %v2748
    %v3391 = vunpack.c.h.b16 %v2748
    %v3392 = vunpack.c.l.b16 %v2749
    %v3393 = vunpack.c.h.b16 %v2749
    %v3394 = vunpack.c.l.b16 %v2750
    %v3395 = vunpack.c.h.b16 %v2750
    %v3396 = vunpack.c.l.b16 %v2751
    %v3397 = vunpack.c.h.b16 %v2751
    %v3398 = vunpack.c.l.b16 %v2752
    %v3399 = vunpack.c.h.b16 %v2752
    %v3400 = vunpack.c.l.b16 %v2753
    %v3401 = vunpack.c.h.b16 %v2753
    %v3402 = vunpack.c.l.b16 %v2754
    %v3403 = vunpack.c.h.b16 %v2754
    %v3404 = vunpack.c.l.b16 %v2755
    %v3405 = vunpack.c.h.b16 %v2755
    %v3406 = vunpack.c.l.b16 %v2756
    %v3407 = vunpack.c.h.b16 %v2756
    %v3408 = vunpack.c.l.b16 %v2757
    %v3409 = vunpack.c.h.b16 %v2757
    %v3410 = vunpack.c.l.b16 %v2758
    %v3411 = vunpack.c.h.b16 %v2758
    %v3412 = vunpack.c.l.b16 %v2759
    %v3413 = vunpack.c.h.b16 %v2759
    %v3414 = vunpack.c.l.b16 %v2760
    %v3415 = vunpack.c.h.b16 %v2760
    %v3416 = vunpack.c.l.b16 %v2761
    %v3417 = vunpack.c.h.b16 %v2761
    %v3418 = vunpack.c.l.b16 %v2762
    %v3419 = vunpack.c.h.b16 %v2762
    %v3420 = vunpack.c.l.b16 %v2763
    %v3421 = vunpack.c.h.b16 %v2763
    %v3422 = vunpack.c.l.b16 %v2764
    %v3423 = vunpack.c.h.b16 %v2764
    %v3424 = vunpack.c.l.b16 %v2765
    %v3425 = vunpack.c.h.b16 %v2765
    %v3426 = vunpack.c.l.b16 %v2766
    %v3427 = vunpack.c.h.b16 %v2766
    %v3428 = vunpack.c.l.b16 %v2767
    %v3429 = vunpack.c.h.b16 %v2767
    %v3430 = vunpack.c.l.b16 %v2768
    %v3431 = vunpack.c.h.b16 %v2768
    %v3432 = vunpack.c.l.b16 %v2769
    %v3433 = vunpack.c.h.b16 %v2769
    %v3434 = vunpack.c.l.b16 %v2770
    %v3435 = vunpack.c.h.b16 %v2770
    %v3436 = vunpack.c.l.b16 %v2771
    %v3437 = vunpack.c.h.b16 %v2771
    %v3438 = vunpack.c.l.b16 %v2772
    %v3439 = vunpack.c.h.b16 %v2772
    %v3440 = vunpack.c.l.b16 %v2773
    %v3441 = vunpack.c.h.b16 %v2773
    %v3442 = vunpack.c.l.b16 %v2774
    %v3443 = vunpack.c.h.b16 %v2774
    %v3444 = vunpack.c.l.b16 %v2775
    %v3445 = vunpack.c.h.b16 %v2775
    %v3446 = vunpack.c.l.b16 %v2776
    %v3447 = vunpack.c.h.b16 %v2776
    %v3448 = vunpack.c.l.b16 %v2777
    %v3449 = vunpack.c.h.b16 %v2777
    %v3450 = vunpack.c.l.b16 %v2778
    %v3451 = vunpack.c.h.b16 %v2778
    %v3452 = vunpack.c.l.b16 %v2779
    %v3453 = vunpack.c.h.b16 %v2779
    %v3454 = vunpack.c.l.b16 %v2780
    %v3455 = vunpack.c.h.b16 %v2780
    %v3456 = vunpack.c.l.b16 %v2781
    %v3457 = vunpack.c.h.b16 %v2781
    %v3458 = vunpack.c.l.b16 %v2782
    %v3459 = vunpack.c.h.b16 %v2782
    %v3460 = vunpack.c.l.b16 %v2783
    %v3461 = vunpack.c.h.b16 %v2783
    %v3462 = vunpack.c.l.b16 %v2784
    %v3463 = vunpack.c.h.b16 %v2784
    %v3464 = vunpack.c.l.b16 %v2785
    %v3465 = vunpack.c.h.b16 %v2785
    %v3466 = vunpack.c.l.b16 %v2786
    %v3467 = vunpack.c.h.b16 %v2786
    %v3468 = vunpack.c.l.b16 %v2787
    %v3469 = vunpack.c.h.b16 %v2787
    %v3470 = vunpack.c.l.b16 %v2788
    %v3471 = vunpack.c.h.b16 %v2788
    %v3472 = vunpack.c.l.b16 %v2789
    %v3473 = vunpack.c.h.b16 %v2789
    %v3474 = vunpack.c.l.b16 %v2790
    %v3475 = vunpack.c.h.b16 %v2790
    %v3476 = vunpack.c.l.b16 %v2791
    %v3477 = vunpack.c.h.b16 %v2791
    %v3478 = vunpack.c.l.b16 %v2792
    %v3479 = vunpack.c.h.b16 %v2792
    %v3480 = vunpack.c.l.b16 %v2793
    %v3481 = vunpack.c.h.b16 %v2793
    %v3482 = vunpack.c.l.b16 %v2794
    %v3483 = vunpack.c.h.b16 %v2794
    %v3484 = vunpack.c.l.b16 %v2795
    %v3485 = vunpack.c.h.b16 %v2795
    %v3486 = vunpack.c.l.b16 %v2796
    %v3487 = vunpack.c.h.b16 %v2796
    %v3488 = vunpack.c.l.b16 %v2797
    %v3489 = vunpack.c.h.b16 %v2797
    %v3490 = vunpack.c.l.b16 %v2798
    %v3491 = vunpack.c.h.b16 %v2798
    %v3492 = vunpack.c.l.b16 %v2799
    %v3493 = vunpack.c.h.b16 %v2799
    %v3494 = vunpack.c.l.b16 %v2800
    %v3495 = vunpack.c.h.b16 %v2800
    %v3496 = vunpack.c.l.b16 %v2801
    %v3497 = vunpack.c.h.b16 %v2801
    %v3498 = vunpack.c.l.b16 %v2802
    %v3499 = vunpack.c.h.b16 %v2802
    %v3500 = vunpack.c.l.b16 %v2803
    %v3501 = vunpack.c.h.b16 %v2803
    %v3502 = vunpack.c.l.b16 %v2804
    %v3503 = vunpack.c.h.b16 %v2804
    %v3504 = vunpack.c.l.b16 %v2805
    %v3505 = vunpack.c.h.b16 %v2805
    %v3506 = vunpack.c.l.b16 %v2806
    %v3507 = vunpack.c.h.b16 %v2806
    %v3508 = vunpack.c.l.b16 %v2807
    %v3509 = vunpack.c.h.b16 %v2807
    %v3510 = vunpack.c.l.b16 %v2808
    %v3511 = vunpack.c.h.b16 %v2808
    %v3512 = vunpack.c.l.b16 %v2809
    %v3513 = vunpack.c.h.b16 %v2809
    %v3514 = vunpack.c.l.b16 %v2810
    %v3515 = vunpack.c.h.b16 %v2810
    %v3516 = vunpack.c.l.b16 %v2811
    %v3517 = vunpack.c.h.b16 %v2811
    %v3518 = vunpack.c.l.b16 %v2812
    %v3519 = vunpack.c.h.b16 %v2812
    %v3520 = vunpack.c.l.b16 %v2813
    %v3521 = vunpack.c.h.b16 %v2813
    %v3522 = vunpack.c.l.b16 %v2814
    %v3523 = vunpack.c.h.b16 %v2814
    %v3524 = vunpack.c.l.b16 %v2815
    %v3525 = vunpack.c.h.b16 %v2815
    %v3526 = vunpack.c.l.b16 %v2816
    %v3527 = vunpack.c.h.b16 %v2816
    %v3528 = vunpack.c.l.b16 %v2817
    %v3529 = vunpack.c.h.b16 %v2817
    %v3530 = vunpack.c.l.b16 %v2818
    %v3531 = vunpack.c.h.b16 %v2818
    %v3532 = vunpack.c.l.b16 %v2819
    %v3533 = vunpack.c.h.b16 %v2819
    %v3534 = vunpack.c.l.b16 %v2820
    %v3535 = vunpack.c.h.b16 %v2820
    %v3536 = vunpack.c.l.b16 %v2821
    %v3537 = vunpack.c.h.b16 %v2821
    %v3538 = vunpack.c.l.b16 %v2822
    %v3539 = vunpack.c.h.b16 %v2822
    %v3540 = vunpack.c.l.b16 %v2823
    %v3541 = vunpack.c.h.b16 %v2823
    %v3542 = vunpack.c.l.b16 %v2824
    %v3543 = vunpack.c.h.b16 %v2824
    %v3544 = vunpack.c.l.b16 %v2825
    %v3545 = vunpack.c.h.b16 %v2825
    %v3546 = vunpack.c.l.b16 %v2826
    %v3547 = vunpack.c.h.b16 %v2826
    %v3548 = vunpack.c.l.b16 %v2827
    %v3549 = vunpack.c.h.b16 %v2827
    %v3550 = vunpack.c.l.b16 %v2828
    %v3551 = vunpack.c.h.b16 %v2828
    %v3552 = vunpack.c.l.b16 %v2829
    %v3553 = vunpack.c.h.b16 %v2829
    %v3554 = vunpack.c.l.b16 %v2830
    %v3555 = vunpack.c.h.b16 %v2830
    %v3556 = vunpack.c.l.b16 %v2831
    %v3557 = vunpack.c.h.b16 %v2831
    %v3558 = vunpack.c.l.b16 %v2832
    %v3559 = vunpack.c.h.b16 %v2832
    %v3560 = vunpack.c.l.b16 %v2833
    %v3561 = vunpack.c.h.b16 %v2833
    %v3562 = vunpack.c.l.b16 %v2834
    %v3563 = vunpack.c.h.b16 %v2834
    %v3564 = vunpack.c.l.b16 %v2835
    %v3565 = vunpack.c.h.b16 %v2835
    %v3566 = vunpack.c.l.b16 %v2836
    %v3567 = vunpack.c.h.b16 %v2836
    %v3568 = vunpack.c.l.b16 %v2837
    %v3569 = vunpack.c.h.b16 %v2837
    %v3570 = vunpack.c.l.b16 %v2838
    %v3571 = vunpack.c.h.b16 %v2838
    %v3572 = vunpack.c.l.b16 %v2839
    %v3573 = vunpack.c.h.b16 %v2839
    %v3574 = vunpack.c.l.b16 %v2840
    %v3575 = vunpack.c.h.b16 %v2840
    %v3576 = vunpack.c.l.b16 %v2841
    %v3577 = vunpack.c.h.b16 %v2841
    %v3578 = vunpack.c.l.b16 %v2842
    %v3579 = vunpack.c.h.b16 %v2842
    %v3580 = vunpack.c.l.b16 %v2843
    %v3581 = vunpack.c.h.b16 %v2843
    %v3582 = vunpack.c.l.b16 %v2844
    %v3583 = vunpack.c.h.b16 %v2844
    %v3584 = vunpack.c.l.b16 %v2845
    %v3585 = vunpack.c.h.b16 %v2845
    %v3586 = vunpack.c.l.b16 %v2846
    %v3587 = vunpack.c.h.b16 %v2846
    %v3588 = vunpack.c.l.b16 %v2847
    %v3589 = vunpack.c.h.b16 %v2847
    %v3590 = vunpack.c.l.b16 %v2848
    %v3591 = vunpack.c.h.b16 %v2848
    %v3592 = vunpack.c.l.b16 %v2849
    %v3593 = vunpack.c.h.b16 %v2849
    %v3594 = vunpack.c.l.b16 %v2850
    %v3595 = vunpack.c.h.b16 %v2850
    %v3596 = vunpack.c.l.b16 %v2851
    %v3597 = vunpack.c.h.b16 %v2851
    %v3598 = vunpack.c.l.b16 %v2852
    %v3599 = vunpack.c.h.b16 %v2852
    %v3600 = vunpack.c.l.b16 %v2853
    %v3601 = vunpack.c.h.b16 %v2853
    %v3602 = vunpack.c.l.b16 %v2854
    %v3603 = vunpack.c.h.b16 %v2854
    %v3604 = vunpack.c.l.b16 %v2855
    %v3605 = vunpack.c.h.b16 %v2855
    %v3606 = vunpack.c.l.b16 %v2856
    %v3607 = vunpack.c.h.b16 %v2856
    %v3608 = vunpack.c.l.b16 %v2857
    %v3609 = vunpack.c.h.b16 %v2857
    %v3610 = vunpack.c.l.b16 %v2858
    %v3611 = vunpack.c.h.b16 %v2858
    %v3612 = vunpack.c.l.b16 %v2859
    %v3613 = vunpack.c.h.b16 %v2859
    %v3614 = vunpack.c.l.b16 %v2860
    %v3615 = vunpack.c.h.b16 %v2860
    %v3616 = vunpack.c.l.b16 %v2861
    %v3617 = vunpack.c.h.b16 %v2861
    %v3618 = vunpack.c.l.b16 %v2862
    %v3619 = vunpack.c.h.b16 %v2862
    %v3620 = vunpack.c.l.b16 %v2863
    %v3621 = vunpack.c.h.b16 %v2863
    %v3622 = vunpack.c.l.b16 %v2864
    %v3623 = vunpack.c.h.b16 %v2864
    %v3624 = vunpack.c.l.b16 %v2865
    %v3625 = vunpack.c.h.b16 %v2865
    %v3626 = vunpack.c.l.b16 %v2866
    %v3627 = vunpack.c.h.b16 %v2866
    %v3628 = vunpack.c.l.b16 %v2867
    %v3629 = vunpack.c.h.b16 %v2867
    %v3630 = vunpack.c.l.b16 %v2868
    %v3631 = vunpack.c.h.b16 %v2868
    %v3632 = vunpack.c.l.b16 %v2869
    %v3633 = vunpack.c.h.b16 %v2869
    %v3634 = vunpack.c.l.b16 %v2870
    %v3635 = vunpack.c.h.b16 %v2870
    %v3636 = vunpack.c.l.b16 %v2871
    %v3637 = vunpack.c.h.b16 %v2871
    %v3638 = vunpack.c.l.b16 %v2872
    %v3639 = vunpack.c.h.b16 %v2872
    %v3640 = vunpack.c.l.b16 %v2873
    %v3641 = vunpack.c.h.b16 %v2873
    %v3642 = vunpack.c.l.b16 %v2874
    %v3643 = vunpack.c.h.b16 %v2874
    %v3644 = vunpack.c.l.b16 %v2875
    %v3645 = vunpack.c.h.b16 %v2875
    %v3646 = vunpack.c.l.b16 %v2876
    %v3647 = vunpack.c.h.b16 %v2876
    %v3648 = vunpack.c.l.b16 %v2877
    %v3649 = vunpack.c.h.b16 %v2877
    %v3650 = vunpack.c.l.b16 %v2878
    %v3651 = vunpack.c.h.b16 %v2878
    %v3652 = vunpack.c.l.b16 %v2879
    %v3653 = vunpack.c.h.b16 %v2879
    %v3654 = vunpack.c.l.b16 %v2880
    %v3655 = vunpack.c.h.b16 %v2880
    %v3656 = vunpack.c.l.b16 %v2881
    %v3657 = vunpack.c.h.b16 %v2881
    %v3658 = vunpack.c.l.b16 %v2882
    %v3659 = vunpack.c.h.b16 %v2882
    %v3660 = vunpack.c.l.b16 %v2883
    %v3661 = vunpack.c.h.b16 %v2883
    %v3662 = vunpack.c.l.b16 %v2884
    %v3663 = vunpack.c.h.b16 %v2884
    %v3664 = vunpack.c.l.b16 %v2885
    %v3665 = vunpack.c.h.b16 %v2885
    %v3666 = vunpack.c.l.b16 %v2886
    %v3667 = vunpack.c.h.b16 %v2886
    %v3668 = vunpack.c.l.b16 %v2887
    %v3669 = vunpack.c.h.b16 %v2887
    %v3670 = vunpack.c.l.b16 %v2888
    %v3671 = vunpack.c.h.b16 %v2888
    %v3672 = vunpack.c.l.b16 %v2889
    %v3673 = vunpack.c.h.b16 %v2889
    %v3674 = vunpack.c.l.b16 %v2890
    %v3675 = vunpack.c.h.b16 %v2890
    %v3676 = vunpack.c.l.b16 %v2891
    %v3677 = vunpack.c.h.b16 %v2891
    %v3678 = vunpack.c.l.b16 %v2892
    %v3679 = vunpack.c.h.b16 %v2892
    %v3680 = vunpack.c.l.b16 %v2893
    %v3681 = vunpack.c.h.b16 %v2893
    %v3682 = vunpack.c.l.b16 %v2894
    %v3683 = vunpack.c.h.b16 %v2894
    %v3684 = vunpack.c.l.b16 %v2895
    %v3685 = vunpack.c.h.b16 %v2895
    %v3686 = vpack.c.b16 %v3178, %v3174
    %v3687 = vpack.c.b16 %v3179, %v3175
    %v3688 = vpack.c.b16 %v3180, %v3176
    %v3689 = vpack.c.b16 %v3181, %v3177
    %v3690 = vpack.c.b16 %v3186, %v3182
    %v3691 = vpack.c.b16 %v3187, %v3183
    %v3692 = vpack.c.b16 %v3188, %v3184
    %v3693 = vpack.c.b16 %v3189, %v3185
    %v3694 = vpack.c.b16 %v3194, %v3190
    %v3695 = vpack.c.b16 %v3195, %v3191
    %v3696 = vpack.c.b16 %v3196, %v3192
    %v3697 = vpack.c.b16 %v3197, %v3193
    %v3698 = vpack.c.b16 %v3202, %v3198
    %v3699 = vpack.c.b16 %v3203, %v3199
    %v3700 = vpack.c.b16 %v3204, %v3200
    %v3701 = vpack.c.b16 %v3205, %v3201
    %v3702 = vpack.c.b16 %v3210, %v3206
    %v3703 = vpack.c.b16 %v3211, %v3207
    %v3704 = vpack.c.b16 %v3212, %v3208
    %v3705 = vpack.c.b16 %v3213, %v3209
    %v3706 = vpack.c.b16 %v3218, %v3214
    %v3707 = vpack.c.b16 %v3219, %v3215
    %v3708 = vpack.c.b16 %v3220, %v3216
    %v3709 = vpack.c.b16 %v3221, %v3217
    %v3710 = vpack.c.b16 %v3226, %v3222
    %v3711 = vpack.c.b16 %v3227, %v3223
    %v3712 = vpack.c.b16 %v3228, %v3224
    %v3713 = vpack.c.b16 %v3229, %v3225
    %v3714 = vpack.c.b16 %v3234, %v3230
    %v3715 = vpack.c.b16 %v3235, %v3231
    %v3716 = vpack.c.b16 %v3236, %v3232
    %v3717 = vpack.c.b16 %v3237, %v3233
    %v3718 = vpack.c.b16 %v3242, %v3238
    %v3719 = vpack.c.b16 %v3243, %v3239
    %v3720 = vpack.c.b16 %v3244, %v3240
    %v3721 = vpack.c.b16 %v3245, %v3241
    %v3722 = vpack.c.b16 %v3250, %v3246
    %v3723 = vpack.c.b16 %v3251, %v3247
    %v3724 = vpack.c.b16 %v3252, %v3248
    %v3725 = vpack.c.b16 %v3253, %v3249
    %v3726 = vpack.c.b16 %v3258, %v3254
    %v3727 = vpack.c.b16 %v3259, %v3255
    %v3728 = vpack.c.b16 %v3260, %v3256
    %v3729 = vpack.c.b16 %v3261, %v3257
    %v3730 = vpack.c.b16 %v3266, %v3262
    %v3731 = vpack.c.b16 %v3267, %v3263
    %v3732 = vpack.c.b16 %v3268, %v3264
    %v3733 = vpack.c.b16 %v3269, %v3265
    %v3734 = vpack.c.b16 %v3274, %v3270
    %v3735 = vpack.c.b16 %v3275, %v3271
    %v3736 = vpack.c.b16 %v3276, %v3272
    %v3737 = vpack.c.b16 %v3277, %v3273
    %v3738 = vpack.c.b16 %v3282, %v3278
    %v3739 = vpack.c.b16 %v3283, %v3279
    %v3740 = vpack.c.b16 %v3284, %v3280
    %v3741 = vpack.c.b16 %v3285, %v3281
    %v3742 = vpack.c.b16 %v3290, %v3286
    %v3743 = vpack.c.b16 %v3291, %v3287
    %v3744 = vpack.c.b16 %v3292, %v3288
    %v3745 = vpack.c.b16 %v3293, %v3289
    %v3746 = vpack.c.b16 %v3298, %v3294
    %v3747 = vpack.c.b16 %v3299, %v3295
    %v3748 = vpack.c.b16 %v3300, %v3296
    %v3749 = vpack.c.b16 %v3301, %v3297
    %v3750 = vpack.c.b16 %v3306, %v3302
    %v3751 = vpack.c.b16 %v3307, %v3303
    %v3752 = vpack.c.b16 %v3308, %v3304
    %v3753 = vpack.c.b16 %v3309, %v3305
    %v3754 = vpack.c.b16 %v3314, %v3310
    %v3755 = vpack.c.b16 %v3315, %v3311
    %v3756 = vpack.c.b16 %v3316, %v3312
    %v3757 = vpack.c.b16 %v3317, %v3313
    %v3758 = vpack.c.b16 %v3322, %v3318
    %v3759 = vpack.c.b16 %v3323, %v3319
    %v3760 = vpack.c.b16 %v3324, %v3320
    %v3761 = vpack.c.b16 %v3325, %v3321
    %v3762 = vpack.c.b16 %v3330, %v3326
    %v3763 = vpack.c.b16 %v3331, %v3327
    %v3764 = vpack.c.b16 %v3332, %v3328
    %v3765 = vpack.c.b16 %v3333, %v3329
    %v3766 = vpack.c.b16 %v3338, %v3334
    %v3767 = vpack.c.b16 %v3339, %v3335
    %v3768 = vpack.c.b16 %v3340, %v3336
    %v3769 = vpack.c.b16 %v3341, %v3337
    %v3770 = vpack.c.b16 %v3346, %v3342
    %v3771 = vpack.c.b16 %v3347, %v3343
    %v3772 = vpack.c.b16 %v3348, %v3344
    %v3773 = vpack.c.b16 %v3349, %v3345
    %v3774 = vpack.c.b16 %v3354, %v3350
    %v3775 = vpack.c.b16 %v3355, %v3351
    %v3776 = vpack.c.b16 %v3356, %v3352
    %v3777 = vpack.c.b16 %v3357, %v3353
    %v3778 = vpack.c.b16 %v3362, %v3358
    %v3779 = vpack.c.b16 %v3363, %v3359
    %v3780 = vpack.c.b16 %v3364, %v3360
    %v3781 = vpack.c.b16 %v3365, %v3361
    %v3782 = vpack.c.b16 %v3370, %v3366
    %v3783 = vpack.c.b16 %v3371, %v3367
    %v3784 = vpack.c.b16 %v3372, %v3368
    %v3785 = vpack.c.b16 %v3373, %v3369
    %v3786 = vpack.c.b16 %v3378, %v3374
    %v3787 = vpack.c.b16 %v3379, %v3375
    %v3788 = vpack.c.b16 %v3380, %v3376
    %v3789 = vpack.c.b16 %v3381, %v3377
    %v3790 = vpack.c.b16 %v3386, %v3382
    %v3791 = vpack.c.b16 %v3387, %v3383
    %v3792 = vpack.c.b16 %v3388, %v3384
    %v3793 = vpack.c.b16 %v3389, %v3385
    %v3794 = vpack.c.b16 %v3394, %v3390
    %v3795 = vpack.c.b16 %v3395, %v3391
    %v3796 = vpack.c.b16 %v3396, %v3392
    %v3797 = vpack.c.b16 %v3397, %v3393
    %v3798 = vpack.c.b16 %v3402, %v3398
    %v3799 = vpack.c.b16 %v3403, %v3399
    %v3800 = vpack.c.b16 %v3404, %v3400
    %v3801 = vpack.c.b16 %v3405, %v3401
    %v3802 = vpack.c.b16 %v3410, %v3406
    %v3803 = vpack.c.b16 %v3411, %v3407
    %v3804 = vpack.c.b16 %v3412, %v3408
    %v3805 = vpack.c.b16 %v3413, %v3409
    %v3806 = vpack.c.b16 %v3418, %v3414
    %v3807 = vpack.c.b16 %v3419, %v3415
    %v3808 = vpack.c.b16 %v3420, %v3416
    %v3809 = vpack.c.b16 %v3421, %v3417
    %v3810 = vpack.c.b16 %v3426, %v3422
    %v3811 = vpack.c.b16 %v3427, %v3423
    %v3812 = vpack.c.b16 %v3428, %v3424
    %v3813 = vpack.c.b16 %v3429, %v3425
    %v3814 = vpack.c.b16 %v3434, %v3430
    %v3815 = vpack.c.b16 %v3435, %v3431
    %v3816 = vpack.c.b16 %v3436, %v3432
    %v3817 = vpack.c.b16 %v3437, %v3433
    %v3818 = vpack.c.b16 %v3442, %v3438
    %v3819 = vpack.c.b16 %v3443, %v3439
    %v3820 = vpack.c.b16 %v3444, %v3440
    %v3821 = vpack.c.b16 %v3445, %v3441
    %v3822 = vpack.c.b16 %v3450, %v3446
    %v3823 = vpack.c.b16 %v3451, %v3447
    %v3824 = vpack.c.b16 %v3452, %v3448
    %v3825 = vpack.c.b16 %v3453, %v3449
    %v3826 = vpack.c.b16 %v3458, %v3454
    %v3827 = vpack.c.b16 %v3459, %v3455
    %v3828 = vpack.c.b16 %v3460, %v3456
    %v3829 = vpack.c.b16 %v3461, %v3457
    %v3830 = vpack.c.b16 %v3466, %v3462
    %v3831 = vpack.c.b16 %v3467, %v3463
    %v3832 = vpack.c.b16 %v3468, %v3464
    %v3833 = vpack.c.b16 %v3469, %v3465
    %v3834 = vpack.c.b16 %v3474, %v3470
    %v3835 = vpack.c.b16 %v3475, %v3471
    %v3836 = vpack.c.b16 %v3476, %v3472
    %v3837 = vpack.c.b16 %v3477, %v3473
    %v3838 = vpack.c.b16 %v3482, %v3478
    %v3839 = vpack.c.b16 %v3483, %v3479
    %v3840 = vpack.c.b16 %v3484, %v3480
    %v3841 = vpack.c.b16 %v3485, %v3481
    %v3842 = vpack.c.b16 %v3490, %v3486
    %v3843 = vpack.c.b16 %v3491, %v3487
    %v3844 = vpack.c.b16 %v3492, %v3488
    %v3845 = vpack.c.b16 %v3493, %v3489
    %v3846 = vpack.c.b16 %v3498, %v3494
    %v3847 = vpack.c.b16 %v3499, %v3495
    %v3848 = vpack.c.b16 %v3500, %v3496
    %v3849 = vpack.c.b16 %v3501, %v3497
    %v3850 = vpack.c.b16 %v3506, %v3502
    %v3851 = vpack.c.b16 %v3507, %v3503
    %v3852 = vpack.c.b16 %v3508, %v3504
    %v3853 = vpack.c.b16 %v3509, %v3505
    %v3854 = vpack.c.b16 %v3514, %v3510
    %v3855 = vpack.c.b16 %v3515, %v3511
    %v3856 = vpack.c.b16 %v3516, %v3512
    %v3857 = vpack.c.b16 %v3517, %v3513
    %v3858 = vpack.c.b16 %v3522, %v3518
    %v3859 = vpack.c.b16 %v3523, %v3519
    %v3860 = vpack.c.b16 %v3524, %v3520
    %v3861 = vpack.c.b16 %v3525, %v3521
    %v3862 = vpack.c.b16 %v3530, %v3526
    %v3863 = vpack.c.b16 %v3531, %v3527
    %v3864 = vpack.c.b16 %v3532, %v3528
    %v3865 = vpack.c.b16 %v3533, %v3529
    %v3866 = vpack.c.b16 %v3538, %v3534
    %v3867 = vpack.c.b16 %v3539, %v3535
    %v3868 = vpack.c.b16 %v3540, %v3536
    %v3869 = vpack.c.b16 %v3541, %v3537
    %v3870 = vpack.c.b16 %v3546, %v3542
    %v3871 = vpack.c.b16 %v3547, %v3543
    %v3872 = vpack.c.b16 %v3548, %v3544
    %v3873 = vpack.c.b16 %v3549, %v3545
    %v3874 = vpack.c.b16 %v3554, %v3550
    %v3875 = vpack.c.b16 %v3555, %v3551
    %v3876 = vpack.c.b16 %v3556, %v3552
    %v3877 = vpack.c.b16 %v3557, %v3553
    %v3878 = vpack.c.b16 %v3562, %v3558
    %v3879 = vpack.c.b16 %v3563, %v3559
    %v3880 = vpack.c.b16 %v3564, %v3560
    %v3881 = vpack.c.b16 %v3565, %v3561
    %v3882 = vpack.c.b16 %v3570, %v3566
    %v3883 = vpack.c.b16 %v3571, %v3567
    %v3884 = vpack.c.b16 %v3572, %v3568
    %v3885 = vpack.c.b16 %v3573, %v3569
    %v3886 = vpack.c.b16 %v3578, %v3574
    %v3887 = vpack.c.b16 %v3579, %v3575
    %v3888 = vpack.c.b16 %v3580, %v3576
    %v3889 = vpack.c.b16 %v3581, %v3577
    %v3890 = vpack.c.b16 %v3586, %v3582
    %v3891 = vpack.c.b16 %v3587, %v3583
    %v3892 = vpack.c.b16 %v3588, %v3584
    %v3893 = vpack.c.b16 %v3589, %v3585
    %v3894 = vpack.c.b16 %v3594, %v3590
    %v3895 = vpack.c.b16 %v3595, %v3591
    %v3896 = vpack.c.b16 %v3596, %v3592
    %v3897 = vpack.c.b16 %v3597, %v3593
    %v3898 = vpack.c.b16 %v3602, %v3598
    %v3899 = vpack.c.b16 %v3603, %v3599
    %v3900 = vpack.c.b16 %v3604, %v3600
    %v3901 = vpack.c.b16 %v3605, %v3601
    %v3902 = vpack.c.b16 %v3610, %v3606
    %v3903 = vpack.c.b16 %v3611, %v3607
    %v3904 = vpack.c.b16 %v3612, %v3608
    %v3905 = vpack.c.b16 %v3613, %v3609
    %v3906 = vpack.c.b16 %v3618, %v3614
    %v3907 = vpack.c.b16 %v3619, %v3615
    %v3908 = vpack.c.b16 %v3620, %v3616
    %v3909 = vpack.c.b16 %v3621, %v3617
    %v3910 = vpack.c.b16 %v3626, %v3622
    %v3911 = vpack.c.b16 %v3627, %v3623
    %v3912 = vpack.c.b16 %v3628, %v3624
    %v3913 = vpack.c.b16 %v3629, %v3625
    %v3914 = vpack.c.b16 %v3634, %v3630
    %v3915 = vpack.c.b16 %v3635, %v3631
    %v3916 = vpack.c.b16 %v3636, %v3632
    %v3917 = vpack.c.b16 %v3637, %v3633
    %v3918 = vpack.c.b16 %v3642, %v3638
    %v3919 = vpack.c.b16 %v3643, %v3639
    %v3920 = vpack.c.b16 %v3644, %v3640
    %v3921 = vpack.c.b16 %v3645, %v3641
    %v3922 = vpack.c.b16 %v3650, %v3646
    %v3923 = vpack.c.b16 %v3651, %v3647
    %v3924 = vpack.c.b16 %v3652, %v3648
    %v3925 = vpack.c.b16 %v3653, %v3649
    %v3926 = vpack.c.b16 %v3658, %v3654
    %v3927 = vpack.c.b16 %v3659, %v3655
    %v3928 = vpack.c.b16 %v3660, %v3656
    %v3929 = vpack.c.b16 %v3661, %v3657
    %v3930 = vpack.c.b16 %v3666, %v3662
    %v3931 = vpack.c.b16 %v3667, %v3663
    %v3932 = vpack.c.b16 %v3668, %v3664
    %v3933 = vpack.c.b16 %v3669, %v3665
    %v3934 = vpack.c.b16 %v3674, %v3670
    %v3935 = vpack.c.b16 %v3675, %v3671
    %v3936 = vpack.c.b16 %v3676, %v3672
    %v3937 = vpack.c.b16 %v3677, %v3673
    %v3938 = vpack.c.b16 %v3682, %v3678
    %v3939 = vpack.c.b16 %v3683, %v3679
    %v3940 = vpack.c.b16 %v3684, %v3680
    %v3941 = vpack.c.b16 %v3685, %v3681
    %4198 = vmatprep.subr.bf16.mxu0 %v3687
    %4199 = vmatpush1.bf16.msra.mxu0 %v3686
    %4200 = vmatprep.subr.bf16.mxu0 %v3691
    %4201 = vmatpush1.bf16.msra.mxu0 %v3690
    %4202 = vmatprep.subr.bf16.mxu0 %v3695
    %4203 = vmatpush1.bf16.msra.mxu0 %v3694
    %4204 = vmatprep.subr.bf16.mxu0 %v3699
    %4205 = vmatpush1.bf16.msra.mxu0 %v3698
    %4206 = vmatprep.subr.bf16.mxu0 %v3703
    %4207 = vmatpush1.bf16.msra.mxu0 %v3702
    %4208 = vmatprep.subr.bf16.mxu0 %v3707
    %4209 = vmatpush1.bf16.msra.mxu0 %v3706
    %4210 = vmatprep.subr.bf16.mxu0 %v3711
    %4211 = vmatpush1.bf16.msra.mxu0 %v3710
    %4212 = vmatprep.subr.bf16.mxu0 %v3715
    %4213 = vmatpush1.bf16.msra.mxu0 %v3714
    %4214 = vmatprep.subr.bf16.mxu0 %v3719
    %4215 = vmatpush1.bf16.msra.mxu0 %v3718
    %4216 = vmatprep.subr.bf16.mxu0 %v3723
    %4217 = vmatpush1.bf16.msra.mxu0 %v3722
    %4218 = vmatprep.subr.bf16.mxu0 %v3727
    %4219 = vmatpush1.bf16.msra.mxu0 %v3726
    %4220 = vmatprep.subr.bf16.mxu0 %v3731
    %4221 = vmatpush1.bf16.msra.mxu0 %v3730
    %4222 = vmatprep.subr.bf16.mxu0 %v3735
    %4223 = vmatpush1.bf16.msra.mxu0 %v3734
    %4224 = vmatprep.subr.bf16.mxu0 %v3739
    %4225 = vmatpush1.bf16.msra.mxu0 %v3738
    %4226 = vmatprep.subr.bf16.mxu0 %v3743
    %4227 = vmatpush1.bf16.msra.mxu0 %v3742
    %4228 = vmatprep.subr.bf16.mxu0 %v3747
    %4229 = vmatpush1.bf16.msra.mxu0 %v3746
    %4230 = vmatprep.mubr.bf16.mxu0 %v2633
    %4231 = vmatmul.mubr.bf16.gmra.mrb[0].mxu0 %v2632
    %v4232 = vpop.f32.mrb[0].mxu0
    %v4233 = vadd.f32 %v2901, %v4232
    %v4234 = vpop.f32.mrb[0].mxu0
    %v4235 = vadd.f32 %v2905, %v4234
    %v4236 = vpop.f32.mrb[0].mxu0
    %v4237 = vpop.f32.mrb[0].mxu0
    %4238 = vdwg.mxu0
    %4239 = vmatprep.subr.bf16.mxu0 %v3751
    %4240 = vmatpush1.bf16.msra.mxu0 %v3750
    %4241 = vmatprep.subr.bf16.mxu0 %v3755
    %4242 = vmatpush1.bf16.msra.mxu0 %v3754
    %4243 = vmatprep.subr.bf16.mxu0 %v3759
    %4244 = vmatpush1.bf16.msra.mxu0 %v3758
    %4245 = vmatprep.subr.bf16.mxu0 %v3763
    %4246 = vmatpush1.bf16.msra.mxu0 %v3762
    %4247 = vmatprep.subr.bf16.mxu0 %v3767
    %4248 = vmatpush1.bf16.msra.mxu0 %v3766
    %4249 = vmatprep.subr.bf16.mxu0 %v3771
    %4250 = vmatpush1.bf16.msra.mxu0 %v3770
    %4251 = vmatprep.subr.bf16.mxu0 %v3775
    %4252 = vmatpush1.bf16.msra.mxu0 %v3774
    %4253 = vmatprep.subr.bf16.mxu0 %v3779
    %4254 = vmatpush1.bf16.msra.mxu0 %v3778
    %4255 = vmatprep.subr.bf16.mxu0 %v3783
    %4256 = vmatpush1.bf16.msra.mxu0 %v3782
    %4257 = vmatprep.subr.bf16.mxu0 %v3787
    %4258 = vmatpush1.bf16.msra.mxu0 %v3786
    %4259 = vmatprep.subr.bf16.mxu0 %v3791
    %4260 = vmatpush1.bf16.msra.mxu0 %v3790
    %4261 = vmatprep.subr.bf16.mxu0 %v3795
    %4262 = vmatpush1.bf16.msra.mxu0 %v3794
    %4263 = vmatprep.subr.bf16.mxu0 %v3799
    %4264 = vmatpush1.bf16.msra.mxu0 %v3798
    %4265 = vmatprep.subr.bf16.mxu0 %v3803
    %4266 = vmatpush1.bf16.msra.mxu0 %v3802
    %4267 = vmatprep.subr.bf16.mxu0 %v3807
    %4268 = vmatpush1.bf16.msra.mxu0 %v3806
    %4269 = vmatprep.subr.bf16.mxu0 %v3811
    %4270 = vmatpush1.bf16.msra.mxu0 %v3810
    %4271 = vmatprep.mubr.bf16.mxu0 %v2635
    %4272 = vmatmul.mubr.bf16.gmra.mrb[0].mxu0 %v2634
    %v4273 = vpop.f32.mrb[0].mxu0
    %v4274 = vadd.f32 %v4233, %v4273
    %v4275 = vpop.f32.mrb[0].mxu0
    %v4276 = vadd.f32 %v4235, %v4275
    %v4277 = vpop.f32.mrb[0].mxu0
    %v4278 = vpop.f32.mrb[0].mxu0
    %4279 = vdwg.mxu0
    %4280 = vmatprep.subr.bf16.mxu0 %v3815
    %4281 = vmatpush1.bf16.msra.mxu0 %v3814
    %4282 = vmatprep.subr.bf16.mxu0 %v3819
    %4283 = vmatpush1.bf16.msra.mxu0 %v3818
    %4284 = vmatprep.subr.bf16.mxu0 %v3823
    %4285 = vmatpush1.bf16.msra.mxu0 %v3822
    %4286 = vmatprep.subr.bf16.mxu0 %v3827
    %4287 = vmatpush1.bf16.msra.mxu0 %v3826
    %4288 = vmatprep.subr.bf16.mxu0 %v3831
    %4289 = vmatpush1.bf16.msra.mxu0 %v3830
    %4290 = vmatprep.subr.bf16.mxu0 %v3835
    %4291 = vmatpush1.bf16.msra.mxu0 %v3834
    %4292 = vmatprep.subr.bf16.mxu0 %v3839
    %4293 = vmatpush1.bf16.msra.mxu0 %v3838
    %4294 = vmatprep.subr.bf16.mxu0 %v3843
    %4295 = vmatpush1.bf16.msra.mxu0 %v3842
    %4296 = vmatprep.subr.bf16.mxu0 %v3847
    %4297 = vmatpush1.bf16.msra.mxu0 %v3846
    %4298 = vmatprep.subr.bf16.mxu0 %v3851
    %4299 = vmatpush1.bf16.msra.mxu0 %v3850
    %4300 = vmatprep.subr.bf16.mxu0 %v3855
    %4301 = vmatpush1.bf16.msra.mxu0 %v3854
    %4302 = vmatprep.subr.bf16.mxu0 %v3859
    %4303 = vmatpush1.bf16.msra.mxu0 %v3858
    %4304 = vmatprep.subr.bf16.mxu0 %v3863
    %4305 = vmatpush1.bf16.msra.mxu0 %v3862
    %4306 = vmatprep.subr.bf16.mxu0 %v3867
    %4307 = vmatpush1.bf16.msra.mxu0 %v3866
    %4308 = vmatprep.subr.bf16.mxu0 %v3871
    %4309 = vmatpush1.bf16.msra.mxu0 %v3870
    %4310 = vmatprep.subr.bf16.mxu0 %v3875
    %4311 = vmatpush1.bf16.msra.mxu0 %v3874
    %4312 = vmatprep.mubr.bf16.mxu0 %v2637
    %4313 = vmatmul.mubr.bf16.gmra.mrb[0].mxu0 %v2636
    %v4314 = vpop.f32.mrb[0].mxu0
    %v4315 = vadd.f32 %v4274, %v4314
    %v4316 = vpop.f32.mrb[0].mxu0
    %v4317 = vadd.f32 %v4276, %v4316
    %v4318 = vpop.f32.mrb[0].mxu0
    %v4319 = vpop.f32.mrb[0].mxu0
    %4320 = vdwg.mxu0
    %4321 = vmatprep.subr.bf16.mxu0 %v3879
    %4322 = vmatpush1.bf16.msra.mxu0 %v3878
    %4323 = vmatprep.subr.bf16.mxu0 %v3883
    %4324 = vmatpush1.bf16.msra.mxu0 %v3882
    %4325 = vmatprep.subr.bf16.mxu0 %v3887
    %4326 = vmatpush1.bf16.msra.mxu0 %v3886
    %4327 = vmatprep.subr.bf16.mxu0 %v3891
    %4328 = vmatpush1.bf16.msra.mxu0 %v3890
    %4329 = vmatprep.subr.bf16.mxu0 %v3895
    %4330 = vmatpush1.bf16.msra.mxu0 %v3894
    %4331 = vmatprep.subr.bf16.mxu0 %v3899
    %4332 = vmatpush1.bf16.msra.mxu0 %v3898
    %4333 = vmatprep.subr.bf16.mxu0 %v3903
    %4334 = vmatpush1.bf16.msra.mxu0 %v3902
    %4335 = vmatprep.subr.bf16.mxu0 %v3907
    %4336 = vmatpush1.bf16.msra.mxu0 %v3906
    %4337 = vmatprep.subr.bf16.mxu0 %v3911
    %4338 = vmatpush1.bf16.msra.mxu0 %v3910
    %4339 = vmatprep.subr.bf16.mxu0 %v3915
    %4340 = vmatpush1.bf16.msra.mxu0 %v3914
    %4341 = vmatprep.subr.bf16.mxu0 %v3919
    %4342 = vmatpush1.bf16.msra.mxu0 %v3918
    %4343 = vmatprep.subr.bf16.mxu0 %v3923
    %4344 = vmatpush1.bf16.msra.mxu0 %v3922
    %4345 = vmatprep.subr.bf16.mxu0 %v3927
    %4346 = vmatpush1.bf16.msra.mxu0 %v3926
    %4347 = vmatprep.subr.bf16.mxu0 %v3931
    %4348 = vmatpush1.bf16.msra.mxu0 %v3930
    %4349 = vmatprep.subr.bf16.mxu0 %v3935
    %4350 = vmatpush1.bf16.msra.mxu0 %v3934
    %4351 = vmatprep.subr.bf16.mxu0 %v3939
    %4352 = vmatpush1.bf16.msra.mxu0 %v3938
    %4353 = vmatprep.mubr.bf16.mxu0 %v2639
    %4354 = vmatmul.mubr.bf16.gmra.mrb[0].mxu0 %v2638
    %v4355 = vpop.f32.mrb[0].mxu0
    %v4356 = vadd.f32 %v4315, %v4355
    %v4357 = vpop.f32.mrb[0].mxu0
    %v4358 = vadd.f32 %v4317, %v4357
    %v4359 = vpop.f32.mrb[0].mxu0
    %v4360 = vpop.f32.mrb[0].mxu0
    %4361 = vdwg.mxu0
    %4362 = vmatprep.subr.bf16.mxu0 %v3689
    %4363 = vmatpush1.bf16.msra.mxu0 %v3688
    %4364 = vmatprep.subr.bf16.mxu0 %v3693
    %4365 = vmatpush1.bf16.msra.mxu0 %v3692
    %4366 = vmatprep.subr.bf16.mxu0 %v3697
    %4367 = vmatpush1.bf16.msra.mxu0 %v3696
    %4368 = vmatprep.subr.bf16.mxu0 %v3701
    %4369 = vmatpush1.bf16.msra.mxu0 %v3700
    %4370 = vmatprep.subr.bf16.mxu0 %v3705
    %4371 = vmatpush1.bf16.msra.mxu0 %v3704
    %4372 = vmatprep.subr.bf16.mxu0 %v3709
    %4373 = vmatpush1.bf16.msra.mxu0 %v3708
    %4374 = vmatprep.subr.bf16.mxu0 %v3713
    %4375 = vmatpush1.bf16.msra.mxu0 %v3712
    %4376 = vmatprep.subr.bf16.mxu0 %v3717
    %4377 = vmatpush1.bf16.msra.mxu0 %v3716
    %4378 = vmatprep.subr.bf16.mxu0 %v3721
    %4379 = vmatpush1.bf16.msra.mxu0 %v3720
    %4380 = vmatprep.subr.bf16.mxu0 %v3725
    %4381 = vmatpush1.bf16.msra.mxu0 %v3724
    %4382 = vmatprep.subr.bf16.mxu0 %v3729
    %4383 = vmatpush1.bf16.msra.mxu0 %v3728
    %4384 = vmatprep.subr.bf16.mxu0 %v3733
    %4385 = vmatpush1.bf16.msra.mxu0 %v3732
    %4386 = vmatprep.subr.bf16.mxu0 %v3737
    %4387 = vmatpush1.bf16.msra.mxu0 %v3736
    %4388 = vmatprep.subr.bf16.mxu0 %v3741
    %4389 = vmatpush1.bf16.msra.mxu0 %v3740
    %4390 = vmatprep.subr.bf16.mxu0 %v3745
    %4391 = vmatpush1.bf16.msra.mxu0 %v3744
    %4392 = vmatprep.subr.bf16.mxu0 %v3749
    %4393 = vmatpush1.bf16.msra.mxu0 %v3748
    %4394 = vmatprep.mubr.bf16.mxu0 %v2633
    %4395 = vmatmul.mubr.bf16.gmra.mrb[0].mxu0 %v2632
    %v4396 = vpop.f32.mrb[0].mxu0
    %v4397 = vadd.f32 %v2909, %v4396
    %v4398 = vpop.f32.mrb[0].mxu0
    %v4399 = vadd.f32 %v2913, %v4398
    %v4400 = vpop.f32.mrb[0].mxu0
    %v4401 = vpop.f32.mrb[0].mxu0
    %4402 = vdwg.mxu0
    %4403 = vmatprep.subr.bf16.mxu0 %v3753
    %4404 = vmatpush1.bf16.msra.mxu0 %v3752
    %4405 = vmatprep.subr.bf16.mxu0 %v3757
    %4406 = vmatpush1.bf16.msra.mxu0 %v3756
    %4407 = vmatprep.subr.bf16.mxu0 %v3761
    %4408 = vmatpush1.bf16.msra.mxu0 %v3760
    %4409 = vmatprep.subr.bf16.mxu0 %v3765
    %4410 = vmatpush1.bf16.msra.mxu0 %v3764
    %4411 = vmatprep.subr.bf16.mxu0 %v3769
    %4412 = vmatpush1.bf16.msra.mxu0 %v3768
    %4413 = vmatprep.subr.bf16.mxu0 %v3773
    %4414 = vmatpush1.bf16.msra.mxu0 %v3772
    %4415 = vmatprep.subr.bf16.mxu0 %v3777
    %4416 = vmatpush1.bf16.msra.mxu0 %v3776
    %4417 = vmatprep.subr.bf16.mxu0 %v3781
    %4418 = vmatpush1.bf16.msra.mxu0 %v3780
    %4419 = vmatprep.subr.bf16.mxu0 %v3785
    %4420 = vmatpush1.bf16.msra.mxu0 %v3784
    %4421 = vmatprep.subr.bf16.mxu0 %v3789
    %4422 = vmatpush1.bf16.msra.mxu0 %v3788
    %4423 = vmatprep.subr.bf16.mxu0 %v3793
    %4424 = vmatpush1.bf16.msra.mxu0 %v3792
    %4425 = vmatprep.subr.bf16.mxu0 %v3797
    %4426 = vmatpush1.bf16.msra.mxu0 %v3796
    %4427 = vmatprep.subr.bf16.mxu0 %v3801
    %4428 = vmatpush1.bf16.msra.mxu0 %v3800
    %4429 = vmatprep.subr.bf16.mxu0 %v3805
    %4430 = vmatpush1.bf16.msra.mxu0 %v3804
    %4431 = vmatprep.subr.bf16.mxu0 %v3809
    %4432 = vmatpush1.bf16.msra.mxu0 %v3808
    %4433 = vmatprep.subr.bf16.mxu0 %v3813
    %4434 = vmatpush1.bf16.msra.mxu0 %v3812
    %4435 = vmatprep.mubr.bf16.mxu0 %v2635
    %4436 = vmatmul.mubr.bf16.gmra.mrb[0].mxu0 %v2634
    %v4437 = vpop.f32.mrb[0].mxu0
    %v4438 = vadd.f32 %v4397, %v4437
    %v4439 = vpop.f32.mrb[0].mxu0
    %v4440 = vadd.f32 %v4399, %v4439
    %v4441 = vpop.f32.mrb[0].mxu0
    %v4442 = vpop.f32.mrb[0].mxu0
    %4443 = vdwg.mxu0
    %4444 = vmatprep.subr.bf16.mxu0 %v3817
    %4445 = vmatpush1.bf16.msra.mxu0 %v3816
    %4446 = vmatprep.subr.bf16.mxu0 %v3821
    %4447 = vmatpush1.bf16.msra.mxu0 %v3820
    %4448 = vmatprep.subr.bf16.mxu0 %v3825
    %4449 = vmatpush1.bf16.msra.mxu0 %v3824
    %4450 = vmatprep.subr.bf16.mxu0 %v3829
    %4451 = vmatpush1.bf16.msra.mxu0 %v3828
    %4452 = vmatprep.subr.bf16.mxu0 %v3833
    %4453 = vmatpush1.bf16.msra.mxu0 %v3832
    %4454 = vmatprep.subr.bf16.mxu0 %v3837
    %4455 = vmatpush1.bf16.msra.mxu0 %v3836
    %4456 = vmatprep.subr.bf16.mxu0 %v3841
    %4457 = vmatpush1.bf16.msra.mxu0 %v3840
    %4458 = vmatprep.subr.bf16.mxu0 %v3845
    %4459 = vmatpush1.bf16.msra.mxu0 %v3844
    %4460 = vmatprep.subr.bf16.mxu0 %v3849
    %4461 = vmatpush1.bf16.msra.mxu0 %v3848
    %4462 = vmatprep.subr.bf16.mxu0 %v3853
    %4463 = vmatpush1.bf16.msra.mxu0 %v3852
    %4464 = vmatprep.subr.bf16.mxu0 %v3857
    %4465 = vmatpush1.bf16.msra.mxu0 %v3856
    %4466 = vmatprep.subr.bf16.mxu0 %v3861
    %4467 = vmatpush1.bf16.msra.mxu0 %v3860
    %4468 = vmatprep.subr.bf16.mxu0 %v3865
    %4469 = vmatpush1.bf16.msra.mxu0 %v3864
    %4470 = vmatprep.subr.bf16.mxu0 %v3869
    %4471 = vmatpush1.bf16.msra.mxu0 %v3868
    %4472 = vmatprep.subr.bf16.mxu0 %v3873
    %4473 = vmatpush1.bf16.msra.mxu0 %v3872
    %4474 = vmatprep.subr.bf16.mxu0 %v3877
    %4475 = vmatpush1.bf16.msra.mxu0 %v3876
    %4476 = vmatprep.mubr.bf16.mxu0 %v2637
    %4477 = vmatmul.mubr.bf16.gmra.mrb[0].mxu0 %v2636
    %v4478 = vpop.f32.mrb[0].mxu0
    %v4479 = vadd.f32 %v4438, %v4478
    %v4480 = vpop.f32.mrb[0].mxu0
    %v4481 = vadd.f32 %v4440, %v4480
    %v4482 = vpop.f32.mrb[0].mxu0
    %v4483 = vpop.f32.mrb[0].mxu0
    %4484 = vdwg.mxu0
    %4485 = vmatprep.subr.bf16.mxu0 %v3881
    %4486 = vmatpush1.bf16.msra.mxu0 %v3880
    %4487 = vmatprep.subr.bf16.mxu0 %v3885
    %4488 = vmatpush1.bf16.msra.mxu0 %v3884
    %4489 = vmatprep.subr.bf16.mxu0 %v3889
    %4490 = vmatpush1.bf16.msra.mxu0 %v3888
    %4491 = vmatprep.subr.bf16.mxu0 %v3893
    %4492 = vmatpush1.bf16.msra.mxu0 %v3892
    %4493 = vmatprep.subr.bf16.mxu0 %v3897
    %4494 = vmatpush1.bf16.msra.mxu0 %v3896
    %4495 = vmatprep.subr.bf16.mxu0 %v3901
    %4496 = vmatpush1.bf16.msra.mxu0 %v3900
    %4497 = vmatprep.subr.bf16.mxu0 %v3905
    %4498 = vmatpush1.bf16.msra.mxu0 %v3904
    %4499 = vmatprep.subr.bf16.mxu0 %v3909
    %4500 = vmatpush1.bf16.msra.mxu0 %v3908
    %4501 = vmatprep.subr.bf16.mxu0 %v3913
    %4502 = vmatpush1.bf16.msra.mxu0 %v3912
    %4503 = vmatprep.subr.bf16.mxu0 %v3917
    %4504 = vmatpush1.bf16.msra.mxu0 %v3916
    %4505 = vmatprep.subr.bf16.mxu0 %v3921
    %4506 = vmatpush1.bf16.msra.mxu0 %v3920
    %4507 = vmatprep.subr.bf16.mxu0 %v3925
    %4508 = vmatpush1.bf16.msra.mxu0 %v3924
    %4509 = vmatprep.subr.bf16.mxu0 %v3929
    %4510 = vmatpush1.bf16.msra.mxu0 %v3928
    %4511 = vmatprep.subr.bf16.mxu0 %v3933
    %4512 = vmatpush1.bf16.msra.mxu0 %v3932
    %4513 = vmatprep.subr.bf16.mxu0 %v3937
    %4514 = vmatpush1.bf16.msra.mxu0 %v3936
    %4515 = vmatprep.subr.bf16.mxu0 %v3941
    %4516 = vmatpush1.bf16.msra.mxu0 %v3940
    %4517 = vmatprep.mubr.bf16.mxu0 %v2639
    %4518 = vmatmul.mubr.bf16.gmra.mrb[0].mxu0 %v2638
    %v4519 = vpop.f32.mrb[0].mxu0
    %v4520 = vadd.f32 %v4479, %v4519
    %v4521 = vpop.f32.mrb[0].mxu0
    %v4522 = vadd.f32 %v4481, %v4521
    %v4523 = vpop.f32.mrb[0].mxu0
    %v4524 = vpop.f32.mrb[0].mxu0
    %4525 = vdwg.mxu0
    %v4526 = vtanh.pop %v4356
    %v4527 = vtanh.pop %v4358
    %v4528 = vtanh.pop %v4520
    %v4529 = vtanh.pop %v4522
    %v4530 = vpack.c.bf16 %v4526, %v4526
    %v4531 = vpack.c.bf16 %v4527, %v4527
    %v4532 = vpack.c.bf16 %v4528, %v4528
    %v4533 = vpack.c.bf16 %v4529, %v4529
    %v4534 = vld [vmem:[#allocation11] sm:$0xff]
    %v4535 = vld [vmem:[#allocation11 + $0x8] sm:$0xff]
    %v4536 = vld [vmem:[#allocation11 + $0x10] sm:$0xff]
    %v4537 = vld [vmem:[#allocation11 + $0x18] sm:$0xff]
    %v4538 = vld [vmem:[#allocation11 + $0x20] sm:$0xff]
    %v4539 = vld [vmem:[#allocation11 + $0x28] sm:$0xff]
    %v4540 = vld [vmem:[#allocation11 + $0x30] sm:$0xff]
    %v4541 = vld [vmem:[#allocation11 + $0x38] sm:$0xff]
    %v4542 = vld [vmem:[#allocation11 + $0x40] sm:$0xff]
    %v4543 = vld [vmem:[#allocation11 + $0x48] sm:$0xff]
    %v4544 = vld [vmem:[#allocation11 + $0x50] sm:$0xff]
    %v4545 = vld [vmem:[#allocation11 + $0x58] sm:$0xff]
    %v4546 = vld [vmem:[#allocation11 + $0x60] sm:$0xff]
    %v4547 = vld [vmem:[#allocation11 + $0x68] sm:$0xff]
    %v4548 = vld [vmem:[#allocation11 + $0x70] sm:$0xff]
    %v4549 = vld [vmem:[#allocation11 + $0x78] sm:$0xff]
    %v4550 = vld [vmem:[#allocation11 + $0x80] sm:$0xff]
    %v4551 = vld [vmem:[#allocation11 + $0x88] sm:$0xff]
    %v4552 = vld [vmem:[#allocation11 + $0x90] sm:$0xff]
    %v4553 = vld [vmem:[#allocation11 + $0x98] sm:$0xff]
    %v4554 = vld [vmem:[#allocation11 + $0xa0] sm:$0xff]
    %v4555 = vld [vmem:[#allocation11 + $0xa8] sm:$0xff]
    %v4556 = vld [vmem:[#allocation11 + $0xb0] sm:$0xff]
    %v4557 = vld [vmem:[#allocation11 + $0xb8] sm:$0xff]
    %v4558 = vld [vmem:[#allocation11 + $0xc0] sm:$0xff]
    %v4559 = vld [vmem:[#allocation11 + $0xc8] sm:$0xff]
    %v4560 = vld [vmem:[#allocation11 + $0xd0] sm:$0xff]
    %v4561 = vld [vmem:[#allocation11 + $0xd8] sm:$0xff]
    %v4562 = vld [vmem:[#allocation11 + $0xe0] sm:$0xff]
    %v4563 = vld [vmem:[#allocation11 + $0xe8] sm:$0xff]
    %v4564 = vld [vmem:[#allocation11 + $0xf0] sm:$0xff]
    %v4565 = vld [vmem:[#allocation11 + $0xf8] sm:$0xff]
    %v4566 = vld [vmem:[#allocation11 + $0x100] sm:$0xff]
    %v4567 = vld [vmem:[#allocation11 + $0x108] sm:$0xff]
    %v4568 = vld [vmem:[#allocation11 + $0x110] sm:$0xff]
    %v4569 = vld [vmem:[#allocation11 + $0x118] sm:$0xff]
    %v4570 = vld [vmem:[#allocation11 + $0x120] sm:$0xff]
    %v4571 = vld [vmem:[#allocation11 + $0x128] sm:$0xff]
    %v4572 = vld [vmem:[#allocation11 + $0x130] sm:$0xff]
    %v4573 = vld [vmem:[#allocation11 + $0x138] sm:$0xff]
    %v4574 = vld [vmem:[#allocation11 + $0x140] sm:$0xff]
    %v4575 = vld [vmem:[#allocation11 + $0x148] sm:$0xff]
    %v4576 = vld [vmem:[#allocation11 + $0x150] sm:$0xff]
    %v4577 = vld [vmem:[#allocation11 + $0x158] sm:$0xff]
    %v4578 = vld [vmem:[#allocation11 + $0x160] sm:$0xff]
    %v4579 = vld [vmem:[#allocation11 + $0x168] sm:$0xff]
    %v4580 = vld [vmem:[#allocation11 + $0x170] sm:$0xff]
    %v4581 = vld [vmem:[#allocation11 + $0x178] sm:$0xff]
    %v4582 = vld [vmem:[#allocation11 + $0x180] sm:$0xff]
    %v4583 = vld [vmem:[#allocation11 + $0x188] sm:$0xff]
    %v4584 = vld [vmem:[#allocation11 + $0x190] sm:$0xff]
    %v4585 = vld [vmem:[#allocation11 + $0x198] sm:$0xff]
    %v4586 = vld [vmem:[#allocation11 + $0x1a0] sm:$0xff]
    %v4587 = vld [vmem:[#allocation11 + $0x1a8] sm:$0xff]
    %v4588 = vld [vmem:[#allocation11 + $0x1b0] sm:$0xff]
    %v4589 = vld [vmem:[#allocation11 + $0x1b8] sm:$0xff]
    %v4590 = vld [vmem:[#allocation11 + $0x1c0] sm:$0xff]
    %v4591 = vld [vmem:[#allocation11 + $0x1c8] sm:$0xff]
    %v4592 = vld [vmem:[#allocation11 + $0x1d0] sm:$0xff]
    %v4593 = vld [vmem:[#allocation11 + $0x1d8] sm:$0xff]
    %v4594 = vld [vmem:[#allocation11 + $0x1e0] sm:$0xff]
    %v4595 = vld [vmem:[#allocation11 + $0x1e8] sm:$0xff]
    %v4596 = vld [vmem:[#allocation11 + $0x1f0] sm:$0xff]
    %v4597 = vld [vmem:[#allocation11 + $0x1f8] sm:$0xff]
    %v4598 = vld [vmem:[#allocation13] sm:$0x3]
    %v4600 = vlaneseq
    %v4601 = vshrl.u32 %v4600, 7
    %v4602 = vsub.s32 0, %v4601
    %v4603 = vrot.slane %v4598, %v4602
    %v4604 = vlaneseq
    %v4605 = vshrl.u32 %v4604, 7
    %v4606 = vsub.s32 1, %v4605
    %v4607 = vrot.slane %v4598, %v4606
    %v4674 = vunpack.c.l.b16 %v4534
    %v4675 = vunpack.c.h.b16 %v4534
    %v4676 = vunpack.c.l.b16 %v4535
    %v4677 = vunpack.c.h.b16 %v4535
    %v4678 = vunpack.c.l.b16 %v4536
    %v4679 = vunpack.c.h.b16 %v4536
    %v4680 = vunpack.c.l.b16 %v4537
    %v4681 = vunpack.c.h.b16 %v4537
    %v4682 = vunpack.c.l.b16 %v4538
    %v4683 = vunpack.c.h.b16 %v4538
    %v4684 = vunpack.c.l.b16 %v4539
    %v4685 = vunpack.c.h.b16 %v4539
    %v4686 = vunpack.c.l.b16 %v4540
    %v4687 = vunpack.c.h.b16 %v4540
    %v4688 = vunpack.c.l.b16 %v4541
    %v4689 = vunpack.c.h.b16 %v4541
    %v4690 = vunpack.c.l.b16 %v4542
    %v4691 = vunpack.c.h.b16 %v4542
    %v4692 = vunpack.c.l.b16 %v4543
    %v4693 = vunpack.c.h.b16 %v4543
    %v4694 = vunpack.c.l.b16 %v4544
    %v4695 = vunpack.c.h.b16 %v4544
    %v4696 = vunpack.c.l.b16 %v4545
    %v4697 = vunpack.c.h.b16 %v4545
    %v4698 = vunpack.c.l.b16 %v4546
    %v4699 = vunpack.c.h.b16 %v4546
    %v4700 = vunpack.c.l.b16 %v4547
    %v4701 = vunpack.c.h.b16 %v4547
    %v4702 = vunpack.c.l.b16 %v4548
    %v4703 = vunpack.c.h.b16 %v4548
    %v4704 = vunpack.c.l.b16 %v4549
    %v4705 = vunpack.c.h.b16 %v4549
    %v4706 = vunpack.c.l.b16 %v4550
    %v4707 = vunpack.c.h.b16 %v4550
    %v4708 = vunpack.c.l.b16 %v4551
    %v4709 = vunpack.c.h.b16 %v4551
    %v4710 = vunpack.c.l.b16 %v4552
    %v4711 = vunpack.c.h.b16 %v4552
    %v4712 = vunpack.c.l.b16 %v4553
    %v4713 = vunpack.c.h.b16 %v4553
    %v4714 = vunpack.c.l.b16 %v4554
    %v4715 = vunpack.c.h.b16 %v4554
    %v4716 = vunpack.c.l.b16 %v4555
    %v4717 = vunpack.c.h.b16 %v4555
    %v4718 = vunpack.c.l.b16 %v4556
    %v4719 = vunpack.c.h.b16 %v4556
    %v4720 = vunpack.c.l.b16 %v4557
    %v4721 = vunpack.c.h.b16 %v4557
    %v4722 = vunpack.c.l.b16 %v4558
    %v4723 = vunpack.c.h.b16 %v4558
    %v4724 = vunpack.c.l.b16 %v4559
    %v4725 = vunpack.c.h.b16 %v4559
    %v4726 = vunpack.c.l.b16 %v4560
    %v4727 = vunpack.c.h.b16 %v4560
    %v4728 = vunpack.c.l.b16 %v4561
    %v4729 = vunpack.c.h.b16 %v4561
    %v4730 = vunpack.c.l.b16 %v4562
    %v4731 = vunpack.c.h.b16 %v4562
    %v4732 = vunpack.c.l.b16 %v4563
    %v4733 = vunpack.c.h.b16 %v4563
    %v4734 = vunpack.c.l.b16 %v4564
    %v4735 = vunpack.c.h.b16 %v4564
    %v4736 = vunpack.c.l.b16 %v4565
    %v4737 = vunpack.c.h.b16 %v4565
    %v4738 = vunpack.c.l.b16 %v4566
    %v4739 = vunpack.c.h.b16 %v4566
    %v4740 = vunpack.c.l.b16 %v4567
    %v4741 = vunpack.c.h.b16 %v4567
    %v4742 = vunpack.c.l.b16 %v4568
    %v4743 = vunpack.c.h.b16 %v4568
    %v4744 = vunpack.c.l.b16 %v4569
    %v4745 = vunpack.c.h.b16 %v4569
    %v4746 = vunpack.c.l.b16 %v4570
    %v4747 = vunpack.c.h.b16 %v4570
    %v4748 = vunpack.c.l.b16 %v4571
    %v4749 = vunpack.c.h.b16 %v4571
    %v4750 = vunpack.c.l.b16 %v4572
    %v4751 = vunpack.c.h.b16 %v4572
    %v4752 = vunpack.c.l.b16 %v4573
    %v4753 = vunpack.c.h.b16 %v4573
    %v4754 = vunpack.c.l.b16 %v4574
    %v4755 = vunpack.c.h.b16 %v4574
    %v4756 = vunpack.c.l.b16 %v4575
    %v4757 = vunpack.c.h.b16 %v4575
    %v4758 = vunpack.c.l.b16 %v4576
    %v4759 = vunpack.c.h.b16 %v4576
    %v4760 = vunpack.c.l.b16 %v4577
    %v4761 = vunpack.c.h.b16 %v4577
    %v4762 = vunpack.c.l.b16 %v4578
    %v4763 = vunpack.c.h.b16 %v4578
    %v4764 = vunpack.c.l.b16 %v4579
    %v4765 = vunpack.c.h.b16 %v4579
    %v4766 = vunpack.c.l.b16 %v4580
    %v4767 = vunpack.c.h.b16 %v4580
    %v4768 = vunpack.c.l.b16 %v4581
    %v4769 = vunpack.c.h.b16 %v4581
    %v4770 = vunpack.c.l.b16 %v4582
    %v4771 = vunpack.c.h.b16 %v4582
    %v4772 = vunpack.c.l.b16 %v4583
    %v4773 = vunpack.c.h.b16 %v4583
    %v4774 = vunpack.c.l.b16 %v4584
    %v4775 = vunpack.c.h.b16 %v4584
    %v4776 = vunpack.c.l.b16 %v4585
    %v4777 = vunpack.c.h.b16 %v4585
    %v4778 = vunpack.c.l.b16 %v4586
    %v4779 = vunpack.c.h.b16 %v4586
    %v4780 = vunpack.c.l.b16 %v4587
    %v4781 = vunpack.c.h.b16 %v4587
    %v4782 = vunpack.c.l.b16 %v4588
    %v4783 = vunpack.c.h.b16 %v4588
    %v4784 = vunpack.c.l.b16 %v4589
    %v4785 = vunpack.c.h.b16 %v4589
    %v4786 = vunpack.c.l.b16 %v4590
    %v4787 = vunpack.c.h.b16 %v4590
    %v4788 = vunpack.c.l.b16 %v4591
    %v4789 = vunpack.c.h.b16 %v4591
    %v4790 = vunpack.c.l.b16 %v4592
    %v4791 = vunpack.c.h.b16 %v4592
    %v4792 = vunpack.c.l.b16 %v4593
    %v4793 = vunpack.c.h.b16 %v4593
    %v4794 = vunpack.c.l.b16 %v4594
    %v4795 = vunpack.c.h.b16 %v4594
    %v4796 = vunpack.c.l.b16 %v4595
    %v4797 = vunpack.c.h.b16 %v4595
    %v4798 = vunpack.c.l.b16 %v4596
    %v4799 = vunpack.c.h.b16 %v4596
    %v4800 = vunpack.c.l.b16 %v4597
    %v4801 = vunpack.c.h.b16 %v4597
    %v4802 = vpack.c.b16 %v4676, %v4674
    %v4803 = vpack.c.b16 %v4677, %v4675
    %v4804 = vpack.c.b16 %v4680, %v4678
    %v4805 = vpack.c.b16 %v4681, %v4679
    %v4806 = vpack.c.b16 %v4684, %v4682
    %v4807 = vpack.c.b16 %v4685, %v4683
    %v4808 = vpack.c.b16 %v4688, %v4686
    %v4809 = vpack.c.b16 %v4689, %v4687
    %v4810 = vpack.c.b16 %v4692, %v4690
    %v4811 = vpack.c.b16 %v4693, %v4691
    %v4812 = vpack.c.b16 %v4696, %v4694
    %v4813 = vpack.c.b16 %v4697, %v4695
    %v4814 = vpack.c.b16 %v4700, %v4698
    %v4815 = vpack.c.b16 %v4701, %v4699
    %v4816 = vpack.c.b16 %v4704, %v4702
    %v4817 = vpack.c.b16 %v4705, %v4703
    %v4818 = vpack.c.b16 %v4708, %v4706
    %v4819 = vpack.c.b16 %v4709, %v4707
    %v4820 = vpack.c.b16 %v4712, %v4710
    %v4821 = vpack.c.b16 %v4713, %v4711
    %v4822 = vpack.c.b16 %v4716, %v4714
    %v4823 = vpack.c.b16 %v4717, %v4715
    %v4824 = vpack.c.b16 %v4720, %v4718
    %v4825 = vpack.c.b16 %v4721, %v4719
    %v4826 = vpack.c.b16 %v4724, %v4722
    %v4827 = vpack.c.b16 %v4725, %v4723
    %v4828 = vpack.c.b16 %v4728, %v4726
    %v4829 = vpack.c.b16 %v4729, %v4727
    %v4830 = vpack.c.b16 %v4732, %v4730
    %v4831 = vpack.c.b16 %v4733, %v4731
    %v4832 = vpack.c.b16 %v4736, %v4734
    %v4833 = vpack.c.b16 %v4737, %v4735
    %v4834 = vpack.c.b16 %v4740, %v4738
    %v4835 = vpack.c.b16 %v4741, %v4739
    %v4836 = vpack.c.b16 %v4744, %v4742
    %v4837 = vpack.c.b16 %v4745, %v4743
    %v4838 = vpack.c.b16 %v4748, %v4746
    %v4839 = vpack.c.b16 %v4749, %v4747
    %v4840 = vpack.c.b16 %v4752, %v4750
    %v4841 = vpack.c.b16 %v4753, %v4751
    %v4842 = vpack.c.b16 %v4756, %v4754
    %v4843 = vpack.c.b16 %v4757, %v4755
    %v4844 = vpack.c.b16 %v4760, %v4758
    %v4845 = vpack.c.b16 %v4761, %v4759
    %v4846 = vpack.c.b16 %v4764, %v4762
    %v4847 = vpack.c.b16 %v4765, %v4763
    %v4848 = vpack.c.b16 %v4768, %v4766
    %v4849 = vpack.c.b16 %v4769, %v4767
    %v4850 = vpack.c.b16 %v4772, %v4770
    %v4851 = vpack.c.b16 %v4773, %v4771
    %v4852 = vpack.c.b16 %v4776, %v4774
    %v4853 = vpack.c.b16 %v4777, %v4775
    %v4854 = vpack.c.b16 %v4780, %v4778
    %v4855 = vpack.c.b16 %v4781, %v4779
    %v4856 = vpack.c.b16 %v4784, %v4782
    %v4857 = vpack.c.b16 %v4785, %v4783
    %v4858 = vpack.c.b16 %v4788, %v4786
    %v4859 = vpack.c.b16 %v4789, %v4787
    %v4860 = vpack.c.b16 %v4792, %v4790
    %v4861 = vpack.c.b16 %v4793, %v4791
    %v4862 = vpack.c.b16 %v4796, %v4794
    %v4863 = vpack.c.b16 %v4797, %v4795
    %v4864 = vpack.c.b16 %v4800, %v4798
    %v4865 = vpack.c.b16 %v4801, %v4799
    %4930 = vmatprep.subr.bf16.mxu0 %v4803
    %4931 = vmatpush1.bf16.msra.mxu0 %v4802
    %4932 = vmatprep.subr.bf16.mxu0 %v4805
    %4933 = vmatpush1.bf16.msra.mxu0 %v4804
    %4934 = vmatprep.subr.bf16.mxu0 %v4807
    %4935 = vmatpush1.bf16.msra.mxu0 %v4806
    %4936 = vmatprep.subr.bf16.mxu0 %v4809
    %4937 = vmatpush1.bf16.msra.mxu0 %v4808
    %4938 = vmatprep.subr.bf16.mxu0 %v4811
    %4939 = vmatpush1.bf16.msra.mxu0 %v4810
    %4940 = vmatprep.subr.bf16.mxu0 %v4813
    %4941 = vmatpush1.bf16.msra.mxu0 %v4812
    %4942 = vmatprep.subr.bf16.mxu0 %v4815
    %4943 = vmatpush1.bf16.msra.mxu0 %v4814
    %4944 = vmatprep.subr.bf16.mxu0 %v4817
    %4945 = vmatpush1.bf16.msra.mxu0 %v4816
    %4946 = vmatprep.subr.bf16.mxu0 %v4819
    %4947 = vmatpush1.bf16.msra.mxu0 %v4818
    %4948 = vmatprep.subr.bf16.mxu0 %v4821
    %4949 = vmatpush1.bf16.msra.mxu0 %v4820
    %4950 = vmatprep.subr.bf16.mxu0 %v4823
    %4951 = vmatpush1.bf16.msra.mxu0 %v4822
    %4952 = vmatprep.subr.bf16.mxu0 %v4825
    %4953 = vmatpush1.bf16.msra.mxu0 %v4824
    %4954 = vmatprep.subr.bf16.mxu0 %v4827
    %4955 = vmatpush1.bf16.msra.mxu0 %v4826
    %4956 = vmatprep.subr.bf16.mxu0 %v4829
    %4957 = vmatpush1.bf16.msra.mxu0 %v4828
    %4958 = vmatprep.subr.bf16.mxu0 %v4831
    %4959 = vmatpush1.bf16.msra.mxu0 %v4830
    %4960 = vmatprep.subr.bf16.mxu0 %v4833
    %4961 = vmatpush1.bf16.msra.mxu0 %v4832
    %4962 = vmatprep.mubr.bf16.mxu0 %v4531
    %4963 = vmatmul.mubr.bf16.gmra.mrb[0].mxu0 %v4530
    %v4964 = vpop.f32.mrb[0].mxu0
    %v4965 = vadd.f32 %v4603, %v4964
    %v4966 = vpop.f32.mrb[0].mxu0
    %v4967 = vadd.f32 %v4607, %v4966
    %v4968 = vpop.f32.mrb[0].mxu0
    %v4969 = vpop.f32.mrb[0].mxu0
    %4970 = vdwg.mxu0
    %4971 = vmatprep.subr.bf16.mxu0 %v4835
    %4972 = vmatpush1.bf16.msra.mxu0 %v4834
    %4973 = vmatprep.subr.bf16.mxu0 %v4837
    %4974 = vmatpush1.bf16.msra.mxu0 %v4836
    %4975 = vmatprep.subr.bf16.mxu0 %v4839
    %4976 = vmatpush1.bf16.msra.mxu0 %v4838
    %4977 = vmatprep.subr.bf16.mxu0 %v4841
    %4978 = vmatpush1.bf16.msra.mxu0 %v4840
    %4979 = vmatprep.subr.bf16.mxu0 %v4843
    %4980 = vmatpush1.bf16.msra.mxu0 %v4842
    %4981 = vmatprep.subr.bf16.mxu0 %v4845
    %4982 = vmatpush1.bf16.msra.mxu0 %v4844
    %4983 = vmatprep.subr.bf16.mxu0 %v4847
    %4984 = vmatpush1.bf16.msra.mxu0 %v4846
    %4985 = vmatprep.subr.bf16.mxu0 %v4849
    %4986 = vmatpush1.bf16.msra.mxu0 %v4848
    %4987 = vmatprep.subr.bf16.mxu0 %v4851
    %4988 = vmatpush1.bf16.msra.mxu0 %v4850
    %4989 = vmatprep.subr.bf16.mxu0 %v4853
    %4990 = vmatpush1.bf16.msra.mxu0 %v4852
    %4991 = vmatprep.subr.bf16.mxu0 %v4855
    %4992 = vmatpush1.bf16.msra.mxu0 %v4854
    %4993 = vmatprep.subr.bf16.mxu0 %v4857
    %4994 = vmatpush1.bf16.msra.mxu0 %v4856
    %4995 = vmatprep.subr.bf16.mxu0 %v4859
    %4996 = vmatpush1.bf16.msra.mxu0 %v4858
    %4997 = vmatprep.subr.bf16.mxu0 %v4861
    %4998 = vmatpush1.bf16.msra.mxu0 %v4860
    %4999 = vmatprep.subr.bf16.mxu0 %v4863
    %5000 = vmatpush1.bf16.msra.mxu0 %v4862
    %5001 = vmatprep.subr.bf16.mxu0 %v4865
    %5002 = vmatpush1.bf16.msra.mxu0 %v4864
    %5003 = vmatprep.mubr.bf16.mxu0 %v4533
    %5004 = vmatmul.mubr.bf16.gmra.mrb[0].mxu0 %v4532
    %v5005 = vpop.f32.mrb[0].mxu0
    %v5006 = vadd.f32 %v4965, %v5005
    %v5007 = vpop.f32.mrb[0].mxu0
    %v5008 = vadd.f32 %v4967, %v5007
    %v5009 = vpop.f32.mrb[0].mxu0
    %v5010 = vpop.f32.mrb[0].mxu0
    %5011 = vdwg.mxu0
    %v5012 = vtanh.pop %v5006
    %v5013 = vtanh.pop %v5008
    %5014 = vst [vmem:[#allocation18] sm:$0xff] %v5012
    %5015 = vst [vmem:[#allocation18 + $0x8] sm:$0xff] %v5013
    %v5016 = vpack.c.bf16 %v5012, %v5012
    %v5017 = vpack.c.bf16 %v5013, %v5013
    %v5018 = vld [vmem:[#allocation14] sm:$0xf]
    %v5019 = vld [vmem:[#allocation14 + $0x4] sm:$0xf]
    %v5020 = vld [vmem:[#allocation14 + $0x8] sm:$0xf]
    %v5021 = vld [vmem:[#allocation14 + $0xc] sm:$0xf]
    %v5022 = vld [vmem:[#allocation14 + $0x10] sm:$0xf]
    %v5023 = vld [vmem:[#allocation14 + $0x14] sm:$0xf]
    %v5024 = vld [vmem:[#allocation14 + $0x18] sm:$0xf]
    %v5025 = vld [vmem:[#allocation14 + $0x1c] sm:$0xf]
    %v5026 = vld [vmem:[#allocation14 + $0x20] sm:$0xf]
    %v5027 = vld [vmem:[#allocation14 + $0x24] sm:$0xf]
    %v5028 = vld [vmem:[#allocation14 + $0x28] sm:$0xf]
    %v5029 = vld [vmem:[#allocation14 + $0x2c] sm:$0xf]
    %v5030 = vld [vmem:[#allocation14 + $0x30] sm:$0xf]
    %v5031 = vld [vmem:[#allocation14 + $0x34] sm:$0xf]
    %v5032 = vld [vmem:[#allocation14 + $0x38] sm:$0xf]
    %v5033 = vld [vmem:[#allocation14 + $0x3c] sm:$0xf]
    %v5034 = vld [vmem:[#allocation14 + $0x40] sm:$0xf]
    %v5035 = vld [vmem:[#allocation14 + $0x44] sm:$0xf]
    %v5036 = vld [vmem:[#allocation14 + $0x48] sm:$0xf]
    %v5037 = vld [vmem:[#allocation14 + $0x4c] sm:$0xf]
    %v5038 = vld [vmem:[#allocation14 + $0x50] sm:$0xf]
    %v5039 = vld [vmem:[#allocation14 + $0x54] sm:$0xf]
    %v5040 = vld [vmem:[#allocation14 + $0x58] sm:$0xf]
    %v5041 = vld [vmem:[#allocation14 + $0x5c] sm:$0xf]
    %v5042 = vld [vmem:[#allocation14 + $0x60] sm:$0xf]
    %v5043 = vld [vmem:[#allocation14 + $0x64] sm:$0xf]
    %v5044 = vld [vmem:[#allocation14 + $0x68] sm:$0xf]
    %v5045 = vld [vmem:[#allocation14 + $0x6c] sm:$0xf]
    %v5046 = vld [vmem:[#allocation14 + $0x70] sm:$0xf]
    %v5047 = vld [vmem:[#allocation14 + $0x74] sm:$0xf]
    %v5048 = vld [vmem:[#allocation14 + $0x78] sm:$0xf]
    %v5049 = vld [vmem:[#allocation14 + $0x7c] sm:$0xf]
    %v5050 = vld [vmem:[#allocation16] sm:$0x1]
    %v5052 = vlaneseq
    %v5053 = vshrl.u32 %v5052, 7
    %v5054 = vsub.s32 0, %v5053
    %v5055 = vrot.slane %v5050, %v5054
    %v5089 = vunpack.c.l.b16 %v5018
    %v5090 = vunpack.c.l.b16 %v5019
    %v5091 = vunpack.c.l.b16 %v5020
    %v5092 = vunpack.c.l.b16 %v5021
    %v5093 = vunpack.c.l.b16 %v5022
    %v5094 = vunpack.c.l.b16 %v5023
    %v5095 = vunpack.c.l.b16 %v5024
    %v5096 = vunpack.c.l.b16 %v5025
    %v5097 = vunpack.c.l.b16 %v5026
    %v5098 = vunpack.c.l.b16 %v5027
    %v5099 = vunpack.c.l.b16 %v5028
    %v5100 = vunpack.c.l.b16 %v5029
    %v5101 = vunpack.c.l.b16 %v5030
    %v5102 = vunpack.c.l.b16 %v5031
    %v5103 = vunpack.c.l.b16 %v5032
    %v5104 = vunpack.c.l.b16 %v5033
    %v5105 = vunpack.c.l.b16 %v5034
    %v5106 = vunpack.c.l.b16 %v5035
    %v5107 = vunpack.c.l.b16 %v5036
    %v5108 = vunpack.c.l.b16 %v5037
    %v5109 = vunpack.c.l.b16 %v5038
    %v5110 = vunpack.c.l.b16 %v5039
    %v5111 = vunpack.c.l.b16 %v5040
    %v5112 = vunpack.c.l.b16 %v5041
    %v5113 = vunpack.c.l.b16 %v5042
    %v5114 = vunpack.c.l.b16 %v5043
    %v5115 = vunpack.c.l.b16 %v5044
    %v5116 = vunpack.c.l.b16 %v5045
    %v5117 = vunpack.c.l.b16 %v5046
    %v5118 = vunpack.c.l.b16 %v5047
    %v5119 = vunpack.c.l.b16 %v5048
    %v5120 = vunpack.c.l.b16 %v5049
    %v5121 = vpack.c.b16 %v5090, %v5089
    %v5122 = vpack.c.b16 %v5092, %v5091
    %v5123 = vpack.c.b16 %v5094, %v5093
    %v5124 = vpack.c.b16 %v5096, %v5095
    %v5125 = vpack.c.b16 %v5098, %v5097
    %v5126 = vpack.c.b16 %v5100, %v5099
    %v5127 = vpack.c.b16 %v5102, %v5101
    %v5128 = vpack.c.b16 %v5104, %v5103
    %v5129 = vpack.c.b16 %v5106, %v5105
    %v5130 = vpack.c.b16 %v5108, %v5107
    %v5131 = vpack.c.b16 %v5110, %v5109
    %v5132 = vpack.c.b16 %v5112, %v5111
    %v5133 = vpack.c.b16 %v5114, %v5113
    %v5134 = vpack.c.b16 %v5116, %v5115
    %v5135 = vpack.c.b16 %v5118, %v5117
    %v5136 = vpack.c.b16 %v5120, %v5119
    %5153 = vmatprep.subr.bf16.mxu0 0
    %5154 = vmatpush1.bf16.msra.mxu0 %v5121
    %5155 = vmatprep.subr.bf16.mxu0 0
    %5156 = vmatpush1.bf16.msra.mxu0 %v5122
    %5157 = vmatprep.subr.bf16.mxu0 0
    %5158 = vmatpush1.bf16.msra.mxu0 %v5123
    %5159 = vmatprep.subr.bf16.mxu0 0
    %5160 = vmatpush1.bf16.msra.mxu0 %v5124
    %5161 = vmatprep.subr.bf16.mxu0 0
    %5162 = vmatpush1.bf16.msra.mxu0 %v5125
    %5163 = vmatprep.subr.bf16.mxu0 0
    %5164 = vmatpush1.bf16.msra.mxu0 %v5126
    %5165 = vmatprep.subr.bf16.mxu0 0
    %5166 = vmatpush1.bf16.msra.mxu0 %v5127
    %5167 = vmatprep.subr.bf16.mxu0 0
    %5168 = vmatpush1.bf16.msra.mxu0 %v5128
    %5169 = vmatprep.subr.bf16.mxu0 0
    %5170 = vmatpush1.bf16.msra.mxu0 %v5129
    %5171 = vmatprep.subr.bf16.mxu0 0
    %5172 = vmatpush1.bf16.msra.mxu0 %v5130
    %5173 = vmatprep.subr.bf16.mxu0 0
    %5174 = vmatpush1.bf16.msra.mxu0 %v5131
    %5175 = vmatprep.subr.bf16.mxu0 0
    %5176 = vmatpush1.bf16.msra.mxu0 %v5132
    %5177 = vmatprep.subr.bf16.mxu0 0
    %5178 = vmatpush1.bf16.msra.mxu0 %v5133
    %5179 = vmatprep.subr.bf16.mxu0 0
    %5180 = vmatpush1.bf16.msra.mxu0 %v5134
    %5181 = vmatprep.subr.bf16.mxu0 0
    %5182 = vmatpush1.bf16.msra.mxu0 %v5135
    %5183 = vmatprep.subr.bf16.mxu0 0
    %5184 = vmatpush1.bf16.msra.mxu0 %v5136
    %5185 = vmatprep.mubr.bf16.mxu0 %v5017
    %5186 = vmatmul.mubr.bf16.gmra.mrb[0].mxu0 %v5016
    %v5187 = vpop.f32.mrb[0].mxu0
    %v5188 = vadd.f32 %v5055, %v5187
    %v5189 = vpop.f32.mrb[0].mxu0
    %v5190 = vpop.f32.mrb[0].mxu0
    %v5191 = vpop.f32.mrb[0].mxu0
    %5192 = vdwg.mxu0
    %5193 = vst [vmem:[#allocation17] sm:$0xff] %v5188
    // Predicated region
    $region74: #{tpu_custom_call.1} parent=1 // pred_check
      _
    $region75: #{tpu_custom_call.1} parent=1 // pred_check_branch
      %5195 = sbr.rel (0) target = $region77
    $region76: #{tpu_custom_call.1} parent=1 // pred_region
      %s5197 = ssub.s32 128, 128
      %5198 = vsyncadd [#allocation4], %s5197
      %s5200 = sshll.u32 [#allocation17], 4
      %s5201 = int_to_ptr.vmem [resolvable:$true] %s5200
      %5203 = dma.vmem_to_hbm [thread:$0]  %s5201, 128, %s9, [#allocation4]
    $region77: #{tpu_custom_call.1} parent=1 // pred_fallthru
      _
    // Predicated region
    $region78: #{tpu_custom_call.1} parent=1 // pred_check
      _
    $region79: #{tpu_custom_call.1} parent=1 // pred_check_branch
      %5205 = sbr.rel (0) target = $region81
    $region80: #{tpu_custom_call.1} parent=1 // pred_region
      %s5207 = ssub.s32 256, 256
      %5208 = vsyncadd [#allocation19], %s5207
      %s5210 = sshll.u32 [#allocation18], 4
      %s5211 = int_to_ptr.vmem [resolvable:$true] %s5210
      %5213 = dma.vmem_to_hbm [thread:$0]  %s5211, 256, %s10, [#allocation19]
    $region81: #{tpu_custom_call.1} parent=1 // pred_fallthru
      _
    // Predicated region
    $region82: #{tpu_custom_call.1} parent=1 // pred_check
      _
    $region83: #{tpu_custom_call.1} parent=1 // pred_check_branch
      %5215 = sbr.rel (0) target = $region85
    $region84: #{tpu_custom_call.1} parent=1 // pred_region
      %5216 = dma.done [#allocation4], 128
    $region85: #{tpu_custom_call.1} parent=1 // pred_fallthru
      _
    // Predicated region
    $region86: #{tpu_custom_call.1} parent=1 // pred_check
      _
    $region87: #{tpu_custom_call.1} parent=1 // pred_check_branch
      %5218 = sbr.rel (0) target = $region89
    $region88: #{tpu_custom_call.1} parent=1 // pred_region
      %5219 = dma.done [#allocation19], 256
    $region89: #{tpu_custom_call.1} parent=1 // pred_fallthru
      _
    %5220 = vsyncpa [#allocation3], 1
    %5221 = vsyncpa [#allocation6], 1
    %5222 = vsyncpa [#allocation9], 1
    %5223 = vsyncpa [#allocation12], 1
    %5224 = vsyncpa [#allocation15], 1
    %5225 = vsyncpa [#allocation4], 1
    %5226 = vsyncpa [#allocation19], 1

</llo_original>
